<compile_context>
chip_gen: v7x
topology: tpu7x:2x2x1
jax: 0.10.0
libtpu: 0.0.40
codegen_flags: <defaults>
</compile_context>

<pallas_src>
import functools

import jax
import jax.numpy as jnp
import numpy as np
from jax.experimental import pallas as pl
from jax.experimental.pallas import tpu as pltpu

NEG_SLOPE = 0.01   # torch.nn.LeakyReLU() default
BN_EPS = 1e-5      # torch.nn.BatchNorm2d default

# Constant 0/1 selector mapping ConvTranspose2d taps (ky, kx) to (patch ey*3+ex,
# output parity r*2+s): out[2a+r, 2b+s] uses input (a-1+ey, b-1+ex) with tap
# ky = 3 + r - 2*ey, kx = 3 + s - 2*ex (when in range).  Built host-side so the
# weight rearrangement is a single einsum.
_PARITY_SEL = np.zeros((9, 4, 4, 4), np.float32)
for _ey in range(3):
    for _ex in range(3):
        for _r in range(2):
            for _s in range(2):
                _ky = 3 + _r - 2 * _ey
                _kx = 3 + _s - 2 * _ex
                if 0 <= _ky < 4 and 0 <= _kx < 4:
                    _PARITY_SEL[_ey * 3 + _ex, _r * 2 + _s, _ky, _kx] = 1.0


# ---------------- Pallas kernel (single hot pass) ----------------

def _convt_relu_stats_kernel(x_ref, w_ref, b_ref, y_ref, sum_ref, ssq_ref,
                             *, th, w_img, valid_last, need_mask):
    """Fused transposed-conv (sub-pixel matmul over 9 taps) + bias + LeakyyReLU
    + per-block partial sum / sum-of-squares for BatchNorm batch statistics.

    x_ref:  (1, th+2, Wp, Cinp) bf16  halo strip of the zero-padded NHWC input
    w_ref:  (9, Cinp, tn)       bf16  per-tap weights, columns = parity*Coutp+channel
    b_ref:  (1, tn)             f32   bias replicated over the 4 parities
    y_ref:  (1, th, W, tn)      bf16  pre-BN activations
    sum/ssq_ref: (1, 8, tn)     f32   per-block partial statistics (VPU sublane fold)
    """
    cinp = w_ref.shape[1]
    tn = w_ref.shape[2]
    rows = th * w_img

    xs = x_ref[0]                                            # (th+2, Wp, Cinp)
    acc = None
    for t in range(9):                                       # 9 taps, f32 accumulate
        ey, ex = t // 3, t % 3
        xt = xs[ey:ey + th, ex:ex + w_img, :].reshape(rows, cinp)
        pt = jnp.dot(xt, w_ref[t], preferred_element_type=jnp.float32)
        acc = pt if acc is None else acc + pt
    acc = acc + b_ref[...]                                   # (rows, tn) f32
    y = jnp.where(acc >= 0.0, acc, NEG_SLOPE * acc)          # LeakyReLU in f32

    y_ref[0] = y.reshape(th, w_img, tn).astype(y_ref.dtype)  # bf16 intermediate

    def write_stats(v):
        # Fold sublane groups with cheap VPU adds; full reduction happens in XLA.
        sum_ref[0] = v.reshape(rows // 8, 8, tn).sum(axis=0)
        ssq_ref[0] = (v * v).reshape(rows // 8, 8, tn).sum(axis=0)

    if need_mask:
        # Only the last row-strip contains padded (invalid) rows.
        is_last = pl.program_id(2) == pl.num_programs(2) - 1

        @pl.when(is_last)
        def _():
            flat = jax.lax.broadcasted_iota(jnp.int32, (rows, 1), 0)
            write_stats(jnp.where(flat < valid_last * w_img, y, 0.0))

        @pl.when(jnp.logical_not(is_last))
        def _():
            write_stats(y)
    else:
        write_stats(y)


# ---------------- wrapper: layout prep, tiling, stats, fused BN epilogue ----------------

def ustrided_conv_relu_bn(x_nchw, weight, bias, *, row_tile=None, cout_tile_cap=512):
    N, Cin, H, W = x_nchw.shape
    Cin_w, Cout, KH, KW = weight.shape
    assert Cin_w == Cin and KH == 4 and KW == 4

    Cinp = max(8, ((Cin + 7) // 8) * 8)          # pad K dim for clean bf16 layout
    Coutp = ((Cout + 31) // 32) * 32             # 4*Coutp is a multiple of 128 (lane-dense)
    C4 = 4 * Coutp
    Wp = W + 2

    # --- output-channel tile: largest divisor of C4 that is a multiple of 128 and <= cap
    def pick_tn(cap):
        units = C4 // 128
        best = 1
        for d in range(1, units + 1):
            if units % d == 0 and d * 128 <= cap:
                best = d
        return best * 128
    tn = pick_tn(cout_tile_cap)

    # --- row-strip height (multiple of 8): target ~2048 matmul rows per grid step
    h_ceil8 = ((H + 7) // 8) * 8
    if row_tile is None:
        th = (2048 // max(W, 1)) // 8 * 8
        th = max(8, min(h_ceil8, th if th > 0 else 8))
    else:
        th = max(8, (row_tile // 8) * 8)

    # --- VMEM budget (52 MiB keeps headroom under v7x's 64 MiB physical VMEM)
    def vmem_need(th_, tn_):
        x_t = (th_ + 2) * Wp * Cinp * 2
        w_t = 9 * Cinp * tn_ * 2
        y_t = th_ * W * tn_ * 2
        st_t = 2 * 8 * tn_ * 4 + tn_ * 4
        acc_t = th_ * W * tn_ * 4
        return 2 * (x_t + w_t + y_t + st_t) + 2 * acc_t
    BUDGET = 52 * 2 ** 20
    while vmem_need(th, tn) > BUDGET and tn > 128:
        tn = pick_tn(tn // 2)
    while vmem_need(th, tn) > BUDGET and th > 8:
        th -= 8
    # TODO(synk): for Cin large enough that the per-tap weight tile alone dominates VMEM,
    # add a K (Cin) grid axis with an f32 acc scratch and pl.when init/finalize.

    nstrips = pl.cdiv(H, th)
    nj = C4 // tn
    # Keep >= 2 grid steps so both v7x TensorCores get work.
    if N * nj * nstrips < 2 and th > 8:
        th = max(8, (h_ceil8 // 2 + 7) // 8 * 8)
        nstrips = pl.cdiv(H, th)
    Hs = nstrips * th
    need_mask = (Hs != H)
    valid_last = H - (nstrips - 1) * th

    # --- input prep: NHWC bf16, channel + spatial zero-pad, thin-halo row strips.
    # x_halo is only (1 + 2/th)x the input (replaces the old 9x im2col matrix).
    x = jnp.transpose(x_nchw, (0, 2, 3, 1)).astype(jnp.bfloat16)
    x = jnp.pad(x, ((0, 0), (0, 0), (0, 0), (0, Cinp - Cin)))
    x_pad = jnp.pad(x, ((0, 0), (1, 1 + Hs - H), (1, 1), (0, 0)))       # (N, Hs+2, Wp, Cinp)
    x_halo = jnp.stack([x_pad[:, i * th:i * th + th + 2] for i in range(nstrips)], axis=1)
    x_halo = x_halo.reshape(N * nstrips, th + 2, Wp, Cinp)

    # --- weight rearrangement (Cin, Cout, 4, 4) -> (9, Cinp, 4*Coutp), one einsum.
    wcore = jnp.einsum('pqyx,ioyx->piqo', jnp.asarray(_PARITY_SEL),
                       weight.astype(jnp.float32))                      # (9, Cin, 4, Cout)
    wcore = jnp.pad(wcore, ((0, 0), (0, Cinp - Cin), (0, 0), (0, Coutp - Cout)))
    wbig = wcore.reshape(9, Cinp, C4).astype(jnp.bfloat16)
    b4 = jnp.tile(jnp.pad(bias.astype(jnp.float32), (0, Coutp - Cout)), 4)[None, :]  # (1, C4)

    # --- single fused Pallas pass
    grid = (N, nj, nstrips)
    kern = functools.partial(_convt_relu_stats_kernel, th=th, w_img=W,
                             valid_last=valid_last, need_mask=need_mask)
    vmem_limit = int(min(64 * 2 ** 20, max(32 * 2 ** 20, int(1.25 * vmem_need(th, tn)))))
    flops = 2 * N * Hs * W * 9 * Cinp * C4
    bytes_accessed = (N * nstrips * (th + 2) * Wp * Cinp * 2 + 9 * Cinp * C4 * 2 + C4 * 4
                      + N * Hs * W * C4 * 2 + 2 * N * nstrips * 8 * C4 * 4)

    y, csum, cssq = pl.pallas_call(
        kern,
        out_shape=(jax.ShapeDtypeStruct((N, Hs, W, C4), jnp.bfloat16),
                   jax.ShapeDtypeStruct((N * nstrips, 8, C4), jnp.float32),
                   jax.ShapeDtypeStruct((N * nstrips, 8, C4), jnp.float32)),
        grid=grid,
        in_specs=[pl.BlockSpec((1, th + 2, Wp, Cinp),
                               lambda n, j, i: (n * nstrips + i, 0, 0, 0)),
                  pl.BlockSpec((9, Cinp, tn), lambda n, j, i: (0, 0, j)),
                  pl.BlockSpec((1, tn), lambda n, j, i: (0, j))],
        out_specs=(pl.BlockSpec((1, th, W, tn), lambda n, j, i: (n, i, 0, j)),
                   pl.BlockSpec((1, 8, tn), lambda n, j, i: (n * nstrips + i, 0, j)),
                   pl.BlockSpec((1, 8, tn), lambda n, j, i: (n * nstrips + i, 0, j))),
        compiler_params=pltpu.CompilerParams(
            dimension_semantics=("parallel", "parallel", "parallel"),
            vmem_limit_bytes=vmem_limit),
        cost_estimate=pl.CostEstimate(flops=flops, transcendentals=0,
                                      bytes_accessed=bytes_accessed),
    )(x_halo, wbig, b4)

    # --- BatchNorm2d training-mode batch statistics (biased variance)
    # NOTE: E[y^2]-E[y]^2 in f32; clamp guards tiny negative cancellation.
    # TODO(synk): for very large N*H*W per channel, merge the per-block partials
    # Welford-style (or mean-shift) instead of a plain E[y^2]-E[y]^2.
    count = jnp.float32(4 * N * H * W)                        # N * 2H * 2W per channel
    sum_c = csum.sum(axis=(0, 1)).reshape(4, Coutp).sum(axis=0)
    ssq_c = cssq.sum(axis=(0, 1)).reshape(4, Coutp).sum(axis=0)
    mean_c = sum_c / count
    var_c = jnp.maximum(ssq_c / count - mean_c * mean_c, 0.0)
    inv_c = jax.lax.rsqrt(var_c + BN_EPS)

    # --- fused XLA epilogue: BN normalize (gamma=1, beta=0 at init) + parity
    # de-interleave + NCHW transpose; fuses into one read of bf16 y + one f32 write.
    y6 = y[:, :H].astype(jnp.float32).reshape(N, H, W, 2, 2, Coutp)
    out6 = (y6 - mean_c) * inv_c
    out6 = out6[..., :Cout]
    return out6.transpose(0, 5, 1, 3, 2, 4).reshape(N, Cout, 2 * H, 2 * W)


# ---------------- pure-JAX reference (direct scatter formulation) ----------------

def reference(x_nchw, weight, bias):
    N, Cin, H, W = x_nchw.shape
    Cout = weight.shape[1]
    x = jnp.transpose(x_nchw, (0, 2, 3, 1)).astype(jnp.float32)
    buf = jnp.zeros((N, 2 * H + 2, 2 * W + 2, Cout), jnp.float32)
    for ky in range(4):
        for kx in range(4):
            contrib = jnp.einsum('nhwc,cd->nhwd', x, weight[:, :, ky, kx],
                                 precision=jax.lax.Precision.HIGHEST)
            buf = buf.at[:, ky:ky + 2 * H:2, kx:kx + 2 * W:2, :].add(contrib)
    conv = buf[:, 1:2 * H + 1, 1:2 * W + 1, :] + bias[None, None, None, :]
    act = jnp.where(conv >= 0, conv, NEG_SLOPE * conv)
    mean = act.mean(axis=(0, 1, 2))
    var = act.var(axis=(0, 1, 2))   # biased, as BatchNorm uses for normalization
    out = (act - mean) / jnp.sqrt(var + BN_EPS)
    return jnp.transpose(out, (0, 3, 1, 2))


if __name__ == "__main__":
    key = jax.random.PRNGKey(0)
    kx_key, kw_key, kx2_key = jax.random.split(key, 3)

    N, Cin, Cout, H, W = 2, 4, 8, 16, 16
    x = jax.random.normal(kx_key, (N, Cin, H, W), jnp.float32)
    # kaiming_normal_(nonlinearity='leaky_relu', a=0): gain=sqrt(2), fan_in = Cout*4*4
    fan_in = Cout * 4 * 4
    std = (2.0 / fan_in) ** 0.5
    weight = std * jax.random.normal(kw_key, (Cin, Cout, 4, 4), jnp.float32)
    bias = jnp.zeros((Cout,), jnp.float32)   # constant_(bias, 0)

    # NOTE: self.pool (nn.Upsample) is defined in __init__ but never used in forward.
    fwd = jax.jit(ustrided_conv_relu_bn)
    out = jax.block_until_ready(fwd(x, weight, bias))
    assert out.shape == (N, Cout, 2 * H, 2 * W)
    ref = reference(x, weight, bias)
    # bf16 MXU operands / bf16 intermediate -> loosened tolerance vs pure-f32 reference
    np.testing.assert_allclose(np.asarray(out), np.asarray(ref), atol=5e-2, rtol=5e-2)

    # Second config exercising the padded-tail row-strip (H not a multiple of th).
    H2, W2 = 12, 12
    x2 = jax.random.normal(kx2_key, (N, Cin, H2, W2), jnp.float32)
    out2 = jax.block_until_ready(jax.jit(ustrided_conv_relu_bn)(x2, weight, bias))
    ref2 = reference(x2, weight, bias)
    np.testing.assert_allclose(np.asarray(out2), np.asarray(ref2), atol=5e-2, rtol=5e-2)

    print("KERNEL_OK")
</pallas_src>

<mosaic_0001>
module attributes {stable_mosaic.version = 11 : i64} {
  func.func @_convt_relu_stats_kernel(%arg0: i32, %arg1: i32, %arg2: i32, %arg3: memref<1x18x18x8xbf16, #tpu.memory_space<vmem>>, %arg4: memref<9x8x128xbf16, #tpu.memory_space<vmem>>, %arg5: memref<1x128xf32, #tpu.memory_space<vmem>>, %arg6: memref<1x16x16x128xbf16, #tpu.memory_space<vmem>>, %arg7: memref<1x8x128xf32, #tpu.memory_space<vmem>>, %arg8: memref<1x8x128xf32, #tpu.memory_space<vmem>>) attributes {dimension_semantics = [#tpu.dimension_semantics<parallel>, #tpu.dimension_semantics<parallel>, #tpu.dimension_semantics<parallel>], iteration_bounds = array<i64: 2, 1, 1>, scalar_prefetch = 0 : i64, scratch_operands = 0 : i64, tpu.core_type = #tpu.core_type<tc>, window_params = [{transform_indices = @transform_0, window_bounds = array<i64: 1, 18, 18, 8>}, {transform_indices = @transform_1, window_bounds = array<i64: 9, 8, 128>}, {transform_indices = @transform_2, window_bounds = array<i64: 1, 128>}, {transform_indices = @transform_3, window_bounds = array<i64: 1, 16, 16, 128>}, {transform_indices = @transform_4, window_bounds = array<i64: 1, 8, 128>}, {transform_indices = @transform_5, window_bounds = array<i64: 1, 8, 128>}]} {
    %c0 = arith.constant 0 : index
    %c0_0 = arith.constant 0 : index
    %c0_1 = arith.constant 0 : index
    %c0_2 = arith.constant 0 : index
    %0 = vector.load %arg3[%c0, %c0_0, %c0_1, %c0_2] : memref<1x18x18x8xbf16, #tpu.memory_space<vmem>>, vector<1x18x18x8xbf16>
    %1 = vector.shape_cast %0 : vector<1x18x18x8xbf16> to vector<18x18x8xbf16>
    %2 = vector.extract_strided_slice %1 {offsets = [0, 0, 0], sizes = [16, 16, 8], strides = [1, 1, 1]} : vector<18x18x8xbf16> to vector<16x16x8xbf16>
    %3 = vector.shape_cast %2 : vector<16x16x8xbf16> to vector<256x8xbf16>
    %c0_3 = arith.constant 0 : index
    %c0_4 = arith.constant 0 : index
    %c0_5 = arith.constant 0 : index
    %4 = vector.load %arg4[%c0_3, %c0_4, %c0_5] : memref<9x8x128xbf16, #tpu.memory_space<vmem>>, vector<1x8x128xbf16>
    %5 = vector.shape_cast %4 : vector<1x8x128xbf16> to vector<8x128xbf16>
    %cst = arith.constant dense<0.000000e+00> : vector<256x128xf32>
    %6 = tpu.matmul %3, %5, %cst {dimension_numbers = #tpu.dot_dimension_numbers<[1], [0], [0], [1], [0, 0, 1, 1], [], []>} : vector<256x8xbf16>, vector<8x128xbf16>, vector<256x128xf32> -> vector<256x128xf32>
    %7 = vector.extract_strided_slice %1 {offsets = [0, 1, 0], sizes = [16, 16, 8], strides = [1, 1, 1]} : vector<18x18x8xbf16> to vector<16x16x8xbf16>
    %8 = vector.shape_cast %7 : vector<16x16x8xbf16> to vector<256x8xbf16>
    %c1 = arith.constant 1 : index
    %c0_6 = arith.constant 0 : index
    %c0_7 = arith.constant 0 : index
    %9 = vector.load %arg4[%c1, %c0_6, %c0_7] : memref<9x8x128xbf16, #tpu.memory_space<vmem>>, vector<1x8x128xbf16>
    %10 = vector.shape_cast %9 : vector<1x8x128xbf16> to vector<8x128xbf16>
    %cst_8 = arith.constant dense<0.000000e+00> : vector<256x128xf32>
    %11 = tpu.matmul %8, %10, %cst_8 {dimension_numbers = #tpu.dot_dimension_numbers<[1], [0], [0], [1], [0, 0, 1, 1], [], []>} : vector<256x8xbf16>, vector<8x128xbf16>, vector<256x128xf32> -> vector<256x128xf32>
    %12 = arith.addf %6, %11 : vector<256x128xf32>
    %13 = vector.extract_strided_slice %1 {offsets = [0, 2, 0], sizes = [16, 16, 8], strides = [1, 1, 1]} : vector<18x18x8xbf16> to vector<16x16x8xbf16>
    %14 = vector.shape_cast %13 : vector<16x16x8xbf16> to vector<256x8xbf16>
    %c2 = arith.constant 2 : index
    %c0_9 = arith.constant 0 : index
    %c0_10 = arith.constant 0 : index
    %15 = vector.load %arg4[%c2, %c0_9, %c0_10] : memref<9x8x128xbf16, #tpu.memory_space<vmem>>, vector<1x8x128xbf16>
    %16 = vector.shape_cast %15 : vector<1x8x128xbf16> to vector<8x128xbf16>
    %cst_11 = arith.constant dense<0.000000e+00> : vector<256x128xf32>
    %17 = tpu.matmul %14, %16, %cst_11 {dimension_numbers = #tpu.dot_dimension_numbers<[1], [0], [0], [1], [0, 0, 1, 1], [], []>} : vector<256x8xbf16>, vector<8x128xbf16>, vector<256x128xf32> -> vector<256x128xf32>
    %18 = arith.addf %12, %17 : vector<256x128xf32>
    %19 = vector.extract_strided_slice %1 {offsets = [1, 0, 0], sizes = [16, 16, 8], strides = [1, 1, 1]} : vector<18x18x8xbf16> to vector<16x16x8xbf16>
    %20 = vector.shape_cast %19 : vector<16x16x8xbf16> to vector<256x8xbf16>
    %c3 = arith.constant 3 : index
    %c0_12 = arith.constant 0 : index
    %c0_13 = arith.constant 0 : index
    %21 = vector.load %arg4[%c3, %c0_12, %c0_13] : memref<9x8x128xbf16, #tpu.memory_space<vmem>>, vector<1x8x128xbf16>
    %22 = vector.shape_cast %21 : vector<1x8x128xbf16> to vector<8x128xbf16>
    %cst_14 = arith.constant dense<0.000000e+00> : vector<256x128xf32>
    %23 = tpu.matmul %20, %22, %cst_14 {dimension_numbers = #tpu.dot_dimension_numbers<[1], [0], [0], [1], [0, 0, 1, 1], [], []>} : vector<256x8xbf16>, vector<8x128xbf16>, vector<256x128xf32> -> vector<256x128xf32>
    %24 = arith.addf %18, %23 : vector<256x128xf32>
    %25 = vector.extract_strided_slice %1 {offsets = [1, 1, 0], sizes = [16, 16, 8], strides = [1, 1, 1]} : vector<18x18x8xbf16> to vector<16x16x8xbf16>
    %26 = vector.shape_cast %25 : vector<16x16x8xbf16> to vector<256x8xbf16>
    %c4 = arith.constant 4 : index
    %c0_15 = arith.constant 0 : index
    %c0_16 = arith.constant 0 : index
    %27 = vector.load %arg4[%c4, %c0_15, %c0_16] : memref<9x8x128xbf16, #tpu.memory_space<vmem>>, vector<1x8x128xbf16>
    %28 = vector.shape_cast %27 : vector<1x8x128xbf16> to vector<8x128xbf16>
    %cst_17 = arith.constant dense<0.000000e+00> : vector<256x128xf32>
    %29 = tpu.matmul %26, %28, %cst_17 {dimension_numbers = #tpu.dot_dimension_numbers<[1], [0], [0], [1], [0, 0, 1, 1], [], []>} : vector<256x8xbf16>, vector<8x128xbf16>, vector<256x128xf32> -> vector<256x128xf32>
    %30 = arith.addf %24, %29 : vector<256x128xf32>
    %31 = vector.extract_strided_slice %1 {offsets = [1, 2, 0], sizes = [16, 16, 8], strides = [1, 1, 1]} : vector<18x18x8xbf16> to vector<16x16x8xbf16>
    %32 = vector.shape_cast %31 : vector<16x16x8xbf16> to vector<256x8xbf16>
    %c5 = arith.constant 5 : index
    %c0_18 = arith.constant 0 : index
    %c0_19 = arith.constant 0 : index
    %33 = vector.load %arg4[%c5, %c0_18, %c0_19] : memref<9x8x128xbf16, #tpu.memory_space<vmem>>, vector<1x8x128xbf16>
    %34 = vector.shape_cast %33 : vector<1x8x128xbf16> to vector<8x128xbf16>
    %cst_20 = arith.constant dense<0.000000e+00> : vector<256x128xf32>
    %35 = tpu.matmul %32, %34, %cst_20 {dimension_numbers = #tpu.dot_dimension_numbers<[1], [0], [0], [1], [0, 0, 1, 1], [], []>} : vector<256x8xbf16>, vector<8x128xbf16>, vector<256x128xf32> -> vector<256x128xf32>
    %36 = arith.addf %30, %35 : vector<256x128xf32>
    %37 = vector.extract_strided_slice %1 {offsets = [2, 0, 0], sizes = [16, 16, 8], strides = [1, 1, 1]} : vector<18x18x8xbf16> to vector<16x16x8xbf16>
    %38 = vector.shape_cast %37 : vector<16x16x8xbf16> to vector<256x8xbf16>
    %c6 = arith.constant 6 : index
    %c0_21 = arith.constant 0 : index
    %c0_22 = arith.constant 0 : index
    %39 = vector.load %arg4[%c6, %c0_21, %c0_22] : memref<9x8x128xbf16, #tpu.memory_space<vmem>>, vector<1x8x128xbf16>
    %40 = vector.shape_cast %39 : vector<1x8x128xbf16> to vector<8x128xbf16>
    %cst_23 = arith.constant dense<0.000000e+00> : vector<256x128xf32>
    %41 = tpu.matmul %38, %40, %cst_23 {dimension_numbers = #tpu.dot_dimension_numbers<[1], [0], [0], [1], [0, 0, 1, 1], [], []>} : vector<256x8xbf16>, vector<8x128xbf16>, vector<256x128xf32> -> vector<256x128xf32>
    %42 = arith.addf %36, %41 : vector<256x128xf32>
    %43 = vector.extract_strided_slice %1 {offsets = [2, 1, 0], sizes = [16, 16, 8], strides = [1, 1, 1]} : vector<18x18x8xbf16> to vector<16x16x8xbf16>
    %44 = vector.shape_cast %43 : vector<16x16x8xbf16> to vector<256x8xbf16>
    %c7 = arith.constant 7 : index
    %c0_24 = arith.constant 0 : index
    %c0_25 = arith.constant 0 : index
    %45 = vector.load %arg4[%c7, %c0_24, %c0_25] : memref<9x8x128xbf16, #tpu.memory_space<vmem>>, vector<1x8x128xbf16>
    %46 = vector.shape_cast %45 : vector<1x8x128xbf16> to vector<8x128xbf16>
    %cst_26 = arith.constant dense<0.000000e+00> : vector<256x128xf32>
    %47 = tpu.matmul %44, %46, %cst_26 {dimension_numbers = #tpu.dot_dimension_numbers<[1], [0], [0], [1], [0, 0, 1, 1], [], []>} : vector<256x8xbf16>, vector<8x128xbf16>, vector<256x128xf32> -> vector<256x128xf32>
    %48 = arith.addf %42, %47 : vector<256x128xf32>
    %49 = vector.extract_strided_slice %1 {offsets = [2, 2, 0], sizes = [16, 16, 8], strides = [1, 1, 1]} : vector<18x18x8xbf16> to vector<16x16x8xbf16>
    %50 = vector.shape_cast %49 : vector<16x16x8xbf16> to vector<256x8xbf16>
    %c8 = arith.constant 8 : index
    %c0_27 = arith.constant 0 : index
    %c0_28 = arith.constant 0 : index
    %51 = vector.load %arg4[%c8, %c0_27, %c0_28] : memref<9x8x128xbf16, #tpu.memory_space<vmem>>, vector<1x8x128xbf16>
    %52 = vector.shape_cast %51 : vector<1x8x128xbf16> to vector<8x128xbf16>
    %cst_29 = arith.constant dense<0.000000e+00> : vector<256x128xf32>
    %53 = tpu.matmul %50, %52, %cst_29 {dimension_numbers = #tpu.dot_dimension_numbers<[1], [0], [0], [1], [0, 0, 1, 1], [], []>} : vector<256x8xbf16>, vector<8x128xbf16>, vector<256x128xf32> -> vector<256x128xf32>
    %54 = arith.addf %48, %53 : vector<256x128xf32>
    %c0_30 = arith.constant 0 : index
    %c0_31 = arith.constant 0 : index
    %55 = vector.load %arg5[%c0_30, %c0_31] : memref<1x128xf32, #tpu.memory_space<vmem>>, vector<1x128xf32>
    %56 = vector.broadcast %55 : vector<1x128xf32> to vector<256x128xf32>
    %57 = arith.addf %54, %56 : vector<256x128xf32>
    %cst_32 = arith.constant 0.000000e+00 : f32
    %58 = vector.broadcast %cst_32 : f32 to vector<256x128xf32>
    %59 = arith.cmpf oge, %57, %58 : vector<256x128xf32>
    %cst_33 = arith.constant 0.00999999977 : f32
    %60 = vector.broadcast %cst_33 : f32 to vector<256x128xf32>
    %61 = arith.mulf %60, %57 : vector<256x128xf32>
    %62 = arith.select %59, %57, %61 : vector<256x128xi1>, vector<256x128xf32>
    %63 = vector.shape_cast %62 : vector<256x128xf32> to vector<16x16x128xf32>
    %64 = arith.truncf %63 : vector<16x16x128xf32> to vector<16x16x128xbf16>
    %c0_34 = arith.constant 0 : index
    %c0_35 = arith.constant 0 : index
    %c0_36 = arith.constant 0 : index
    %c0_37 = arith.constant 0 : index
    %65 = vector.load %arg6[%c0_34, %c0_35, %c0_36, %c0_37] : memref<1x16x16x128xbf16, #tpu.memory_space<vmem>>, vector<1x16x16x128xbf16>
    %66 = vector.shape_cast %65 : vector<1x16x16x128xbf16> to vector<16x16x128xbf16>
    %67 = vector.shape_cast %64 : vector<16x16x128xbf16> to vector<1x16x16x128xbf16>
    tpu.vector_store %arg6[%c0_34, %c0_35, %c0_36, %c0_37], %67 {strides = array<i32>} : memref<1x16x16x128xbf16, #tpu.memory_space<vmem>>, vector<1x16x16x128xbf16>,
    %68 = vector.shape_cast %62 : vector<256x128xf32> to vector<32x8x128xf32>
    %cst_38 = arith.constant dense<0.000000e+00> : vector<8x128xf32>
    %69 = vector.multi_reduction <add>, %68, %cst_38 [0] : vector<32x8x128xf32> to vector<8x128xf32>
    %c0_39 = arith.constant 0 : index
    %c0_40 = arith.constant 0 : index
    %c0_41 = arith.constant 0 : index
    %70 = vector.load %arg7[%c0_39, %c0_40, %c0_41] : memref<1x8x128xf32, #tpu.memory_space<vmem>>, vector<1x8x128xf32>
    %71 = vector.shape_cast %70 : vector<1x8x128xf32> to vector<8x128xf32>
    %72 = vector.shape_cast %69 : vector<8x128xf32> to vector<1x8x128xf32>
    tpu.vector_store %arg7[%c0_39, %c0_40, %c0_41], %72 {strides = array<i32>} : memref<1x8x128xf32, #tpu.memory_space<vmem>>, vector<1x8x128xf32>,
    %73 = arith.mulf %62, %62 : vector<256x128xf32>
    %74 = vector.shape_cast %73 : vector<256x128xf32> to vector<32x8x128xf32>
    %cst_42 = arith.constant dense<0.000000e+00> : vector<8x128xf32>
    %75 = vector.multi_reduction <add>, %74, %cst_42 [0] : vector<32x8x128xf32> to vector<8x128xf32>
    %c0_43 = arith.constant 0 : index
    %c0_44 = arith.constant 0 : index
    %c0_45 = arith.constant 0 : index
    %76 = vector.load %arg8[%c0_43, %c0_44, %c0_45] : memref<1x8x128xf32, #tpu.memory_space<vmem>>, vector<1x8x128xf32>
    %77 = vector.shape_cast %76 : vector<1x8x128xf32> to vector<8x128xf32>
    %78 = vector.shape_cast %75 : vector<8x128xf32> to vector<1x8x128xf32>
    tpu.vector_store %arg8[%c0_43, %c0_44, %c0_45], %78 {strides = array<i32>} : memref<1x8x128xf32, #tpu.memory_space<vmem>>, vector<1x8x128xf32>,
    return
  }
  func.func @transform_0(%arg0: i32, %arg1: i32, %arg2: i32) -> (i32, i32, i32, i32) {
    %c1_i32 = arith.constant 1 : i32
    %0 = arith.muli %arg0, %c1_i32 : i32
    %1 = arith.addi %0, %arg2 : i32
    %c0_i32 = arith.constant 0 : i32
    %c0_i32_0 = arith.constant 0 : i32
    %c0_i32_1 = arith.constant 0 : i32
    %c0_i32_2 = arith.constant 0 : i32
    return %1, %c0_i32, %c0_i32_0, %c0_i32_1 : i32, i32, i32, i32
  }
  func.func @transform_1(%arg0: i32, %arg1: i32, %arg2: i32) -> (i32, i32, i32) {
    %c0_i32 = arith.constant 0 : i32
    %c0_i32_0 = arith.constant 0 : i32
    %c0_i32_1 = arith.constant 0 : i32
    return %c0_i32, %c0_i32_0, %arg1 : i32, i32, i32
  }
  func.func @transform_2(%arg0: i32, %arg1: i32, %arg2: i32) -> (i32, i32) {
    %c0_i32 = arith.constant 0 : i32
    %c0_i32_0 = arith.constant 0 : i32
    return %c0_i32, %arg1 : i32, i32
  }
  func.func @transform_3(%arg0: i32, %arg1: i32, %arg2: i32) -> (i32, i32, i32, i32) {
    %c0_i32 = arith.constant 0 : i32
    %c0_i32_0 = arith.constant 0 : i32
    return %arg0, %arg2, %c0_i32, %arg1 : i32, i32, i32, i32
  }
  func.func @transform_4(%arg0: i32, %arg1: i32, %arg2: i32) -> (i32, i32, i32) {
    %c1_i32 = arith.constant 1 : i32
    %0 = arith.muli %arg0, %c1_i32 : i32
    %1 = arith.addi %0, %arg2 : i32
    %c0_i32 = arith.constant 0 : i32
    %c0_i32_0 = arith.constant 0 : i32
    return %1, %c0_i32, %arg1 : i32, i32, i32
  }
  func.func @transform_5(%arg0: i32, %arg1: i32, %arg2: i32) -> (i32, i32, i32) {
    %c1_i32 = arith.constant 1 : i32
    %0 = arith.muli %arg0, %c1_i32 : i32
    %1 = arith.addi %0, %arg2 : i32
    %c0_i32 = arith.constant 0 : i32
    %c0_i32_0 = arith.constant 0 : i32
    return %1, %c0_i32, %arg1 : i32, i32, i32
  }
}

</mosaic_0001>

<llo_original>
// kernel: tile.8
$region0: #{tile.8}
  #allocation0 [shape = 's32[1]{0}', space=sflag, size = 0x4, scoped, tag = 'scoped memory for tile.8']
  %s0 = inlined_call_operand.vmem [shape: f32[32], index: 0, kind: input, shape index: {}]
  %s1 = inlined_call_operand.vmem [shape: f32[4,32], index: 1, kind: output, shape index: {}]
  // Predicated region
  $region2: #{tile.8} parent=0 // pred_check
    _
  $region3: #{tile.8} parent=0 // pred_check_branch
    %3 = sbr.rel (0) target = $region5
  $region4: #{tile.8} parent=0 // pred_region
    _
  $region5: #{tile.8} parent=0 // pred_fallthru
    _
  %v4 = vld [vmem:[%s0] ss:$0 sm:$0xff]
  %5 = vst [vmem:[%s1] sm:$0xf] %v4

// kernel: tile.9
$region0: #{tile.9}
  %s0 = inlined_call_operand.vmem [shape: f32[4,32], index: 0, kind: input, shape index: {}]
  %s1 = inlined_call_operand.vmem [shape: f32[1,128], index: 1, kind: output, shape index: {}]
  $region1: #{tile.9} parent=0
    #allocation0 [shape = 'u8[4096]{0}', space=vmem, size = 0x1000, scoped, tag = 'scoped mem for output reshape']
    #allocation1 [shape = 'u8[4096]{0}', space=vmem, size = 0x1000, scoped, tag = 'scoped mem for input reshape']
    %s3 = sshllo.u32 0, 4
    %v4 = vld [vmem:[%s0] sm:%s3]
    %5 = vst [vmem:[#allocation1] sm:%s3] %v4
    %v6 = vld [vmem:[#allocation1] sm:$0x1]
    %vm7 = vcmask 261120
    %8 = vst.msk [vmem:[#allocation0] sm:$0x1] %vm7, %v6
    %s9 = scalar_lea.vmem [#allocation1], 3
    %v10 = vld [vmem:[%s9] sm:$0x1]
    %11 = vrot.lane.b32.xlu0 %v10, 96
    %v12 = vpop.permute.xlu0 %11
    %vm13 = vcmask 1048320
    %14 = vst.msk [vmem:[#allocation0] sm:$0x1] %vm13, %v12
    %s15 = scalar_lea.vmem [#allocation1], 2
    %v16 = vld [vmem:[%s15] sm:$0x1]
    %17 = vrot.lane.b32.xlu0 %v16, 64
    %v18 = vpop.permute.xlu0 %17
    %vm19 = vcmask 785920
    %20 = vst.msk [vmem:[#allocation0] sm:$0x1] %vm19, %v18
    %s21 = scalar_lea.vmem [#allocation1], 1
    %v22 = vld [vmem:[%s21] sm:$0x1]
    %23 = vrot.lane.b32.xlu0 %v22, 32
    %v24 = vpop.permute.xlu0 %23
    %vm25 = vcmask 523520
    %26 = vst.msk [vmem:[#allocation0] sm:$0x1] %vm25, %v24
    %s28 = sshllo.u32 0, 1
    %v30 = vld [vmem:[#allocation0] sm:%s28]
    %s31 = sshllo.u32 0, 1
    %32 = vst [vmem:[%s1] sm:%s31] %v30

// kernel: ustrided_conv_relu_bn.1
$region0: #{ustrided_conv_relu_bn.1}
  #allocation0 [shape = 'u32[]', space=smem, size = 0x4, offset = 0x4, fixed_abs, tag = 'smem constant byte address 0x4 - core index']
  #allocation1 [shape = 'u32[144,128]{1,0:T(1,128)}', space=vmem, size = 0x12000, scoped, tag = 'internal scratch']
  %s0 = inlined_call_operand.vmem [shape: bf16[2,18,18,8], index: 0, kind: input, shape index: {}]
  %s1 = inlined_call_operand.vmem [shape: bf16[9,8,128], index: 1, kind: input, shape index: {}]
  %s2 = inlined_call_operand.vmem [shape: f32[1,128], index: 2, kind: input, shape index: {}]
  %s3 = inlined_call_operand.vmem [shape: bf16[2,16,16,128], index: 3, kind: output, shape index: {0}]
  %s4 = inlined_call_operand.vmem [shape: f32[2,8,128], index: 4, kind: output, shape index: {1}]
  %s5 = inlined_call_operand.vmem [shape: f32[2,8,128], index: 5, kind: output, shape index: {2}]
  %6 = xla_tuple %s3, %s4, %s5
  %s7 = sld [smem:[#allocation0]]
  $region61: #{ustrided_conv_relu_bn.1} parent=0
    _
  %s9 = ssub.s32 1, %s7
  %s10 = scalar_select 0, %s9, %s7
  loop: start=0, step=1, limit=4
  $region2: #{ustrided_conv_relu_bn.1} parent=0 // loop_pre_header
    _
  $region3: #{ustrided_conv_relu_bn.1} parent=0 // loop_header
    %s12 = sphi 0, %s16
    %p13 = scmp.ge.s32.totalorder %s12, 4
    %s19 = sphi 0, %s38
    %s20 = sphi 0, %s34
    %s21 = sphi 0, %s30
    %s22 = sphi 0, %s19
    %s23 = sphi 0, %s20
    %s24 = sphi 0, %s21
    %s25 = sphi 0, %s22
    %s26 = sphi 0, %s23
    %s27 = sphi 0, %s24
    %s43 = sphi 0, %s45
    %s46 = sphi 0, %s43
    %s47 = sphi 0, %s46
    %s63 = sphi 0, %s47
    %s69 = sphi 0, %s71
    %s72 = sphi 0, %s69
    %s73 = sphi 0, %s72
    %s89 = sphi 0, %s73
    %s95 = sphi 0, %s97
    %s98 = sphi 0, %s95
    %s99 = sphi 0, %s98
    %s115 = sphi 0, %s99
    %s125 = sphi 0, %s127
    %s128 = sphi 0, %s125
    %s129 = sphi 0, %s128
    %s145 = sphi 0, %s129
    %s155 = sphi 0, %s157
    %s158 = sphi 0, %s155
    %s159 = sphi 0, %s158
    %s175 = sphi 0, %s159
    %s185 = sphi 0, %s187
    %s188 = sphi 0, %s185
    %s189 = sphi 0, %s188
    %s205 = sphi 0, %s189
  $region4: #{ustrided_conv_relu_bn.1} parent=0 // loop_header_branch
    %15 = sbr.rel (%p13) target = $region8
  $region5: #{ustrided_conv_relu_bn.1} parent=0 // loop_body
    %s17 = ssub.s32 %s12, 1
    %s18 = ssub.s32 %s12, 2
    %s28 = sadd.s32 1, %s21
    %p29 = scmp.ge.s32.totalorder %s28, 1
    %s30 = scalar_select %p29, 0, %s28
    %s31 = sadd.s32 1, %s20
    %s32 = scalar_select %p29, %s31, %s20
    %p33 = scmp.ge.s32.totalorder %s32, 1
    %s34 = scalar_select %p33, 0, %s32
    %s35 = sadd.s32 1, %s19
    %s36 = scalar_select %p33, %s35, %s19
    %p37 = scmp.ge.s32.totalorder %s36, 2
    %s38 = scalar_select %p37, 0, %s36
    %s39 = sadd.s32 %s19, %s21
    %s40 = sadd.s32 %s38, %s30
    %s41 = ssub.s32 %s39, %s40
    %p42 = scmp.eq.s32.totalorder %s41, 0
    %s44 = sadd.s32 %s43, 1
    %s45 = scalar_select %p42, %s43, %s44
    %p48 = pneg %p42
    %p49 = scmp.eq.s32.totalorder %s12, 1
    %p50 = por %p48, %p49
    %p51 = scmp.ne.s32.totalorder %s43, %s46
    %p52 = scmp.eq.s32.totalorder %s12, 0
    %p53 = por %p51, %p52
    %p54 = scmp.ne.s32.totalorder %s43, %s46
    %p55 = scmp.eq.s32.totalorder %s17, 1
    %p56 = por %p54, %p55
    %p57 = scmp.ne.s32.totalorder %s46, %s47
    %p58 = scmp.eq.s32.totalorder %s17, 0
    %p59 = por %p57, %p58
    %p60 = scmp.ne.s32.totalorder %s46, %s47
    %p61 = scmp.eq.s32.totalorder %s18, 1
    %p62 = por %p60, %p61
    %p64 = scmp.ne.s32.totalorder %s47, %s63
    %p65 = scmp.eq.s32.totalorder %s18, 0
    %p66 = por %p64, %p65
    %s67 = ssub.s32 %s20, %s34
    %p68 = scmp.eq.s32.totalorder %s67, 0
    %s70 = sadd.s32 %s69, 1
    %s71 = scalar_select %p68, %s69, %s70
    %p74 = pneg %p68
    %p75 = scmp.eq.s32.totalorder %s12, 1
    %p76 = por %p74, %p75
    %p77 = scmp.ne.s32.totalorder %s69, %s72
    %p78 = scmp.eq.s32.totalorder %s12, 0
    %p79 = por %p77, %p78
    %p80 = scmp.ne.s32.totalorder %s69, %s72
    %p81 = scmp.eq.s32.totalorder %s17, 1
    %p82 = por %p80, %p81
    %p83 = scmp.ne.s32.totalorder %s72, %s73
    %p84 = scmp.eq.s32.totalorder %s17, 0
    %p85 = por %p83, %p84
    %p86 = scmp.ne.s32.totalorder %s72, %s73
    %p87 = scmp.eq.s32.totalorder %s18, 1
    %p88 = por %p86, %p87
    %p90 = scmp.ne.s32.totalorder %s73, %s89
    %p91 = scmp.eq.s32.totalorder %s18, 0
    %p92 = por %p90, %p91
    %s93 = ssub.s32 %s20, %s34
    %p94 = scmp.eq.s32.totalorder %s93, 0
    %s96 = sadd.s32 %s95, 1
    %s97 = scalar_select %p94, %s95, %s96
    %p100 = pneg %p94
    %p101 = scmp.eq.s32.totalorder %s12, 1
    %p102 = por %p100, %p101
    %p103 = scmp.ne.s32.totalorder %s95, %s98
    %p104 = scmp.eq.s32.totalorder %s12, 0
    %p105 = por %p103, %p104
    %p106 = scmp.ne.s32.totalorder %s95, %s98
    %p107 = scmp.eq.s32.totalorder %s17, 1
    %p108 = por %p106, %p107
    %p109 = scmp.ne.s32.totalorder %s98, %s99
    %p110 = scmp.eq.s32.totalorder %s17, 0
    %p111 = por %p109, %p110
    %p112 = scmp.ne.s32.totalorder %s98, %s99
    %p113 = scmp.eq.s32.totalorder %s18, 1
    %p114 = por %p112, %p113
    %p116 = scmp.ne.s32.totalorder %s99, %s115
    %p117 = scmp.eq.s32.totalorder %s18, 0
    %p118 = por %p116, %p117
    %s119 = ssub.s32 %s19, %s38
    %s120 = ssub.s32 %s21, %s30
    %s121 = sor.u32 %s119, %s120
    %s122 = ssub.s32 %s20, %s34
    %s123 = sor.u32 %s121, %s122
    %p124 = scmp.eq.s32.totalorder %s123, 0
    %s126 = sadd.s32 %s125, 1
    %s127 = scalar_select %p124, %s125, %s126
    %p130 = pneg %p124
    %p131 = scmp.eq.s32.totalorder %s12, 1
    %p132 = por %p130, %p131
    %p133 = scmp.ne.s32.totalorder %s125, %s128
    %p134 = scmp.eq.s32.totalorder %s12, 0
    %p135 = por %p133, %p134
    %p136 = scmp.ne.s32.totalorder %s125, %s128
    %p137 = scmp.eq.s32.totalorder %s17, 1
    %p138 = por %p136, %p137
    %p139 = scmp.ne.s32.totalorder %s128, %s129
    %p140 = scmp.eq.s32.totalorder %s17, 0
    %p141 = por %p139, %p140
    %p142 = scmp.ne.s32.totalorder %s128, %s129
    %p143 = scmp.eq.s32.totalorder %s18, 1
    %p144 = por %p142, %p143
    %p146 = scmp.ne.s32.totalorder %s129, %s145
    %p147 = scmp.eq.s32.totalorder %s18, 0
    %p148 = por %p146, %p147
    %s149 = sadd.s32 %s19, %s21
    %s150 = sadd.s32 %s38, %s30
    %s151 = ssub.s32 %s149, %s150
    %s152 = ssub.s32 %s20, %s34
    %s153 = sor.u32 %s151, %s152
    %p154 = scmp.eq.s32.totalorder %s153, 0
    %s156 = sadd.s32 %s155, 1
    %s157 = scalar_select %p154, %s155, %s156
    %p160 = pneg %p154
    %p161 = scmp.eq.s32.totalorder %s12, 1
    %p162 = por %p160, %p161
    %p163 = scmp.ne.s32.totalorder %s155, %s158
    %p164 = scmp.eq.s32.totalorder %s12, 0
    %p165 = por %p163, %p164
    %p166 = scmp.ne.s32.totalorder %s155, %s158
    %p167 = scmp.eq.s32.totalorder %s17, 1
    %p168 = por %p166, %p167
    %p169 = scmp.ne.s32.totalorder %s158, %s159
    %p170 = scmp.eq.s32.totalorder %s17, 0
    %p171 = por %p169, %p170
    %p172 = scmp.ne.s32.totalorder %s158, %s159
    %p173 = scmp.eq.s32.totalorder %s18, 1
    %p174 = por %p172, %p173
    %p176 = scmp.ne.s32.totalorder %s159, %s175
    %p177 = scmp.eq.s32.totalorder %s18, 0
    %p178 = por %p176, %p177
    %s179 = sadd.s32 %s19, %s21
    %s180 = sadd.s32 %s38, %s30
    %s181 = ssub.s32 %s179, %s180
    %s182 = ssub.s32 %s20, %s34
    %s183 = sor.u32 %s181, %s182
    %p184 = scmp.eq.s32.totalorder %s183, 0
    %s186 = sadd.s32 %s185, 1
    %s187 = scalar_select %p184, %s185, %s186
    %p190 = pneg %p184
    %p191 = scmp.eq.s32.totalorder %s12, 1
    %p192 = por %p190, %p191
    %p193 = scmp.ne.s32.totalorder %s185, %s188
    %p194 = scmp.eq.s32.totalorder %s12, 0
    %p195 = por %p193, %p194
    %p196 = scmp.ne.s32.totalorder %s185, %s188
    %p197 = scmp.eq.s32.totalorder %s17, 1
    %p198 = por %p196, %p197
    %p199 = scmp.ne.s32.totalorder %s188, %s189
    %p200 = scmp.eq.s32.totalorder %s17, 0
    %p201 = por %p199, %p200
    %p202 = scmp.ne.s32.totalorder %s188, %s189
    %p203 = scmp.eq.s32.totalorder %s18, 1
    %p204 = por %p202, %p203
    %p206 = scmp.ne.s32.totalorder %s189, %s205
    %p207 = scmp.eq.s32.totalorder %s18, 0
    %p208 = por %p206, %p207
    %p209 = scmp.le.s32.totalorder 1, %s12
    %p210 = scmp.lt.s32.totalorder %s12, 3
    %p211 = pnand %p209, %p210
    %p212 = pneg %p211
    // Predicated region
    $region9: #{ustrided_conv_relu_bn.1} parent=5 // pred_check
      _
    $region10: #{ustrided_conv_relu_bn.1} parent=5 // pred_check_branch
      %214 = sbr.rel (%p211) target = $region12
    $region11: #{ustrided_conv_relu_bn.1} parent=5 // pred_region
      %s215 = ssub.s32 %s12, 1
      // Predicated region
      $region13: #{ustrided_conv_relu_bn.1} parent=11 // pred_check
        %p216 = pneg %p85
      $region14: #{ustrided_conv_relu_bn.1} parent=11 // pred_check_branch
        %218 = sbr.rel (%p216) target = $region16
      $region15: #{ustrided_conv_relu_bn.1} parent=11 // pred_region
        %p219 = scmp.lt.s32.totalorder %s23, 0
        %s220 = scalar_select %p219, %s23, 0
        %s221 = smul.addr %s220, 4
        %s222 = scalar_lea.vmem %s1, %s221
      $region16: #{ustrided_conv_relu_bn.1} parent=11 // pred_fallthru
        _
      // Predicated region
      $region17: #{ustrided_conv_relu_bn.1} parent=11 // pred_check
        %p223 = pneg %p111
      $region18: #{ustrided_conv_relu_bn.1} parent=11 // pred_check_branch
        %225 = sbr.rel (%p223) target = $region20
      $region19: #{ustrided_conv_relu_bn.1} parent=11 // pred_region
        %p226 = scmp.lt.s32.totalorder %s23, 0
        %s227 = scalar_select %p226, %s23, 0
        %s228 = scalar_lea.vmem %s2, %s227
      $region20: #{ustrided_conv_relu_bn.1} parent=11 // pred_fallthru
        _
    $region12: #{ustrided_conv_relu_bn.1} parent=5 // pred_fallthru
      _
    %p229 = scmp.lt.s32.totalorder %s12, 2
    // Predicated region
    $region21: #{ustrided_conv_relu_bn.1} parent=5 // pred_check
      %p230 = pneg %p229
    $region22: #{ustrided_conv_relu_bn.1} parent=5 // pred_check_branch
      %232 = sbr.rel (%p230) target = $region24
    $region23: #{ustrided_conv_relu_bn.1} parent=5 // pred_region
      // Predicated region
      $region25: #{ustrided_conv_relu_bn.1} parent=23 // pred_check
        %p233 = pneg %p53
      $region26: #{ustrided_conv_relu_bn.1} parent=23 // pred_check_branch
        %235 = sbr.rel (%p233) target = $region28
      $region27: #{ustrided_conv_relu_bn.1} parent=23 // pred_region
        %s236 = sadd.s32 %s19, %s21
        %p237 = scmp.lt.s32.totalorder %s236, 1
        %s238 = scalar_select %p237, %s236, 1
        %s239 = smul.addr %s238, 54
        %s240 = smul.addr %s239, 4
        %s241 = scalar_lea.vmem %s0, %s240
        %s242 = sadd.s32 %s19, %s21
      $region28: #{ustrided_conv_relu_bn.1} parent=23 // pred_fallthru
        _
    $region24: #{ustrided_conv_relu_bn.1} parent=5 // pred_fallthru
      _
    %p243 = scmp.le.s32.totalorder 1, %s12
    %p244 = scmp.lt.s32.totalorder %s12, 3
    %p245 = pnand %p243, %p244
    %p246 = pneg %p245
    // Predicated region
    $region29: #{ustrided_conv_relu_bn.1} parent=5 // pred_check
      _
    $region30: #{ustrided_conv_relu_bn.1} parent=5 // pred_check_branch
      %248 = sbr.rel (%p245) target = $region32
    $region31: #{ustrided_conv_relu_bn.1} parent=5 // pred_region
      %s249 = ssub.s32 %s12, 1
      %s250 = sadd.s32 %s22, %s24
      %p251 = scmp.lt.s32.totalorder %s250, 1
      %s252 = scalar_select %p251, %s250, 1
      %s253 = smul.addr %s252, 54
      %s254 = smul.addr %s253, 4
      %s255 = scalar_lea.vmem %s0, %s254
      %p256 = pneg %p59
      %p257 = pneg %p56
      %p258 = scmp.lt.s32.totalorder %s23, 0
      %s259 = scalar_select %p258, %s23, 0
      %s260 = smul.addr %s259, 4
      %s261 = scalar_lea.vmem %s1, %s260
      %p262 = pneg %p85
      %p263 = pneg %p82
      %p264 = scmp.lt.s32.totalorder %s23, 0
      %s265 = scalar_select %p264, %s23, 0
      %s266 = scalar_lea.vmem %s2, %s265
      %p267 = pneg %p111
      %p268 = pneg %p108
      %p269 = pneg %p141
      %p270 = pneg %p138
      %s271 = smul.u32 16, %s24
      %p272 = scmp.lt.s32.totalorder %s22, 1
      %s273 = scalar_select %p272, %s22, 1
      %p274 = scmp.lt.s32.totalorder %s271, 15
      %s275 = scalar_select %p274, %s271, 15
      %p276 = scmp.lt.s32.totalorder %s23, 0
      %s277 = scalar_select %p276, %s23, 0
      %s278 = smul.addr %s275, 2
      %s279 = sadd.s32 %s277, %s278
      %s280 = smul.addr %s273, 32
      %s281 = sadd.s32 %s279, %s280
      %s282 = smul.addr %s281, 4
      %s283 = scalar_lea.vmem %s3, %s282
      %p284 = pneg %p171
      %p285 = pneg %p168
      %s286 = sadd.s32 %s22, %s24
      %p287 = scmp.lt.s32.totalorder %s286, 1
      %s288 = scalar_select %p287, %s286, 1
      %p289 = scmp.lt.s32.totalorder %s23, 0
      %s290 = scalar_select %p289, %s23, 0
      %s291 = sadd.s32 %s290, %s288
      %s292 = smul.addr %s291, 8
      %s293 = scalar_lea.vmem %s4, %s292
      %p294 = pneg %p201
      %p295 = pneg %p198
      %s296 = sadd.s32 %s22, %s24
      %p297 = scmp.lt.s32.totalorder %s296, 1
      %s298 = scalar_select %p297, %s296, 1
      %p299 = scmp.lt.s32.totalorder %s23, 0
      %s300 = scalar_select %p299, %s23, 0
      %s301 = sadd.s32 %s300, %s298
      %s302 = smul.addr %s301, 8
      %s303 = scalar_lea.vmem %s5, %s302
      %s304 = sadd.s32 %s22, %s24
      %p305 = scmp.lt.s32.totalorder %s304, 1
      %s306 = scalar_select %p305, %s304, 1
      %s307 = smul.addr %s306, 54
      %s308 = smul.addr %s307, 4
      %s309 = scalar_lea.vmem %s0, %s308
      %s310 = sadd.s32 %s22, %s24
      %p311 = scmp.lt.s32.totalorder %s23, 0
      %s312 = scalar_select %p311, %s23, 0
      %s313 = smul.addr %s312, 4
      %s314 = scalar_lea.vmem %s1, %s313
      %p315 = scmp.lt.s32.totalorder %s23, 0
      %s316 = scalar_select %p315, %s23, 0
      %s317 = scalar_lea.vmem %s2, %s316
      %s318 = smul.u32 16, %s24
      %p319 = scmp.lt.s32.totalorder %s22, 1
      %s320 = scalar_select %p319, %s22, 1
      %p321 = scmp.lt.s32.totalorder %s318, 15
      %s322 = scalar_select %p321, %s318, 15
      %p323 = scmp.lt.s32.totalorder %s23, 0
      %s324 = scalar_select %p323, %s23, 0
      %s325 = smul.addr %s322, 2
      %s326 = sadd.s32 %s324, %s325
      %s327 = smul.addr %s320, 32
      %s328 = sadd.s32 %s326, %s327
      %s329 = smul.addr %s328, 4
      %s330 = scalar_lea.vmem %s3, %s329
      %s331 = smul.u32 16, %s24
      %s332 = sadd.s32 %s22, %s24
      %p333 = scmp.lt.s32.totalorder %s332, 1
      %s334 = scalar_select %p333, %s332, 1
      %p335 = scmp.lt.s32.totalorder %s23, 0
      %s336 = scalar_select %p335, %s23, 0
      %s337 = sadd.s32 %s336, %s334
      %s338 = smul.addr %s337, 8
      %s339 = scalar_lea.vmem %s4, %s338
      %s340 = sadd.s32 %s22, %s24
      %s341 = sadd.s32 %s22, %s24
      %p342 = scmp.lt.s32.totalorder %s341, 1
      %s343 = scalar_select %p342, %s341, 1
      %p344 = scmp.lt.s32.totalorder %s23, 0
      %s345 = scalar_select %p344, %s23, 0
      %s346 = sadd.s32 %s345, %s343
      %s347 = smul.addr %s346, 8
      %s348 = scalar_lea.vmem %s5, %s347
      %s349 = sadd.s32 %s22, %s24
      %v351 = vld [vmem:[%s309] sm:$0xf]
      %v352 = vld [vmem:[%s309 + $0x4] sm:$0xf]
      %v353 = vld [vmem:[%s309 + $0x8] sm:$0x1]
      %v354 = vld [vmem:[%s309 + $0xc] sm:$0xf]
      %v355 = vld [vmem:[%s309 + $0x10] sm:$0xf]
      %v356 = vld [vmem:[%s309 + $0x14] sm:$0x1]
      %v357 = vld [vmem:[%s309 + $0x18] sm:$0xf]
      %v358 = vld [vmem:[%s309 + $0x1c] sm:$0xf]
      %v359 = vld [vmem:[%s309 + $0x20] sm:$0x1]
      %v360 = vld [vmem:[%s309 + $0x24] sm:$0xf]
      %v361 = vld [vmem:[%s309 + $0x28] sm:$0xf]
      %v362 = vld [vmem:[%s309 + $0x2c] sm:$0x1]
      %v363 = vld [vmem:[%s309 + $0x30] sm:$0xf]
      %v364 = vld [vmem:[%s309 + $0x34] sm:$0xf]
      %v365 = vld [vmem:[%s309 + $0x38] sm:$0x1]
      %v366 = vld [vmem:[%s309 + $0x3c] sm:$0xf]
      %v367 = vld [vmem:[%s309 + $0x40] sm:$0xf]
      %v368 = vld [vmem:[%s309 + $0x44] sm:$0x1]
      %v369 = vld [vmem:[%s309 + $0x48] sm:$0xf]
      %v370 = vld [vmem:[%s309 + $0x4c] sm:$0xf]
      %v371 = vld [vmem:[%s309 + $0x50] sm:$0x1]
      %v372 = vld [vmem:[%s309 + $0x54] sm:$0xf]
      %v373 = vld [vmem:[%s309 + $0x58] sm:$0xf]
      %v374 = vld [vmem:[%s309 + $0x5c] sm:$0x1]
      %v375 = vld [vmem:[%s309 + $0x60] sm:$0xf]
      %v376 = vld [vmem:[%s309 + $0x64] sm:$0xf]
      %v377 = vld [vmem:[%s309 + $0x68] sm:$0x1]
      %v378 = vld [vmem:[%s309 + $0x6c] sm:$0xf]
      %v379 = vld [vmem:[%s309 + $0x70] sm:$0xf]
      %v380 = vld [vmem:[%s309 + $0x74] sm:$0x1]
      %v381 = vld [vmem:[%s309 + $0x78] sm:$0xf]
      %v382 = vld [vmem:[%s309 + $0x7c] sm:$0xf]
      %v383 = vld [vmem:[%s309 + $0x80] sm:$0x1]
      %v384 = vld [vmem:[%s309 + $0x84] sm:$0xf]
      %v385 = vld [vmem:[%s309 + $0x88] sm:$0xf]
      %v386 = vld [vmem:[%s309 + $0x8c] sm:$0x1]
      %v387 = vld [vmem:[%s309 + $0x90] sm:$0xf]
      %v388 = vld [vmem:[%s309 + $0x94] sm:$0xf]
      %v389 = vld [vmem:[%s309 + $0x98] sm:$0x1]
      %v390 = vld [vmem:[%s309 + $0x9c] sm:$0xf]
      %v391 = vld [vmem:[%s309 + $0xa0] sm:$0xf]
      %v392 = vld [vmem:[%s309 + $0xa4] sm:$0x1]
      %v393 = vld [vmem:[%s309 + $0xa8] sm:$0xf]
      %v394 = vld [vmem:[%s309 + $0xac] sm:$0xf]
      %v395 = vld [vmem:[%s309 + $0xb0] sm:$0x1]
      %v396 = vld [vmem:[%s309 + $0xb4] sm:$0xf]
      %v397 = vld [vmem:[%s309 + $0xb8] sm:$0xf]
      %v398 = vld [vmem:[%s309 + $0xbc] sm:$0x1]
      %v399 = vld [vmem:[%s309 + $0xc0] sm:$0xf]
      %v400 = vld [vmem:[%s309 + $0xc4] sm:$0xf]
      %v401 = vld [vmem:[%s309 + $0xc8] sm:$0x1]
      %v402 = vld [vmem:[%s309 + $0xcc] sm:$0xf]
      %v403 = vld [vmem:[%s309 + $0xd0] sm:$0xf]
      %v404 = vld [vmem:[%s309 + $0xd4] sm:$0x1]
      %v405 = vld [vmem:[%s314] sm:$0xf]
      %vm406 = vsmask.f32 3328
      %vm407 = vsmask.f32 7440
      %vm408 = vmor %vm406, %vm407
      %v410 = vshrl.u32 %v351, 16
      %v412 = vrot.slane %v410, 4
      %v413 = vshll.u32 %v351, 16
      %v415 = vrot.slane %v413, 5
      %v416 = vor.u32 %v412, %v415
      %v417 = vrot.slane %v416, 4
      %v419 = vshll.u32 %v352, 16
      %v421 = vrot.slane %v419, 5
      %v422 = vsel %vm408, %v417, %v421
      %v423 = vshrl.u32 %v352, 16
      %v425 = vrot.slane %v423, 4
      %v426 = vor.u32 %v425, %v421
      %v427 = vrot.slane %v426, 4
      %v429 = vshll.u32 %v353, 16
      %v431 = vrot.slane %v429, 5
      %v432 = vsel %vm408, %v427, %v431
      %v434 = vshrl.u32 %v354, 16
      %v436 = vrot.slane %v434, 4
      %v437 = vshll.u32 %v354, 16
      %v439 = vrot.slane %v437, 5
      %v440 = vor.u32 %v436, %v439
      %v441 = vrot.slane %v440, 4
      %v443 = vshll.u32 %v355, 16
      %v445 = vrot.slane %v443, 5
      %v446 = vsel %vm408, %v441, %v445
      %v447 = vshrl.u32 %v355, 16
      %v449 = vrot.slane %v447, 4
      %v450 = vor.u32 %v449, %v445
      %v451 = vrot.slane %v450, 4
      %v453 = vshll.u32 %v356, 16
      %v455 = vrot.slane %v453, 5
      %v456 = vsel %vm408, %v451, %v455
      %v458 = vshrl.u32 %v357, 16
      %v460 = vrot.slane %v458, 4
      %v461 = vshll.u32 %v357, 16
      %v463 = vrot.slane %v461, 5
      %v464 = vor.u32 %v460, %v463
      %v465 = vrot.slane %v464, 4
      %v467 = vshll.u32 %v358, 16
      %v469 = vrot.slane %v467, 5
      %v470 = vsel %vm408, %v465, %v469
      %v471 = vshrl.u32 %v358, 16
      %v473 = vrot.slane %v471, 4
      %v474 = vor.u32 %v473, %v469
      %v475 = vrot.slane %v474, 4
      %v477 = vshll.u32 %v359, 16
      %v479 = vrot.slane %v477, 5
      %v480 = vsel %vm408, %v475, %v479
      %v482 = vshrl.u32 %v360, 16
      %v484 = vrot.slane %v482, 4
      %v485 = vshll.u32 %v360, 16
      %v487 = vrot.slane %v485, 5
      %v488 = vor.u32 %v484, %v487
      %v489 = vrot.slane %v488, 4
      %v491 = vshll.u32 %v361, 16
      %v493 = vrot.slane %v491, 5
      %v494 = vsel %vm408, %v489, %v493
      %v495 = vshrl.u32 %v361, 16
      %v497 = vrot.slane %v495, 4
      %v498 = vor.u32 %v497, %v493
      %v499 = vrot.slane %v498, 4
      %v501 = vshll.u32 %v362, 16
      %v503 = vrot.slane %v501, 5
      %v504 = vsel %vm408, %v499, %v503
      %v506 = vshrl.u32 %v363, 16
      %v508 = vrot.slane %v506, 4
      %v509 = vshll.u32 %v363, 16
      %v511 = vrot.slane %v509, 5
      %v512 = vor.u32 %v508, %v511
      %v513 = vrot.slane %v512, 4
      %v515 = vshll.u32 %v364, 16
      %v517 = vrot.slane %v515, 5
      %v518 = vsel %vm408, %v513, %v517
      %v519 = vshrl.u32 %v364, 16
      %v521 = vrot.slane %v519, 4
      %v522 = vor.u32 %v521, %v517
      %v523 = vrot.slane %v522, 4
      %v525 = vshll.u32 %v365, 16
      %v527 = vrot.slane %v525, 5
      %v528 = vsel %vm408, %v523, %v527
      %v530 = vshrl.u32 %v366, 16
      %v532 = vrot.slane %v530, 4
      %v533 = vshll.u32 %v366, 16
      %v535 = vrot.slane %v533, 5
      %v536 = vor.u32 %v532, %v535
      %v537 = vrot.slane %v536, 4
      %v539 = vshll.u32 %v367, 16
      %v541 = vrot.slane %v539, 5
      %v542 = vsel %vm408, %v537, %v541
      %v543 = vshrl.u32 %v367, 16
      %v545 = vrot.slane %v543, 4
      %v546 = vor.u32 %v545, %v541
      %v547 = vrot.slane %v546, 4
      %v549 = vshll.u32 %v368, 16
      %v551 = vrot.slane %v549, 5
      %v552 = vsel %vm408, %v547, %v551
      %v554 = vshrl.u32 %v369, 16
      %v556 = vrot.slane %v554, 4
      %v557 = vshll.u32 %v369, 16
      %v559 = vrot.slane %v557, 5
      %v560 = vor.u32 %v556, %v559
      %v561 = vrot.slane %v560, 4
      %v563 = vshll.u32 %v370, 16
      %v565 = vrot.slane %v563, 5
      %v566 = vsel %vm408, %v561, %v565
      %v567 = vshrl.u32 %v370, 16
      %v569 = vrot.slane %v567, 4
      %v570 = vor.u32 %v569, %v565
      %v571 = vrot.slane %v570, 4
      %v573 = vshll.u32 %v371, 16
      %v575 = vrot.slane %v573, 5
      %v576 = vsel %vm408, %v571, %v575
      %v578 = vshrl.u32 %v372, 16
      %v580 = vrot.slane %v578, 4
      %v581 = vshll.u32 %v372, 16
      %v583 = vrot.slane %v581, 5
      %v584 = vor.u32 %v580, %v583
      %v585 = vrot.slane %v584, 4
      %v587 = vshll.u32 %v373, 16
      %v589 = vrot.slane %v587, 5
      %v590 = vsel %vm408, %v585, %v589
      %v591 = vshrl.u32 %v373, 16
      %v593 = vrot.slane %v591, 4
      %v594 = vor.u32 %v593, %v589
      %v595 = vrot.slane %v594, 4
      %v597 = vshll.u32 %v374, 16
      %v599 = vrot.slane %v597, 5
      %v600 = vsel %vm408, %v595, %v599
      %v602 = vshrl.u32 %v375, 16
      %v604 = vrot.slane %v602, 4
      %v605 = vshll.u32 %v375, 16
      %v607 = vrot.slane %v605, 5
      %v608 = vor.u32 %v604, %v607
      %v609 = vrot.slane %v608, 4
      %v611 = vshll.u32 %v376, 16
      %v613 = vrot.slane %v611, 5
      %v614 = vsel %vm408, %v609, %v613
      %v615 = vshrl.u32 %v376, 16
      %v617 = vrot.slane %v615, 4
      %v618 = vor.u32 %v617, %v613
      %v619 = vrot.slane %v618, 4
      %v621 = vshll.u32 %v377, 16
      %v623 = vrot.slane %v621, 5
      %v624 = vsel %vm408, %v619, %v623
      %v626 = vshrl.u32 %v378, 16
      %v628 = vrot.slane %v626, 4
      %v629 = vshll.u32 %v378, 16
      %v631 = vrot.slane %v629, 5
      %v632 = vor.u32 %v628, %v631
      %v633 = vrot.slane %v632, 4
      %v635 = vshll.u32 %v379, 16
      %v637 = vrot.slane %v635, 5
      %v638 = vsel %vm408, %v633, %v637
      %v639 = vshrl.u32 %v379, 16
      %v641 = vrot.slane %v639, 4
      %v642 = vor.u32 %v641, %v637
      %v643 = vrot.slane %v642, 4
      %v645 = vshll.u32 %v380, 16
      %v647 = vrot.slane %v645, 5
      %v648 = vsel %vm408, %v643, %v647
      %v650 = vshrl.u32 %v381, 16
      %v652 = vrot.slane %v650, 4
      %v653 = vshll.u32 %v381, 16
      %v655 = vrot.slane %v653, 5
      %v656 = vor.u32 %v652, %v655
      %v657 = vrot.slane %v656, 4
      %v659 = vshll.u32 %v382, 16
      %v661 = vrot.slane %v659, 5
      %v662 = vsel %vm408, %v657, %v661
      %v663 = vshrl.u32 %v382, 16
      %v665 = vrot.slane %v663, 4
      %v666 = vor.u32 %v665, %v661
      %v667 = vrot.slane %v666, 4
      %v669 = vshll.u32 %v383, 16
      %v671 = vrot.slane %v669, 5
      %v672 = vsel %vm408, %v667, %v671
      %v674 = vshrl.u32 %v384, 16
      %v676 = vrot.slane %v674, 4
      %v677 = vshll.u32 %v384, 16
      %v679 = vrot.slane %v677, 5
      %v680 = vor.u32 %v676, %v679
      %v681 = vrot.slane %v680, 4
      %v683 = vshll.u32 %v385, 16
      %v685 = vrot.slane %v683, 5
      %v686 = vsel %vm408, %v681, %v685
      %v687 = vshrl.u32 %v385, 16
      %v689 = vrot.slane %v687, 4
      %v690 = vor.u32 %v689, %v685
      %v691 = vrot.slane %v690, 4
      %v693 = vshll.u32 %v386, 16
      %v695 = vrot.slane %v693, 5
      %v696 = vsel %vm408, %v691, %v695
      %v698 = vshrl.u32 %v387, 16
      %v700 = vrot.slane %v698, 4
      %v701 = vshll.u32 %v387, 16
      %v703 = vrot.slane %v701, 5
      %v704 = vor.u32 %v700, %v703
      %v705 = vrot.slane %v704, 4
      %v707 = vshll.u32 %v388, 16
      %v709 = vrot.slane %v707, 5
      %v710 = vsel %vm408, %v705, %v709
      %v711 = vshrl.u32 %v388, 16
      %v713 = vrot.slane %v711, 4
      %v714 = vor.u32 %v713, %v709
      %v715 = vrot.slane %v714, 4
      %v717 = vshll.u32 %v389, 16
      %v719 = vrot.slane %v717, 5
      %v720 = vsel %vm408, %v715, %v719
      %v722 = vshrl.u32 %v390, 16
      %v724 = vrot.slane %v722, 4
      %v725 = vshll.u32 %v390, 16
      %v727 = vrot.slane %v725, 5
      %v728 = vor.u32 %v724, %v727
      %v729 = vrot.slane %v728, 4
      %v731 = vshll.u32 %v391, 16
      %v733 = vrot.slane %v731, 5
      %v734 = vsel %vm408, %v729, %v733
      %v735 = vshrl.u32 %v391, 16
      %v737 = vrot.slane %v735, 4
      %v738 = vor.u32 %v737, %v733
      %v739 = vrot.slane %v738, 4
      %v741 = vshll.u32 %v392, 16
      %v743 = vrot.slane %v741, 5
      %v744 = vsel %vm408, %v739, %v743
      %v746 = vshrl.u32 %v393, 16
      %v748 = vrot.slane %v746, 4
      %v749 = vshll.u32 %v393, 16
      %v751 = vrot.slane %v749, 5
      %v752 = vor.u32 %v748, %v751
      %v753 = vrot.slane %v752, 4
      %v755 = vshll.u32 %v394, 16
      %v757 = vrot.slane %v755, 5
      %v758 = vsel %vm408, %v753, %v757
      %v759 = vshrl.u32 %v394, 16
      %v761 = vrot.slane %v759, 4
      %v762 = vor.u32 %v761, %v757
      %v763 = vrot.slane %v762, 4
      %v765 = vshll.u32 %v395, 16
      %v767 = vrot.slane %v765, 5
      %v768 = vsel %vm408, %v763, %v767
      %v770 = vshrl.u32 %v396, 16
      %v772 = vrot.slane %v770, 4
      %v773 = vshll.u32 %v396, 16
      %v775 = vrot.slane %v773, 5
      %v776 = vor.u32 %v772, %v775
      %v777 = vrot.slane %v776, 4
      %v779 = vshll.u32 %v397, 16
      %v781 = vrot.slane %v779, 5
      %v782 = vsel %vm408, %v777, %v781
      %v783 = vshrl.u32 %v397, 16
      %v785 = vrot.slane %v783, 4
      %v786 = vor.u32 %v785, %v781
      %v787 = vrot.slane %v786, 4
      %v789 = vshll.u32 %v398, 16
      %v791 = vrot.slane %v789, 5
      %v792 = vsel %vm408, %v787, %v791
      %s793 = scalar_lea.vmem %s314, 4
      %v794 = vld [vmem:[%s793] sm:$0xf]
      %v795 = vunpack.c.l.b16 %v422
      %v796 = vunpack.c.l.b16 %v432
      %v797 = vunpack.c.l.b16 %v446
      %v798 = vunpack.c.l.b16 %v456
      %v799 = vunpack.c.l.b16 %v470
      %v800 = vunpack.c.l.b16 %v480
      %v801 = vunpack.c.l.b16 %v494
      %v802 = vunpack.c.l.b16 %v504
      %v803 = vunpack.c.l.b16 %v518
      %v804 = vunpack.c.l.b16 %v528
      %v805 = vunpack.c.l.b16 %v542
      %v806 = vunpack.c.l.b16 %v552
      %v807 = vunpack.c.l.b16 %v566
      %v808 = vunpack.c.l.b16 %v576
      %v809 = vunpack.c.l.b16 %v590
      %v810 = vunpack.c.l.b16 %v600
      %v811 = vunpack.c.l.b16 %v614
      %v812 = vunpack.c.l.b16 %v624
      %v813 = vunpack.c.l.b16 %v638
      %v814 = vunpack.c.l.b16 %v648
      %v815 = vunpack.c.l.b16 %v662
      %v816 = vunpack.c.l.b16 %v672
      %v817 = vunpack.c.l.b16 %v686
      %v818 = vunpack.c.l.b16 %v696
      %v819 = vunpack.c.l.b16 %v710
      %v820 = vunpack.c.l.b16 %v720
      %v821 = vunpack.c.l.b16 %v734
      %v822 = vunpack.c.l.b16 %v744
      %v823 = vunpack.c.l.b16 %v758
      %v824 = vunpack.c.l.b16 %v768
      %v825 = vunpack.c.l.b16 %v782
      %v826 = vunpack.c.l.b16 %v792
      %v827 = vpack.c.b16 %v796, %v795
      %v828 = vpack.c.b16 %v798, %v797
      %v829 = vpack.c.b16 %v800, %v799
      %v830 = vpack.c.b16 %v802, %v801
      %v831 = vpack.c.b16 %v804, %v803
      %v832 = vpack.c.b16 %v806, %v805
      %v833 = vpack.c.b16 %v808, %v807
      %v834 = vpack.c.b16 %v810, %v809
      %v835 = vpack.c.b16 %v812, %v811
      %v836 = vpack.c.b16 %v814, %v813
      %v837 = vpack.c.b16 %v816, %v815
      %v838 = vpack.c.b16 %v818, %v817
      %v839 = vpack.c.b16 %v820, %v819
      %v840 = vpack.c.b16 %v822, %v821
      %v841 = vpack.c.b16 %v824, %v823
      %v842 = vpack.c.b16 %v826, %v825
      %vm843 = vcmask 64512
      %v845 = vsel %vm843, %v827, 0
      %v848 = vsel %vm843, %v828, 0
      %v851 = vsel %vm843, %v829, 0
      %v854 = vsel %vm843, %v830, 0
      %v857 = vsel %vm843, %v831, 0
      %v860 = vsel %vm843, %v832, 0
      %v863 = vsel %vm843, %v833, 0
      %v866 = vsel %vm843, %v834, 0
      %v869 = vsel %vm843, %v835, 0
      %v872 = vsel %vm843, %v836, 0
      %v875 = vsel %vm843, %v837, 0
      %v878 = vsel %vm843, %v838, 0
      %v881 = vsel %vm843, %v839, 0
      %v884 = vsel %vm843, %v840, 0
      %v887 = vsel %vm843, %v841, 0
      %v890 = vsel %vm843, %v842, 0
      %vm892 = vcmask 1043456
      %v894 = vsel %vm892, %v794, 0
      %896 = vmatprep.subr.bf16.mxu0 0
      %897 = vmatpush1.bf16.msra.mxu0 %v894
      %898 = vmatprep.subr.bf16.mxu0 0
      %899 = vmatpush1.bf16.msra.mxu0 0
      %900 = vmatprep.subr.bf16.mxu0 0
      %901 = vmatpush1.bf16.msra.mxu0 0
      %902 = vmatprep.subr.bf16.mxu0 0
      %903 = vmatpush1.bf16.msra.mxu0 0
      %904 = vmatprep.subr.bf16.mxu0 0
      %905 = vmatpush1.bf16.msra.mxu0 0
      %906 = vmatprep.subr.bf16.mxu0 0
      %907 = vmatpush1.bf16.msra.mxu0 0
      %908 = vmatprep.subr.bf16.mxu0 0
      %909 = vmatpush1.bf16.msra.mxu0 0
      %910 = vmatprep.subr.bf16.mxu0 0
      %911 = vmatpush1.bf16.msra.mxu0 0
      %912 = vmatprep.subr.bf16.mxu0 0
      %913 = vmatpush1.bf16.msra.mxu0 0
      %914 = vmatprep.subr.bf16.mxu0 0
      %915 = vmatpush1.bf16.msra.mxu0 0
      %916 = vmatprep.subr.bf16.mxu0 0
      %917 = vmatpush1.bf16.msra.mxu0 0
      %918 = vmatprep.subr.bf16.mxu0 0
      %919 = vmatpush1.bf16.msra.mxu0 0
      %920 = vmatprep.subr.bf16.mxu0 0
      %921 = vmatpush1.bf16.msra.mxu0 0
      %922 = vmatprep.subr.bf16.mxu0 0
      %923 = vmatpush1.bf16.msra.mxu0 0
      %924 = vmatprep.subr.bf16.mxu0 0
      %925 = vmatpush1.bf16.msra.mxu0 0
      %926 = vmatprep.subr.bf16.mxu0 0
      %927 = vmatpush1.bf16.msra.mxu0 0
      %928 = vmatprep.mubr.bf16.mxu0 0
      %929 = vmatmul.mubr.bf16.gmra.mrb[0].mxu0 %v845
      %v930 = vpop.f32.mrb[0].mxu0
      %v931 = vadd.f32 0.0, %v930
      %v932 = vpop.f32.mrb[0].mxu0
      %v933 = vpop.f32.mrb[0].mxu0
      %v934 = vadd.f32 0.0, %v933
      %v935 = vpop.f32.mrb[0].mxu0
      %936 = vmatprep.mubr.bf16.mxu0 0
      %937 = vmatmul.mubr.bf16.gmra.mrb[0].mxu0 %v848
      %v938 = vpop.f32.mrb[0].mxu0
      %v939 = vadd.f32 0.0, %v938
      %v940 = vpop.f32.mrb[0].mxu0
      %v941 = vpop.f32.mrb[0].mxu0
      %v942 = vadd.f32 0.0, %v941
      %v943 = vpop.f32.mrb[0].mxu0
      %944 = vmatprep.mubr.bf16.mxu0 0
      %945 = vmatmul.mubr.bf16.gmra.mrb[0].mxu0 %v851
      %v946 = vpop.f32.mrb[0].mxu0
      %v947 = vadd.f32 0.0, %v946
      %v948 = vpop.f32.mrb[0].mxu0
      %v949 = vpop.f32.mrb[0].mxu0
      %v950 = vadd.f32 0.0, %v949
      %v951 = vpop.f32.mrb[0].mxu0
      %952 = vmatprep.mubr.bf16.mxu0 0
      %953 = vmatmul.mubr.bf16.gmra.mrb[0].mxu0 %v854
      %v954 = vpop.f32.mrb[0].mxu0
      %v955 = vadd.f32 0.0, %v954
      %v956 = vpop.f32.mrb[0].mxu0
      %v957 = vpop.f32.mrb[0].mxu0
      %v958 = vadd.f32 0.0, %v957
      %v959 = vpop.f32.mrb[0].mxu0
      %960 = vmatprep.mubr.bf16.mxu0 0
      %961 = vmatmul.mubr.bf16.gmra.mrb[0].mxu0 %v857
      %v962 = vpop.f32.mrb[0].mxu0
      %v963 = vadd.f32 0.0, %v962
      %v964 = vpop.f32.mrb[0].mxu0
      %v965 = vpop.f32.mrb[0].mxu0
      %v966 = vadd.f32 0.0, %v965
      %v967 = vpop.f32.mrb[0].mxu0
      %968 = vmatprep.mubr.bf16.mxu0 0
      %969 = vmatmul.mubr.bf16.gmra.mrb[0].mxu0 %v860
      %v970 = vpop.f32.mrb[0].mxu0
      %v971 = vadd.f32 0.0, %v970
      %v972 = vpop.f32.mrb[0].mxu0
      %v973 = vpop.f32.mrb[0].mxu0
      %v974 = vadd.f32 0.0, %v973
      %v975 = vpop.f32.mrb[0].mxu0
      %976 = vmatprep.mubr.bf16.mxu0 0
      %977 = vmatmul.mubr.bf16.gmra.mrb[0].mxu0 %v863
      %v978 = vpop.f32.mrb[0].mxu0
      %v979 = vadd.f32 0.0, %v978
      %v980 = vpop.f32.mrb[0].mxu0
      %v981 = vpop.f32.mrb[0].mxu0
      %v982 = vadd.f32 0.0, %v981
      %v983 = vpop.f32.mrb[0].mxu0
      %984 = vmatprep.mubr.bf16.mxu0 0
      %985 = vmatmul.mubr.bf16.gmra.mrb[0].mxu0 %v866
      %v986 = vpop.f32.mrb[0].mxu0
      %v987 = vadd.f32 0.0, %v986
      %v988 = vpop.f32.mrb[0].mxu0
      %v989 = vpop.f32.mrb[0].mxu0
      %v990 = vadd.f32 0.0, %v989
      %v991 = vpop.f32.mrb[0].mxu0
      %992 = vmatprep.mubr.bf16.mxu0 0
      %993 = vmatmul.mubr.bf16.gmra.mrb[0].mxu0 %v869
      %v994 = vpop.f32.mrb[0].mxu0
      %v995 = vadd.f32 0.0, %v994
      %v996 = vpop.f32.mrb[0].mxu0
      %v997 = vpop.f32.mrb[0].mxu0
      %v998 = vadd.f32 0.0, %v997
      %v999 = vpop.f32.mrb[0].mxu0
      %1000 = vmatprep.mubr.bf16.mxu0 0
      %1001 = vmatmul.mubr.bf16.gmra.mrb[0].mxu0 %v872
      %v1002 = vpop.f32.mrb[0].mxu0
      %v1003 = vadd.f32 0.0, %v1002
      %v1004 = vpop.f32.mrb[0].mxu0
      %v1005 = vpop.f32.mrb[0].mxu0
      %v1006 = vadd.f32 0.0, %v1005
      %v1007 = vpop.f32.mrb[0].mxu0
      %1008 = vmatprep.mubr.bf16.mxu0 0
      %1009 = vmatmul.mubr.bf16.gmra.mrb[0].mxu0 %v875
      %v1010 = vpop.f32.mrb[0].mxu0
      %v1011 = vadd.f32 0.0, %v1010
      %v1012 = vpop.f32.mrb[0].mxu0
      %v1013 = vpop.f32.mrb[0].mxu0
      %v1014 = vadd.f32 0.0, %v1013
      %v1015 = vpop.f32.mrb[0].mxu0
      %1016 = vmatprep.mubr.bf16.mxu0 0
      %1017 = vmatmul.mubr.bf16.gmra.mrb[0].mxu0 %v878
      %v1018 = vpop.f32.mrb[0].mxu0
      %v1019 = vadd.f32 0.0, %v1018
      %v1020 = vpop.f32.mrb[0].mxu0
      %v1021 = vpop.f32.mrb[0].mxu0
      %v1022 = vadd.f32 0.0, %v1021
      %v1023 = vpop.f32.mrb[0].mxu0
      %1024 = vmatprep.mubr.bf16.mxu0 0
      %1025 = vmatmul.mubr.bf16.gmra.mrb[0].mxu0 %v881
      %v1026 = vpop.f32.mrb[0].mxu0
      %v1027 = vadd.f32 0.0, %v1026
      %v1028 = vpop.f32.mrb[0].mxu0
      %v1029 = vpop.f32.mrb[0].mxu0
      %v1030 = vadd.f32 0.0, %v1029
      %v1031 = vpop.f32.mrb[0].mxu0
      %1032 = vmatprep.mubr.bf16.mxu0 0
      %1033 = vmatmul.mubr.bf16.gmra.mrb[0].mxu0 %v884
      %v1034 = vpop.f32.mrb[0].mxu0
      %v1035 = vadd.f32 0.0, %v1034
      %v1036 = vpop.f32.mrb[0].mxu0
      %v1037 = vpop.f32.mrb[0].mxu0
      %v1038 = vadd.f32 0.0, %v1037
      %v1039 = vpop.f32.mrb[0].mxu0
      %1040 = vmatprep.mubr.bf16.mxu0 0
      %1041 = vmatmul.mubr.bf16.gmra.mrb[0].mxu0 %v887
      %v1042 = vpop.f32.mrb[0].mxu0
      %v1043 = vadd.f32 0.0, %v1042
      %v1044 = vpop.f32.mrb[0].mxu0
      %v1045 = vpop.f32.mrb[0].mxu0
      %v1046 = vadd.f32 0.0, %v1045
      %v1047 = vpop.f32.mrb[0].mxu0
      %1048 = vmatprep.mubr.bf16.mxu0 0
      %1049 = vmatmul.mubr.bf16.gmra.mrb[0].mxu0 %v890
      %v1050 = vpop.f32.mrb[0].mxu0
      %v1051 = vadd.f32 0.0, %v1050
      %v1052 = vpop.f32.mrb[0].mxu0
      %v1053 = vpop.f32.mrb[0].mxu0
      %v1054 = vadd.f32 0.0, %v1053
      %v1055 = vpop.f32.mrb[0].mxu0
      %1056 = vdwg.mxu0
      %v1089 = vunpack.c.l.b16 %v351
      %v1090 = vunpack.c.l.b16 %v352
      %v1091 = vunpack.c.l.b16 %v354
      %v1092 = vunpack.c.l.b16 %v355
      %v1093 = vunpack.c.l.b16 %v357
      %v1094 = vunpack.c.l.b16 %v358
      %v1095 = vunpack.c.l.b16 %v360
      %v1096 = vunpack.c.l.b16 %v361
      %v1097 = vunpack.c.l.b16 %v363
      %v1098 = vunpack.c.l.b16 %v364
      %v1099 = vunpack.c.l.b16 %v366
      %v1100 = vunpack.c.l.b16 %v367
      %v1101 = vunpack.c.l.b16 %v369
      %v1102 = vunpack.c.l.b16 %v370
      %v1103 = vunpack.c.l.b16 %v372
      %v1104 = vunpack.c.l.b16 %v373
      %v1105 = vunpack.c.l.b16 %v375
      %v1106 = vunpack.c.l.b16 %v376
      %v1107 = vunpack.c.l.b16 %v378
      %v1108 = vunpack.c.l.b16 %v379
      %v1109 = vunpack.c.l.b16 %v381
      %v1110 = vunpack.c.l.b16 %v382
      %v1111 = vunpack.c.l.b16 %v384
      %v1112 = vunpack.c.l.b16 %v385
      %v1113 = vunpack.c.l.b16 %v387
      %v1114 = vunpack.c.l.b16 %v388
      %v1115 = vunpack.c.l.b16 %v390
      %v1116 = vunpack.c.l.b16 %v391
      %v1117 = vunpack.c.l.b16 %v393
      %v1118 = vunpack.c.l.b16 %v394
      %v1119 = vunpack.c.l.b16 %v396
      %v1120 = vunpack.c.l.b16 %v397
      %v1121 = vpack.c.b16 %v1090, %v1089
      %v1122 = vpack.c.b16 %v1092, %v1091
      %v1123 = vpack.c.b16 %v1094, %v1093
      %v1124 = vpack.c.b16 %v1096, %v1095
      %v1125 = vpack.c.b16 %v1098, %v1097
      %v1126 = vpack.c.b16 %v1100, %v1099
      %v1127 = vpack.c.b16 %v1102, %v1101
      %v1128 = vpack.c.b16 %v1104, %v1103
      %v1129 = vpack.c.b16 %v1106, %v1105
      %v1130 = vpack.c.b16 %v1108, %v1107
      %v1131 = vpack.c.b16 %v1110, %v1109
      %v1132 = vpack.c.b16 %v1112, %v1111
      %v1133 = vpack.c.b16 %v1114, %v1113
      %v1134 = vpack.c.b16 %v1116, %v1115
      %v1135 = vpack.c.b16 %v1118, %v1117
      %v1136 = vpack.c.b16 %v1120, %v1119
      %v1138 = vsel %vm843, %v1121, 0
      %v1141 = vsel %vm843, %v1122, 0
      %v1144 = vsel %vm843, %v1123, 0
      %v1147 = vsel %vm843, %v1124, 0
      %v1150 = vsel %vm843, %v1125, 0
      %v1153 = vsel %vm843, %v1126, 0
      %v1156 = vsel %vm843, %v1127, 0
      %v1159 = vsel %vm843, %v1128, 0
      %v1162 = vsel %vm843, %v1129, 0
      %v1165 = vsel %vm843, %v1130, 0
      %v1168 = vsel %vm843, %v1131, 0
      %v1171 = vsel %vm843, %v1132, 0
      %v1174 = vsel %vm843, %v1133, 0
      %v1177 = vsel %vm843, %v1134, 0
      %v1180 = vsel %vm843, %v1135, 0
      %v1183 = vsel %vm843, %v1136, 0
      %v1186 = vsel %vm892, %v405, 0
      %1188 = vmatprep.subr.bf16.mxu0 0
      %1189 = vmatpush1.bf16.msra.mxu0 %v1186
      %1190 = vmatprep.subr.bf16.mxu0 0
      %1191 = vmatpush1.bf16.msra.mxu0 0
      %1192 = vmatprep.subr.bf16.mxu0 0
      %1193 = vmatpush1.bf16.msra.mxu0 0
      %1194 = vmatprep.subr.bf16.mxu0 0
      %1195 = vmatpush1.bf16.msra.mxu0 0
      %1196 = vmatprep.subr.bf16.mxu0 0
      %1197 = vmatpush1.bf16.msra.mxu0 0
      %1198 = vmatprep.subr.bf16.mxu0 0
      %1199 = vmatpush1.bf16.msra.mxu0 0
      %1200 = vmatprep.subr.bf16.mxu0 0
      %1201 = vmatpush1.bf16.msra.mxu0 0
      %1202 = vmatprep.subr.bf16.mxu0 0
      %1203 = vmatpush1.bf16.msra.mxu0 0
      %1204 = vmatprep.subr.bf16.mxu0 0
      %1205 = vmatpush1.bf16.msra.mxu0 0
      %1206 = vmatprep.subr.bf16.mxu0 0
      %1207 = vmatpush1.bf16.msra.mxu0 0
      %1208 = vmatprep.subr.bf16.mxu0 0
      %1209 = vmatpush1.bf16.msra.mxu0 0
      %1210 = vmatprep.subr.bf16.mxu0 0
      %1211 = vmatpush1.bf16.msra.mxu0 0
      %1212 = vmatprep.subr.bf16.mxu0 0
      %1213 = vmatpush1.bf16.msra.mxu0 0
      %1214 = vmatprep.subr.bf16.mxu0 0
      %1215 = vmatpush1.bf16.msra.mxu0 0
      %1216 = vmatprep.subr.bf16.mxu0 0
      %1217 = vmatpush1.bf16.msra.mxu0 0
      %1218 = vmatprep.subr.bf16.mxu0 0
      %1219 = vmatpush1.bf16.msra.mxu0 0
      %1220 = vmatprep.mubr.bf16.mxu0 0
      %1221 = vmatmul.mubr.bf16.gmra.mrb[0].mxu0 %v1138
      %v1222 = vpop.f32.mrb[0].mxu0
      %v1223 = vadd.f32 %v931, %v1222
      %v1224 = vpop.f32.mrb[0].mxu0
      %v1225 = vpop.f32.mrb[0].mxu0
      %v1226 = vadd.f32 %v934, %v1225
      %v1227 = vpop.f32.mrb[0].mxu0
      %1228 = vmatprep.mubr.bf16.mxu0 0
      %1229 = vmatmul.mubr.bf16.gmra.mrb[0].mxu0 %v1141
      %v1230 = vpop.f32.mrb[0].mxu0
      %v1231 = vadd.f32 %v939, %v1230
      %v1232 = vpop.f32.mrb[0].mxu0
      %v1233 = vpop.f32.mrb[0].mxu0
      %v1234 = vadd.f32 %v942, %v1233
      %v1235 = vpop.f32.mrb[0].mxu0
      %1236 = vmatprep.mubr.bf16.mxu0 0
      %1237 = vmatmul.mubr.bf16.gmra.mrb[0].mxu0 %v1144
      %v1238 = vpop.f32.mrb[0].mxu0
      %v1239 = vadd.f32 %v947, %v1238
      %v1240 = vpop.f32.mrb[0].mxu0
      %v1241 = vpop.f32.mrb[0].mxu0
      %v1242 = vadd.f32 %v950, %v1241
      %v1243 = vpop.f32.mrb[0].mxu0
      %1244 = vmatprep.mubr.bf16.mxu0 0
      %1245 = vmatmul.mubr.bf16.gmra.mrb[0].mxu0 %v1147
      %v1246 = vpop.f32.mrb[0].mxu0
      %v1247 = vadd.f32 %v955, %v1246
      %v1248 = vpop.f32.mrb[0].mxu0
      %v1249 = vpop.f32.mrb[0].mxu0
      %v1250 = vadd.f32 %v958, %v1249
      %v1251 = vpop.f32.mrb[0].mxu0
      %1252 = vmatprep.mubr.bf16.mxu0 0
      %1253 = vmatmul.mubr.bf16.gmra.mrb[0].mxu0 %v1150
      %v1254 = vpop.f32.mrb[0].mxu0
      %v1255 = vadd.f32 %v963, %v1254
      %v1256 = vpop.f32.mrb[0].mxu0
      %v1257 = vpop.f32.mrb[0].mxu0
      %v1258 = vadd.f32 %v966, %v1257
      %v1259 = vpop.f32.mrb[0].mxu0
      %1260 = vmatprep.mubr.bf16.mxu0 0
      %1261 = vmatmul.mubr.bf16.gmra.mrb[0].mxu0 %v1153
      %v1262 = vpop.f32.mrb[0].mxu0
      %v1263 = vadd.f32 %v971, %v1262
      %v1264 = vpop.f32.mrb[0].mxu0
      %v1265 = vpop.f32.mrb[0].mxu0
      %v1266 = vadd.f32 %v974, %v1265
      %v1267 = vpop.f32.mrb[0].mxu0
      %1268 = vmatprep.mubr.bf16.mxu0 0
      %1269 = vmatmul.mubr.bf16.gmra.mrb[0].mxu0 %v1156
      %v1270 = vpop.f32.mrb[0].mxu0
      %v1271 = vadd.f32 %v979, %v1270
      %v1272 = vpop.f32.mrb[0].mxu0
      %v1273 = vpop.f32.mrb[0].mxu0
      %v1274 = vadd.f32 %v982, %v1273
      %v1275 = vpop.f32.mrb[0].mxu0
      %1276 = vmatprep.mubr.bf16.mxu0 0
      %1277 = vmatmul.mubr.bf16.gmra.mrb[0].mxu0 %v1159
      %v1278 = vpop.f32.mrb[0].mxu0
      %v1279 = vadd.f32 %v987, %v1278
      %v1280 = vpop.f32.mrb[0].mxu0
      %v1281 = vpop.f32.mrb[0].mxu0
      %v1282 = vadd.f32 %v990, %v1281
      %v1283 = vpop.f32.mrb[0].mxu0
      %1284 = vmatprep.mubr.bf16.mxu0 0
      %1285 = vmatmul.mubr.bf16.gmra.mrb[0].mxu0 %v1162
      %v1286 = vpop.f32.mrb[0].mxu0
      %v1287 = vadd.f32 %v995, %v1286
      %v1288 = vpop.f32.mrb[0].mxu0
      %v1289 = vpop.f32.mrb[0].mxu0
      %v1290 = vadd.f32 %v998, %v1289
      %v1291 = vpop.f32.mrb[0].mxu0
      %1292 = vmatprep.mubr.bf16.mxu0 0
      %1293 = vmatmul.mubr.bf16.gmra.mrb[0].mxu0 %v1165
      %v1294 = vpop.f32.mrb[0].mxu0
      %v1295 = vadd.f32 %v1003, %v1294
      %v1296 = vpop.f32.mrb[0].mxu0
      %v1297 = vpop.f32.mrb[0].mxu0
      %v1298 = vadd.f32 %v1006, %v1297
      %v1299 = vpop.f32.mrb[0].mxu0
      %1300 = vmatprep.mubr.bf16.mxu0 0
      %1301 = vmatmul.mubr.bf16.gmra.mrb[0].mxu0 %v1168
      %v1302 = vpop.f32.mrb[0].mxu0
      %v1303 = vadd.f32 %v1011, %v1302
      %v1304 = vpop.f32.mrb[0].mxu0
      %v1305 = vpop.f32.mrb[0].mxu0
      %v1306 = vadd.f32 %v1014, %v1305
      %v1307 = vpop.f32.mrb[0].mxu0
      %1308 = vmatprep.mubr.bf16.mxu0 0
      %1309 = vmatmul.mubr.bf16.gmra.mrb[0].mxu0 %v1171
      %v1310 = vpop.f32.mrb[0].mxu0
      %v1311 = vadd.f32 %v1019, %v1310
      %v1312 = vpop.f32.mrb[0].mxu0
      %v1313 = vpop.f32.mrb[0].mxu0
      %v1314 = vadd.f32 %v1022, %v1313
      %v1315 = vpop.f32.mrb[0].mxu0
      %1316 = vmatprep.mubr.bf16.mxu0 0
      %1317 = vmatmul.mubr.bf16.gmra.mrb[0].mxu0 %v1174
      %v1318 = vpop.f32.mrb[0].mxu0
      %v1319 = vadd.f32 %v1027, %v1318
      %v1320 = vpop.f32.mrb[0].mxu0
      %v1321 = vpop.f32.mrb[0].mxu0
      %v1322 = vadd.f32 %v1030, %v1321
      %v1323 = vpop.f32.mrb[0].mxu0
      %1324 = vmatprep.mubr.bf16.mxu0 0
      %1325 = vmatmul.mubr.bf16.gmra.mrb[0].mxu0 %v1177
      %v1326 = vpop.f32.mrb[0].mxu0
      %v1327 = vadd.f32 %v1035, %v1326
      %v1328 = vpop.f32.mrb[0].mxu0
      %v1329 = vpop.f32.mrb[0].mxu0
      %v1330 = vadd.f32 %v1038, %v1329
      %v1331 = vpop.f32.mrb[0].mxu0
      %1332 = vmatprep.mubr.bf16.mxu0 0
      %1333 = vmatmul.mubr.bf16.gmra.mrb[0].mxu0 %v1180
      %v1334 = vpop.f32.mrb[0].mxu0
      %v1335 = vadd.f32 %v1043, %v1334
      %v1336 = vpop.f32.mrb[0].mxu0
      %v1337 = vpop.f32.mrb[0].mxu0
      %v1338 = vadd.f32 %v1046, %v1337
      %v1339 = vpop.f32.mrb[0].mxu0
      %1340 = vmatprep.mubr.bf16.mxu0 0
      %1341 = vmatmul.mubr.bf16.gmra.mrb[0].mxu0 %v1183
      %v1342 = vpop.f32.mrb[0].mxu0
      %v1343 = vadd.f32 %v1051, %v1342
      %v1344 = vpop.f32.mrb[0].mxu0
      %v1345 = vpop.f32.mrb[0].mxu0
      %v1346 = vadd.f32 %v1054, %v1345
      %v1347 = vpop.f32.mrb[0].mxu0
      %1348 = vdwg.mxu0
      %vm1365 = vcmask 1042432
      %vm1366 = vcmask 1046532
      %vm1367 = vmor %vm1365, %vm1366
      %v1368 = vrot.slane %v351, 5
      %v1369 = vrot.slane %v1368, 4
      %v1370 = vrot.slane %v352, 5
      %v1371 = vsel %vm1367, %v1369, %v1370
      %v1372 = vrot.slane %v1370, 4
      %v1373 = vrot.slane %v353, 5
      %v1374 = vsel %vm1367, %v1372, %v1373
      %v1375 = vrot.slane %v354, 5
      %v1376 = vrot.slane %v1375, 4
      %v1377 = vrot.slane %v355, 5
      %v1378 = vsel %vm1367, %v1376, %v1377
      %v1379 = vrot.slane %v1377, 4
      %v1380 = vrot.slane %v356, 5
      %v1381 = vsel %vm1367, %v1379, %v1380
      %v1382 = vrot.slane %v357, 5
      %v1383 = vrot.slane %v1382, 4
      %v1384 = vrot.slane %v358, 5
      %v1385 = vsel %vm1367, %v1383, %v1384
      %v1386 = vrot.slane %v1384, 4
      %v1387 = vrot.slane %v359, 5
      %v1388 = vsel %vm1367, %v1386, %v1387
      %v1389 = vrot.slane %v360, 5
      %v1390 = vrot.slane %v1389, 4
      %v1391 = vrot.slane %v361, 5
      %v1392 = vsel %vm1367, %v1390, %v1391
      %v1393 = vrot.slane %v1391, 4
      %v1394 = vrot.slane %v362, 5
      %v1395 = vsel %vm1367, %v1393, %v1394
      %v1396 = vrot.slane %v363, 5
      %v1397 = vrot.slane %v1396, 4
      %v1398 = vrot.slane %v364, 5
      %v1399 = vsel %vm1367, %v1397, %v1398
      %v1400 = vrot.slane %v1398, 4
      %v1401 = vrot.slane %v365, 5
      %v1402 = vsel %vm1367, %v1400, %v1401
      %v1403 = vrot.slane %v366, 5
      %v1404 = vrot.slane %v1403, 4
      %v1405 = vrot.slane %v367, 5
      %v1406 = vsel %vm1367, %v1404, %v1405
      %v1407 = vrot.slane %v1405, 4
      %v1408 = vrot.slane %v368, 5
      %v1409 = vsel %vm1367, %v1407, %v1408
      %v1410 = vrot.slane %v369, 5
      %v1411 = vrot.slane %v1410, 4
      %v1412 = vrot.slane %v370, 5
      %v1413 = vsel %vm1367, %v1411, %v1412
      %v1414 = vrot.slane %v1412, 4
      %v1415 = vrot.slane %v371, 5
      %v1416 = vsel %vm1367, %v1414, %v1415
      %v1417 = vrot.slane %v372, 5
      %v1418 = vrot.slane %v1417, 4
      %v1419 = vrot.slane %v373, 5
      %v1420 = vsel %vm1367, %v1418, %v1419
      %v1421 = vrot.slane %v1419, 4
      %v1422 = vrot.slane %v374, 5
      %v1423 = vsel %vm1367, %v1421, %v1422
      %v1424 = vrot.slane %v375, 5
      %v1425 = vrot.slane %v1424, 4
      %v1426 = vrot.slane %v376, 5
      %v1427 = vsel %vm1367, %v1425, %v1426
      %v1428 = vrot.slane %v1426, 4
      %v1429 = vrot.slane %v377, 5
      %v1430 = vsel %vm1367, %v1428, %v1429
      %v1431 = vrot.slane %v378, 5
      %v1432 = vrot.slane %v1431, 4
      %v1433 = vrot.slane %v379, 5
      %v1434 = vsel %vm1367, %v1432, %v1433
      %v1435 = vrot.slane %v1433, 4
      %v1436 = vrot.slane %v380, 5
      %v1437 = vsel %vm1367, %v1435, %v1436
      %v1438 = vrot.slane %v381, 5
      %v1439 = vrot.slane %v1438, 4
      %v1440 = vrot.slane %v382, 5
      %v1441 = vsel %vm1367, %v1439, %v1440
      %v1442 = vrot.slane %v1440, 4
      %v1443 = vrot.slane %v383, 5
      %v1444 = vsel %vm1367, %v1442, %v1443
      %v1445 = vrot.slane %v384, 5
      %v1446 = vrot.slane %v1445, 4
      %v1447 = vrot.slane %v385, 5
      %v1448 = vsel %vm1367, %v1446, %v1447
      %v1449 = vrot.slane %v1447, 4
      %v1450 = vrot.slane %v386, 5
      %v1451 = vsel %vm1367, %v1449, %v1450
      %v1452 = vrot.slane %v387, 5
      %v1453 = vrot.slane %v1452, 4
      %v1454 = vrot.slane %v388, 5
      %v1455 = vsel %vm1367, %v1453, %v1454
      %v1456 = vrot.slane %v1454, 4
      %v1457 = vrot.slane %v389, 5
      %v1458 = vsel %vm1367, %v1456, %v1457
      %v1459 = vrot.slane %v390, 5
      %v1460 = vrot.slane %v1459, 4
      %v1461 = vrot.slane %v391, 5
      %v1462 = vsel %vm1367, %v1460, %v1461
      %v1463 = vrot.slane %v1461, 4
      %v1464 = vrot.slane %v392, 5
      %v1465 = vsel %vm1367, %v1463, %v1464
      %v1466 = vrot.slane %v393, 5
      %v1467 = vrot.slane %v1466, 4
      %v1468 = vrot.slane %v394, 5
      %v1469 = vsel %vm1367, %v1467, %v1468
      %v1470 = vrot.slane %v1468, 4
      %v1471 = vrot.slane %v395, 5
      %v1472 = vsel %vm1367, %v1470, %v1471
      %v1473 = vrot.slane %v396, 5
      %v1474 = vrot.slane %v1473, 4
      %v1475 = vrot.slane %v397, 5
      %v1476 = vsel %vm1367, %v1474, %v1475
      %v1477 = vrot.slane %v1475, 4
      %v1478 = vrot.slane %v398, 5
      %v1479 = vsel %vm1367, %v1477, %v1478
      %s1480 = scalar_lea.vmem %s314, 8
      %v1481 = vld [vmem:[%s1480] sm:$0xf]
      %v1482 = vunpack.c.l.b16 %v1371
      %v1483 = vunpack.c.l.b16 %v1374
      %v1484 = vunpack.c.l.b16 %v1378
      %v1485 = vunpack.c.l.b16 %v1381
      %v1486 = vunpack.c.l.b16 %v1385
      %v1487 = vunpack.c.l.b16 %v1388
      %v1488 = vunpack.c.l.b16 %v1392
      %v1489 = vunpack.c.l.b16 %v1395
      %v1490 = vunpack.c.l.b16 %v1399
      %v1491 = vunpack.c.l.b16 %v1402
      %v1492 = vunpack.c.l.b16 %v1406
      %v1493 = vunpack.c.l.b16 %v1409
      %v1494 = vunpack.c.l.b16 %v1413
      %v1495 = vunpack.c.l.b16 %v1416
      %v1496 = vunpack.c.l.b16 %v1420
      %v1497 = vunpack.c.l.b16 %v1423
      %v1498 = vunpack.c.l.b16 %v1427
      %v1499 = vunpack.c.l.b16 %v1430
      %v1500 = vunpack.c.l.b16 %v1434
      %v1501 = vunpack.c.l.b16 %v1437
      %v1502 = vunpack.c.l.b16 %v1441
      %v1503 = vunpack.c.l.b16 %v1444
      %v1504 = vunpack.c.l.b16 %v1448
      %v1505 = vunpack.c.l.b16 %v1451
      %v1506 = vunpack.c.l.b16 %v1455
      %v1507 = vunpack.c.l.b16 %v1458
      %v1508 = vunpack.c.l.b16 %v1462
      %v1509 = vunpack.c.l.b16 %v1465
      %v1510 = vunpack.c.l.b16 %v1469
      %v1511 = vunpack.c.l.b16 %v1472
      %v1512 = vunpack.c.l.b16 %v1476
      %v1513 = vunpack.c.l.b16 %v1479
      %v1514 = vpack.c.b16 %v1483, %v1482
      %v1515 = vpack.c.b16 %v1485, %v1484
      %v1516 = vpack.c.b16 %v1487, %v1486
      %v1517 = vpack.c.b16 %v1489, %v1488
      %v1518 = vpack.c.b16 %v1491, %v1490
      %v1519 = vpack.c.b16 %v1493, %v1492
      %v1520 = vpack.c.b16 %v1495, %v1494
      %v1521 = vpack.c.b16 %v1497, %v1496
      %v1522 = vpack.c.b16 %v1499, %v1498
      %v1523 = vpack.c.b16 %v1501, %v1500
      %v1524 = vpack.c.b16 %v1503, %v1502
      %v1525 = vpack.c.b16 %v1505, %v1504
      %v1526 = vpack.c.b16 %v1507, %v1506
      %v1527 = vpack.c.b16 %v1509, %v1508
      %v1528 = vpack.c.b16 %v1511, %v1510
      %v1529 = vpack.c.b16 %v1513, %v1512
      %v1531 = vsel %vm843, %v1514, 0
      %v1534 = vsel %vm843, %v1515, 0
      %v1537 = vsel %vm843, %v1516, 0
      %v1540 = vsel %vm843, %v1517, 0
      %v1543 = vsel %vm843, %v1518, 0
      %v1546 = vsel %vm843, %v1519, 0
      %v1549 = vsel %vm843, %v1520, 0
      %v1552 = vsel %vm843, %v1521, 0
      %v1555 = vsel %vm843, %v1522, 0
      %v1558 = vsel %vm843, %v1523, 0
      %v1561 = vsel %vm843, %v1524, 0
      %v1564 = vsel %vm843, %v1525, 0
      %v1567 = vsel %vm843, %v1526, 0
      %v1570 = vsel %vm843, %v1527, 0
      %v1573 = vsel %vm843, %v1528, 0
      %v1576 = vsel %vm843, %v1529, 0
      %v1579 = vsel %vm892, %v1481, 0
      %1581 = vmatprep.subr.bf16.mxu0 0
      %1582 = vmatpush1.bf16.msra.mxu0 %v1579
      %1583 = vmatprep.subr.bf16.mxu0 0
      %1584 = vmatpush1.bf16.msra.mxu0 0
      %1585 = vmatprep.subr.bf16.mxu0 0
      %1586 = vmatpush1.bf16.msra.mxu0 0
      %1587 = vmatprep.subr.bf16.mxu0 0
      %1588 = vmatpush1.bf16.msra.mxu0 0
      %1589 = vmatprep.subr.bf16.mxu0 0
      %1590 = vmatpush1.bf16.msra.mxu0 0
      %1591 = vmatprep.subr.bf16.mxu0 0
      %1592 = vmatpush1.bf16.msra.mxu0 0
      %1593 = vmatprep.subr.bf16.mxu0 0
      %1594 = vmatpush1.bf16.msra.mxu0 0
      %1595 = vmatprep.subr.bf16.mxu0 0
      %1596 = vmatpush1.bf16.msra.mxu0 0
      %1597 = vmatprep.subr.bf16.mxu0 0
      %1598 = vmatpush1.bf16.msra.mxu0 0
      %1599 = vmatprep.subr.bf16.mxu0 0
      %1600 = vmatpush1.bf16.msra.mxu0 0
      %1601 = vmatprep.subr.bf16.mxu0 0
      %1602 = vmatpush1.bf16.msra.mxu0 0
      %1603 = vmatprep.subr.bf16.mxu0 0
      %1604 = vmatpush1.bf16.msra.mxu0 0
      %1605 = vmatprep.subr.bf16.mxu0 0
      %1606 = vmatpush1.bf16.msra.mxu0 0
      %1607 = vmatprep.subr.bf16.mxu0 0
      %1608 = vmatpush1.bf16.msra.mxu0 0
      %1609 = vmatprep.subr.bf16.mxu0 0
      %1610 = vmatpush1.bf16.msra.mxu0 0
      %1611 = vmatprep.subr.bf16.mxu0 0
      %1612 = vmatpush1.bf16.msra.mxu0 0
      %1613 = vmatprep.mubr.bf16.mxu0 0
      %1614 = vmatmul.mubr.bf16.gmra.mrb[0].mxu0 %v1531
      %v1615 = vpop.f32.mrb[0].mxu0
      %v1616 = vadd.f32 0.0, %v1615
      %v1617 = vpop.f32.mrb[0].mxu0
      %v1618 = vpop.f32.mrb[0].mxu0
      %v1619 = vadd.f32 0.0, %v1618
      %v1620 = vpop.f32.mrb[0].mxu0
      %1621 = vmatprep.mubr.bf16.mxu0 0
      %1622 = vmatmul.mubr.bf16.gmra.mrb[0].mxu0 %v1534
      %v1623 = vpop.f32.mrb[0].mxu0
      %v1624 = vadd.f32 0.0, %v1623
      %v1625 = vpop.f32.mrb[0].mxu0
      %v1626 = vpop.f32.mrb[0].mxu0
      %v1627 = vadd.f32 0.0, %v1626
      %v1628 = vpop.f32.mrb[0].mxu0
      %1629 = vmatprep.mubr.bf16.mxu0 0
      %1630 = vmatmul.mubr.bf16.gmra.mrb[0].mxu0 %v1537
      %v1631 = vpop.f32.mrb[0].mxu0
      %v1632 = vadd.f32 0.0, %v1631
      %v1633 = vpop.f32.mrb[0].mxu0
      %v1634 = vpop.f32.mrb[0].mxu0
      %v1635 = vadd.f32 0.0, %v1634
      %v1636 = vpop.f32.mrb[0].mxu0
      %1637 = vmatprep.mubr.bf16.mxu0 0
      %1638 = vmatmul.mubr.bf16.gmra.mrb[0].mxu0 %v1540
      %v1639 = vpop.f32.mrb[0].mxu0
      %v1640 = vadd.f32 0.0, %v1639
      %v1641 = vpop.f32.mrb[0].mxu0
      %v1642 = vpop.f32.mrb[0].mxu0
      %v1643 = vadd.f32 0.0, %v1642
      %v1644 = vpop.f32.mrb[0].mxu0
      %1645 = vmatprep.mubr.bf16.mxu0 0
      %1646 = vmatmul.mubr.bf16.gmra.mrb[0].mxu0 %v1543
      %v1647 = vpop.f32.mrb[0].mxu0
      %v1648 = vadd.f32 0.0, %v1647
      %v1649 = vpop.f32.mrb[0].mxu0
      %v1650 = vpop.f32.mrb[0].mxu0
      %v1651 = vadd.f32 0.0, %v1650
      %v1652 = vpop.f32.mrb[0].mxu0
      %1653 = vmatprep.mubr.bf16.mxu0 0
      %1654 = vmatmul.mubr.bf16.gmra.mrb[0].mxu0 %v1546
      %v1655 = vpop.f32.mrb[0].mxu0
      %v1656 = vadd.f32 0.0, %v1655
      %v1657 = vpop.f32.mrb[0].mxu0
      %v1658 = vpop.f32.mrb[0].mxu0
      %v1659 = vadd.f32 0.0, %v1658
      %v1660 = vpop.f32.mrb[0].mxu0
      %1661 = vmatprep.mubr.bf16.mxu0 0
      %1662 = vmatmul.mubr.bf16.gmra.mrb[0].mxu0 %v1549
      %v1663 = vpop.f32.mrb[0].mxu0
      %v1664 = vadd.f32 0.0, %v1663
      %v1665 = vpop.f32.mrb[0].mxu0
      %v1666 = vpop.f32.mrb[0].mxu0
      %v1667 = vadd.f32 0.0, %v1666
      %v1668 = vpop.f32.mrb[0].mxu0
      %1669 = vmatprep.mubr.bf16.mxu0 0
      %1670 = vmatmul.mubr.bf16.gmra.mrb[0].mxu0 %v1552
      %v1671 = vpop.f32.mrb[0].mxu0
      %v1672 = vadd.f32 0.0, %v1671
      %v1673 = vpop.f32.mrb[0].mxu0
      %v1674 = vpop.f32.mrb[0].mxu0
      %v1675 = vadd.f32 0.0, %v1674
      %v1676 = vpop.f32.mrb[0].mxu0
      %1677 = vmatprep.mubr.bf16.mxu0 0
      %1678 = vmatmul.mubr.bf16.gmra.mrb[0].mxu0 %v1555
      %v1679 = vpop.f32.mrb[0].mxu0
      %v1680 = vadd.f32 0.0, %v1679
      %v1681 = vpop.f32.mrb[0].mxu0
      %v1682 = vpop.f32.mrb[0].mxu0
      %v1683 = vadd.f32 0.0, %v1682
      %v1684 = vpop.f32.mrb[0].mxu0
      %1685 = vmatprep.mubr.bf16.mxu0 0
      %1686 = vmatmul.mubr.bf16.gmra.mrb[0].mxu0 %v1558
      %v1687 = vpop.f32.mrb[0].mxu0
      %v1688 = vadd.f32 0.0, %v1687
      %v1689 = vpop.f32.mrb[0].mxu0
      %v1690 = vpop.f32.mrb[0].mxu0
      %v1691 = vadd.f32 0.0, %v1690
      %v1692 = vpop.f32.mrb[0].mxu0
      %1693 = vmatprep.mubr.bf16.mxu0 0
      %1694 = vmatmul.mubr.bf16.gmra.mrb[0].mxu0 %v1561
      %v1695 = vpop.f32.mrb[0].mxu0
      %v1696 = vadd.f32 0.0, %v1695
      %v1697 = vpop.f32.mrb[0].mxu0
      %v1698 = vpop.f32.mrb[0].mxu0
      %v1699 = vadd.f32 0.0, %v1698
      %v1700 = vpop.f32.mrb[0].mxu0
      %1701 = vmatprep.mubr.bf16.mxu0 0
      %1702 = vmatmul.mubr.bf16.gmra.mrb[0].mxu0 %v1564
      %v1703 = vpop.f32.mrb[0].mxu0
      %v1704 = vadd.f32 0.0, %v1703
      %v1705 = vpop.f32.mrb[0].mxu0
      %v1706 = vpop.f32.mrb[0].mxu0
      %v1707 = vadd.f32 0.0, %v1706
      %v1708 = vpop.f32.mrb[0].mxu0
      %1709 = vmatprep.mubr.bf16.mxu0 0
      %1710 = vmatmul.mubr.bf16.gmra.mrb[0].mxu0 %v1567
      %v1711 = vpop.f32.mrb[0].mxu0
      %v1712 = vadd.f32 0.0, %v1711
      %v1713 = vpop.f32.mrb[0].mxu0
      %v1714 = vpop.f32.mrb[0].mxu0
      %v1715 = vadd.f32 0.0, %v1714
      %v1716 = vpop.f32.mrb[0].mxu0
      %1717 = vmatprep.mubr.bf16.mxu0 0
      %1718 = vmatmul.mubr.bf16.gmra.mrb[0].mxu0 %v1570
      %v1719 = vpop.f32.mrb[0].mxu0
      %v1720 = vadd.f32 0.0, %v1719
      %v1721 = vpop.f32.mrb[0].mxu0
      %v1722 = vpop.f32.mrb[0].mxu0
      %v1723 = vadd.f32 0.0, %v1722
      %v1724 = vpop.f32.mrb[0].mxu0
      %1725 = vmatprep.mubr.bf16.mxu0 0
      %1726 = vmatmul.mubr.bf16.gmra.mrb[0].mxu0 %v1573
      %v1727 = vpop.f32.mrb[0].mxu0
      %v1728 = vadd.f32 0.0, %v1727
      %v1729 = vpop.f32.mrb[0].mxu0
      %v1730 = vpop.f32.mrb[0].mxu0
      %v1731 = vadd.f32 0.0, %v1730
      %v1732 = vpop.f32.mrb[0].mxu0
      %1733 = vmatprep.mubr.bf16.mxu0 0
      %1734 = vmatmul.mubr.bf16.gmra.mrb[0].mxu0 %v1576
      %v1735 = vpop.f32.mrb[0].mxu0
      %v1736 = vadd.f32 0.0, %v1735
      %v1737 = vpop.f32.mrb[0].mxu0
      %v1738 = vpop.f32.mrb[0].mxu0
      %v1739 = vadd.f32 0.0, %v1738
      %v1740 = vpop.f32.mrb[0].mxu0
      %1741 = vdwg.mxu0
      %v1742 = vadd.f32 %v1223, %v1616
      %v1743 = vadd.f32 %v1226, %v1619
      %v1744 = vadd.f32 %v1231, %v1624
      %v1745 = vadd.f32 %v1234, %v1627
      %v1746 = vadd.f32 %v1239, %v1632
      %v1747 = vadd.f32 %v1242, %v1635
      %v1748 = vadd.f32 %v1247, %v1640
      %v1749 = vadd.f32 %v1250, %v1643
      %v1750 = vadd.f32 %v1255, %v1648
      %v1751 = vadd.f32 %v1258, %v1651
      %v1752 = vadd.f32 %v1263, %v1656
      %v1753 = vadd.f32 %v1266, %v1659
      %v1754 = vadd.f32 %v1271, %v1664
      %v1755 = vadd.f32 %v1274, %v1667
      %v1756 = vadd.f32 %v1279, %v1672
      %v1757 = vadd.f32 %v1282, %v1675
      %v1758 = vadd.f32 %v1287, %v1680
      %v1759 = vadd.f32 %v1290, %v1683
      %v1760 = vadd.f32 %v1295, %v1688
      %v1761 = vadd.f32 %v1298, %v1691
      %v1762 = vadd.f32 %v1303, %v1696
      %v1763 = vadd.f32 %v1306, %v1699
      %v1764 = vadd.f32 %v1311, %v1704
      %v1765 = vadd.f32 %v1314, %v1707
      %v1766 = vadd.f32 %v1319, %v1712
      %v1767 = vadd.f32 %v1322, %v1715
      %v1768 = vadd.f32 %v1327, %v1720
      %v1769 = vadd.f32 %v1330, %v1723
      %v1770 = vadd.f32 %v1335, %v1728
      %v1771 = vadd.f32 %v1338, %v1731
      %v1772 = vadd.f32 %v1343, %v1736
      %v1773 = vadd.f32 %v1346, %v1739
      %s1774 = scalar_lea.vmem %s314, 12
      %v1775 = vld [vmem:[%s1774] sm:$0xf]
      %v1778 = vunpack.c.l.b16 %v399
      %v1779 = vunpack.c.l.b16 %v400
      %v1780 = vpack.c.b16 %v1779, %v1778
      %v1782 = vsel %vm843, %v1780, 0
      %v1785 = vsel %vm892, %v1775, 0
      %1787 = vmatprep.subr.bf16.mxu0 0
      %1788 = vmatpush1.bf16.msra.mxu0 %v1785
      %1789 = vmatprep.subr.bf16.mxu0 0
      %1790 = vmatpush1.bf16.msra.mxu0 0
      %1791 = vmatprep.subr.bf16.mxu0 0
      %1792 = vmatpush1.bf16.msra.mxu0 0
      %1793 = vmatprep.subr.bf16.mxu0 0
      %1794 = vmatpush1.bf16.msra.mxu0 0
      %1795 = vmatprep.subr.bf16.mxu0 0
      %1796 = vmatpush1.bf16.msra.mxu0 0
      %1797 = vmatprep.subr.bf16.mxu0 0
      %1798 = vmatpush1.bf16.msra.mxu0 0
      %1799 = vmatprep.subr.bf16.mxu0 0
      %1800 = vmatpush1.bf16.msra.mxu0 0
      %1801 = vmatprep.subr.bf16.mxu0 0
      %1802 = vmatpush1.bf16.msra.mxu0 0
      %1803 = vmatprep.subr.bf16.mxu0 0
      %1804 = vmatpush1.bf16.msra.mxu0 0
      %1805 = vmatprep.subr.bf16.mxu0 0
      %1806 = vmatpush1.bf16.msra.mxu0 0
      %1807 = vmatprep.subr.bf16.mxu0 0
      %1808 = vmatpush1.bf16.msra.mxu0 0
      %1809 = vmatprep.subr.bf16.mxu0 0
      %1810 = vmatpush1.bf16.msra.mxu0 0
      %1811 = vmatprep.subr.bf16.mxu0 0
      %1812 = vmatpush1.bf16.msra.mxu0 0
      %1813 = vmatprep.subr.bf16.mxu0 0
      %1814 = vmatpush1.bf16.msra.mxu0 0
      %1815 = vmatprep.subr.bf16.mxu0 0
      %1816 = vmatpush1.bf16.msra.mxu0 0
      %1817 = vmatprep.subr.bf16.mxu0 0
      %1818 = vmatpush1.bf16.msra.mxu0 0
      %1819 = vmatprep.mubr.bf16.mxu0 0
      %1820 = vmatmul.mubr.bf16.gmra.mrb[0].mxu0 %v1141
      %v1821 = vpop.f32.mrb[0].mxu0
      %v1822 = vadd.f32 0.0, %v1821
      %v1823 = vpop.f32.mrb[0].mxu0
      %v1824 = vpop.f32.mrb[0].mxu0
      %v1825 = vadd.f32 0.0, %v1824
      %v1826 = vpop.f32.mrb[0].mxu0
      %1827 = vmatprep.mubr.bf16.mxu0 0
      %1828 = vmatmul.mubr.bf16.gmra.mrb[0].mxu0 %v1144
      %v1829 = vpop.f32.mrb[0].mxu0
      %v1830 = vadd.f32 0.0, %v1829
      %v1831 = vpop.f32.mrb[0].mxu0
      %v1832 = vpop.f32.mrb[0].mxu0
      %v1833 = vadd.f32 0.0, %v1832
      %v1834 = vpop.f32.mrb[0].mxu0
      %1835 = vmatprep.mubr.bf16.mxu0 0
      %1836 = vmatmul.mubr.bf16.gmra.mrb[0].mxu0 %v1147
      %v1837 = vpop.f32.mrb[0].mxu0
      %v1838 = vadd.f32 0.0, %v1837
      %v1839 = vpop.f32.mrb[0].mxu0
      %v1840 = vpop.f32.mrb[0].mxu0
      %v1841 = vadd.f32 0.0, %v1840
      %v1842 = vpop.f32.mrb[0].mxu0
      %1843 = vmatprep.mubr.bf16.mxu0 0
      %1844 = vmatmul.mubr.bf16.gmra.mrb[0].mxu0 %v1150
      %v1845 = vpop.f32.mrb[0].mxu0
      %v1846 = vadd.f32 0.0, %v1845
      %v1847 = vpop.f32.mrb[0].mxu0
      %v1848 = vpop.f32.mrb[0].mxu0
      %v1849 = vadd.f32 0.0, %v1848
      %v1850 = vpop.f32.mrb[0].mxu0
      %1851 = vmatprep.mubr.bf16.mxu0 0
      %1852 = vmatmul.mubr.bf16.gmra.mrb[0].mxu0 %v1153
      %v1853 = vpop.f32.mrb[0].mxu0
      %v1854 = vadd.f32 0.0, %v1853
      %v1855 = vpop.f32.mrb[0].mxu0
      %v1856 = vpop.f32.mrb[0].mxu0
      %v1857 = vadd.f32 0.0, %v1856
      %v1858 = vpop.f32.mrb[0].mxu0
      %1859 = vmatprep.mubr.bf16.mxu0 0
      %1860 = vmatmul.mubr.bf16.gmra.mrb[0].mxu0 %v1156
      %v1861 = vpop.f32.mrb[0].mxu0
      %v1862 = vadd.f32 0.0, %v1861
      %v1863 = vpop.f32.mrb[0].mxu0
      %v1864 = vpop.f32.mrb[0].mxu0
      %v1865 = vadd.f32 0.0, %v1864
      %v1866 = vpop.f32.mrb[0].mxu0
      %1867 = vmatprep.mubr.bf16.mxu0 0
      %1868 = vmatmul.mubr.bf16.gmra.mrb[0].mxu0 %v1159
      %v1869 = vpop.f32.mrb[0].mxu0
      %v1870 = vadd.f32 0.0, %v1869
      %v1871 = vpop.f32.mrb[0].mxu0
      %v1872 = vpop.f32.mrb[0].mxu0
      %v1873 = vadd.f32 0.0, %v1872
      %v1874 = vpop.f32.mrb[0].mxu0
      %1875 = vmatprep.mubr.bf16.mxu0 0
      %1876 = vmatmul.mubr.bf16.gmra.mrb[0].mxu0 %v1162
      %v1877 = vpop.f32.mrb[0].mxu0
      %v1878 = vadd.f32 0.0, %v1877
      %v1879 = vpop.f32.mrb[0].mxu0
      %v1880 = vpop.f32.mrb[0].mxu0
      %v1881 = vadd.f32 0.0, %v1880
      %v1882 = vpop.f32.mrb[0].mxu0
      %1883 = vmatprep.mubr.bf16.mxu0 0
      %1884 = vmatmul.mubr.bf16.gmra.mrb[0].mxu0 %v1165
      %v1885 = vpop.f32.mrb[0].mxu0
      %v1886 = vadd.f32 0.0, %v1885
      %v1887 = vpop.f32.mrb[0].mxu0
      %v1888 = vpop.f32.mrb[0].mxu0
      %v1889 = vadd.f32 0.0, %v1888
      %v1890 = vpop.f32.mrb[0].mxu0
      %1891 = vmatprep.mubr.bf16.mxu0 0
      %1892 = vmatmul.mubr.bf16.gmra.mrb[0].mxu0 %v1168
      %v1893 = vpop.f32.mrb[0].mxu0
      %v1894 = vadd.f32 0.0, %v1893
      %v1895 = vpop.f32.mrb[0].mxu0
      %v1896 = vpop.f32.mrb[0].mxu0
      %v1897 = vadd.f32 0.0, %v1896
      %v1898 = vpop.f32.mrb[0].mxu0
      %1899 = vmatprep.mubr.bf16.mxu0 0
      %1900 = vmatmul.mubr.bf16.gmra.mrb[0].mxu0 %v1171
      %v1901 = vpop.f32.mrb[0].mxu0
      %v1902 = vadd.f32 0.0, %v1901
      %v1903 = vpop.f32.mrb[0].mxu0
      %v1904 = vpop.f32.mrb[0].mxu0
      %v1905 = vadd.f32 0.0, %v1904
      %v1906 = vpop.f32.mrb[0].mxu0
      %1907 = vmatprep.mubr.bf16.mxu0 0
      %1908 = vmatmul.mubr.bf16.gmra.mrb[0].mxu0 %v1174
      %v1909 = vpop.f32.mrb[0].mxu0
      %v1910 = vadd.f32 0.0, %v1909
      %v1911 = vpop.f32.mrb[0].mxu0
      %v1912 = vpop.f32.mrb[0].mxu0
      %v1913 = vadd.f32 0.0, %v1912
      %v1914 = vpop.f32.mrb[0].mxu0
      %1915 = vmatprep.mubr.bf16.mxu0 0
      %1916 = vmatmul.mubr.bf16.gmra.mrb[0].mxu0 %v1177
      %v1917 = vpop.f32.mrb[0].mxu0
      %v1918 = vadd.f32 0.0, %v1917
      %v1919 = vpop.f32.mrb[0].mxu0
      %v1920 = vpop.f32.mrb[0].mxu0
      %v1921 = vadd.f32 0.0, %v1920
      %v1922 = vpop.f32.mrb[0].mxu0
      %1923 = vmatprep.mubr.bf16.mxu0 0
      %1924 = vmatmul.mubr.bf16.gmra.mrb[0].mxu0 %v1180
      %v1925 = vpop.f32.mrb[0].mxu0
      %v1926 = vadd.f32 0.0, %v1925
      %v1927 = vpop.f32.mrb[0].mxu0
      %v1928 = vpop.f32.mrb[0].mxu0
      %v1929 = vadd.f32 0.0, %v1928
      %v1930 = vpop.f32.mrb[0].mxu0
      %1931 = vmatprep.mubr.bf16.mxu0 0
      %1932 = vmatmul.mubr.bf16.gmra.mrb[0].mxu0 %v1183
      %v1933 = vpop.f32.mrb[0].mxu0
      %v1934 = vadd.f32 0.0, %v1933
      %v1935 = vpop.f32.mrb[0].mxu0
      %v1936 = vpop.f32.mrb[0].mxu0
      %v1937 = vadd.f32 0.0, %v1936
      %v1938 = vpop.f32.mrb[0].mxu0
      %1939 = vmatprep.mubr.bf16.mxu0 0
      %1940 = vmatmul.mubr.bf16.gmra.mrb[0].mxu0 %v1782
      %v1941 = vpop.f32.mrb[0].mxu0
      %v1942 = vadd.f32 0.0, %v1941
      %v1943 = vpop.f32.mrb[0].mxu0
      %v1944 = vpop.f32.mrb[0].mxu0
      %v1945 = vadd.f32 0.0, %v1944
      %v1946 = vpop.f32.mrb[0].mxu0
      %1947 = vdwg.mxu0
      %v1948 = vadd.f32 %v1742, %v1822
      %v1949 = vadd.f32 %v1743, %v1825
      %v1950 = vadd.f32 %v1744, %v1830
      %v1951 = vadd.f32 %v1745, %v1833
      %v1952 = vadd.f32 %v1746, %v1838
      %v1953 = vadd.f32 %v1747, %v1841
      %v1954 = vadd.f32 %v1748, %v1846
      %v1955 = vadd.f32 %v1749, %v1849
      %v1956 = vadd.f32 %v1750, %v1854
      %v1957 = vadd.f32 %v1751, %v1857
      %v1958 = vadd.f32 %v1752, %v1862
      %v1959 = vadd.f32 %v1753, %v1865
      %v1960 = vadd.f32 %v1754, %v1870
      %v1961 = vadd.f32 %v1755, %v1873
      %v1962 = vadd.f32 %v1756, %v1878
      %v1963 = vadd.f32 %v1757, %v1881
      %v1964 = vadd.f32 %v1758, %v1886
      %v1965 = vadd.f32 %v1759, %v1889
      %v1966 = vadd.f32 %v1760, %v1894
      %v1967 = vadd.f32 %v1761, %v1897
      %v1968 = vadd.f32 %v1762, %v1902
      %v1969 = vadd.f32 %v1763, %v1905
      %v1970 = vadd.f32 %v1764, %v1910
      %v1971 = vadd.f32 %v1765, %v1913
      %v1972 = vadd.f32 %v1766, %v1918
      %v1973 = vadd.f32 %v1767, %v1921
      %v1974 = vadd.f32 %v1768, %v1926
      %v1975 = vadd.f32 %v1769, %v1929
      %v1976 = vadd.f32 %v1770, %v1934
      %v1977 = vadd.f32 %v1771, %v1937
      %v1978 = vadd.f32 %v1772, %v1942
      %v1979 = vadd.f32 %v1773, %v1945
      %v1981 = vshrl.u32 %v399, 16
      %v1983 = vrot.slane %v1981, 4
      %v1984 = vshll.u32 %v399, 16
      %v1986 = vrot.slane %v1984, 5
      %v1987 = vor.u32 %v1983, %v1986
      %v1988 = vrot.slane %v1987, 4
      %v1990 = vshll.u32 %v400, 16
      %v1992 = vrot.slane %v1990, 5
      %v1993 = vsel %vm408, %v1988, %v1992
      %v1994 = vshrl.u32 %v400, 16
      %v1996 = vrot.slane %v1994, 4
      %v1997 = vor.u32 %v1996, %v1992
      %v1998 = vrot.slane %v1997, 4
      %v2000 = vshll.u32 %v401, 16
      %v2002 = vrot.slane %v2000, 5
      %v2003 = vsel %vm408, %v1998, %v2002
      %s2004 = scalar_lea.vmem %s314, 16
      %v2005 = vld [vmem:[%s2004] sm:$0xf]
      %v2006 = vunpack.c.l.b16 %v1993
      %v2007 = vunpack.c.l.b16 %v2003
      %v2008 = vpack.c.b16 %v2007, %v2006
      %v2010 = vsel %vm843, %v2008, 0
      %v2013 = vsel %vm892, %v2005, 0
      %2015 = vmatprep.subr.bf16.mxu0 0
      %2016 = vmatpush1.bf16.msra.mxu0 %v2013
      %2017 = vmatprep.subr.bf16.mxu0 0
      %2018 = vmatpush1.bf16.msra.mxu0 0
      %2019 = vmatprep.subr.bf16.mxu0 0
      %2020 = vmatpush1.bf16.msra.mxu0 0
      %2021 = vmatprep.subr.bf16.mxu0 0
      %2022 = vmatpush1.bf16.msra.mxu0 0
      %2023 = vmatprep.subr.bf16.mxu0 0
      %2024 = vmatpush1.bf16.msra.mxu0 0
      %2025 = vmatprep.subr.bf16.mxu0 0
      %2026 = vmatpush1.bf16.msra.mxu0 0
      %2027 = vmatprep.subr.bf16.mxu0 0
      %2028 = vmatpush1.bf16.msra.mxu0 0
      %2029 = vmatprep.subr.bf16.mxu0 0
      %2030 = vmatpush1.bf16.msra.mxu0 0
      %2031 = vmatprep.subr.bf16.mxu0 0
      %2032 = vmatpush1.bf16.msra.mxu0 0
      %2033 = vmatprep.subr.bf16.mxu0 0
      %2034 = vmatpush1.bf16.msra.mxu0 0
      %2035 = vmatprep.subr.bf16.mxu0 0
      %2036 = vmatpush1.bf16.msra.mxu0 0
      %2037 = vmatprep.subr.bf16.mxu0 0
      %2038 = vmatpush1.bf16.msra.mxu0 0
      %2039 = vmatprep.subr.bf16.mxu0 0
      %2040 = vmatpush1.bf16.msra.mxu0 0
      %2041 = vmatprep.subr.bf16.mxu0 0
      %2042 = vmatpush1.bf16.msra.mxu0 0
      %2043 = vmatprep.subr.bf16.mxu0 0
      %2044 = vmatpush1.bf16.msra.mxu0 0
      %2045 = vmatprep.subr.bf16.mxu0 0
      %2046 = vmatpush1.bf16.msra.mxu0 0
      %2047 = vmatprep.mubr.bf16.mxu0 0
      %2048 = vmatmul.mubr.bf16.gmra.mrb[0].mxu0 %v848
      %v2049 = vpop.f32.mrb[0].mxu0
      %v2050 = vadd.f32 0.0, %v2049
      %v2051 = vpop.f32.mrb[0].mxu0
      %v2052 = vpop.f32.mrb[0].mxu0
      %v2053 = vadd.f32 0.0, %v2052
      %v2054 = vpop.f32.mrb[0].mxu0
      %2055 = vmatprep.mubr.bf16.mxu0 0
      %2056 = vmatmul.mubr.bf16.gmra.mrb[0].mxu0 %v851
      %v2057 = vpop.f32.mrb[0].mxu0
      %v2058 = vadd.f32 0.0, %v2057
      %v2059 = vpop.f32.mrb[0].mxu0
      %v2060 = vpop.f32.mrb[0].mxu0
      %v2061 = vadd.f32 0.0, %v2060
      %v2062 = vpop.f32.mrb[0].mxu0
      %2063 = vmatprep.mubr.bf16.mxu0 0
      %2064 = vmatmul.mubr.bf16.gmra.mrb[0].mxu0 %v854
      %v2065 = vpop.f32.mrb[0].mxu0
      %v2066 = vadd.f32 0.0, %v2065
      %v2067 = vpop.f32.mrb[0].mxu0
      %v2068 = vpop.f32.mrb[0].mxu0
      %v2069 = vadd.f32 0.0, %v2068
      %v2070 = vpop.f32.mrb[0].mxu0
      %2071 = vmatprep.mubr.bf16.mxu0 0
      %2072 = vmatmul.mubr.bf16.gmra.mrb[0].mxu0 %v857
      %v2073 = vpop.f32.mrb[0].mxu0
      %v2074 = vadd.f32 0.0, %v2073
      %v2075 = vpop.f32.mrb[0].mxu0
      %v2076 = vpop.f32.mrb[0].mxu0
      %v2077 = vadd.f32 0.0, %v2076
      %v2078 = vpop.f32.mrb[0].mxu0
      %2079 = vmatprep.mubr.bf16.mxu0 0
      %2080 = vmatmul.mubr.bf16.gmra.mrb[0].mxu0 %v860
      %v2081 = vpop.f32.mrb[0].mxu0
      %v2082 = vadd.f32 0.0, %v2081
      %v2083 = vpop.f32.mrb[0].mxu0
      %v2084 = vpop.f32.mrb[0].mxu0
      %v2085 = vadd.f32 0.0, %v2084
      %v2086 = vpop.f32.mrb[0].mxu0
      %2087 = vmatprep.mubr.bf16.mxu0 0
      %2088 = vmatmul.mubr.bf16.gmra.mrb[0].mxu0 %v863
      %v2089 = vpop.f32.mrb[0].mxu0
      %v2090 = vadd.f32 0.0, %v2089
      %v2091 = vpop.f32.mrb[0].mxu0
      %v2092 = vpop.f32.mrb[0].mxu0
      %v2093 = vadd.f32 0.0, %v2092
      %v2094 = vpop.f32.mrb[0].mxu0
      %2095 = vmatprep.mubr.bf16.mxu0 0
      %2096 = vmatmul.mubr.bf16.gmra.mrb[0].mxu0 %v866
      %v2097 = vpop.f32.mrb[0].mxu0
      %v2098 = vadd.f32 0.0, %v2097
      %v2099 = vpop.f32.mrb[0].mxu0
      %v2100 = vpop.f32.mrb[0].mxu0
      %v2101 = vadd.f32 0.0, %v2100
      %v2102 = vpop.f32.mrb[0].mxu0
      %2103 = vmatprep.mubr.bf16.mxu0 0
      %2104 = vmatmul.mubr.bf16.gmra.mrb[0].mxu0 %v869
      %v2105 = vpop.f32.mrb[0].mxu0
      %v2106 = vadd.f32 0.0, %v2105
      %v2107 = vpop.f32.mrb[0].mxu0
      %v2108 = vpop.f32.mrb[0].mxu0
      %v2109 = vadd.f32 0.0, %v2108
      %v2110 = vpop.f32.mrb[0].mxu0
      %2111 = vmatprep.mubr.bf16.mxu0 0
      %2112 = vmatmul.mubr.bf16.gmra.mrb[0].mxu0 %v872
      %v2113 = vpop.f32.mrb[0].mxu0
      %v2114 = vadd.f32 0.0, %v2113
      %v2115 = vpop.f32.mrb[0].mxu0
      %v2116 = vpop.f32.mrb[0].mxu0
      %v2117 = vadd.f32 0.0, %v2116
      %v2118 = vpop.f32.mrb[0].mxu0
      %2119 = vmatprep.mubr.bf16.mxu0 0
      %2120 = vmatmul.mubr.bf16.gmra.mrb[0].mxu0 %v875
      %v2121 = vpop.f32.mrb[0].mxu0
      %v2122 = vadd.f32 0.0, %v2121
      %v2123 = vpop.f32.mrb[0].mxu0
      %v2124 = vpop.f32.mrb[0].mxu0
      %v2125 = vadd.f32 0.0, %v2124
      %v2126 = vpop.f32.mrb[0].mxu0
      %2127 = vmatprep.mubr.bf16.mxu0 0
      %2128 = vmatmul.mubr.bf16.gmra.mrb[0].mxu0 %v878
      %v2129 = vpop.f32.mrb[0].mxu0
      %v2130 = vadd.f32 0.0, %v2129
      %v2131 = vpop.f32.mrb[0].mxu0
      %v2132 = vpop.f32.mrb[0].mxu0
      %v2133 = vadd.f32 0.0, %v2132
      %v2134 = vpop.f32.mrb[0].mxu0
      %2135 = vmatprep.mubr.bf16.mxu0 0
      %2136 = vmatmul.mubr.bf16.gmra.mrb[0].mxu0 %v881
      %v2137 = vpop.f32.mrb[0].mxu0
      %v2138 = vadd.f32 0.0, %v2137
      %v2139 = vpop.f32.mrb[0].mxu0
      %v2140 = vpop.f32.mrb[0].mxu0
      %v2141 = vadd.f32 0.0, %v2140
      %v2142 = vpop.f32.mrb[0].mxu0
      %2143 = vmatprep.mubr.bf16.mxu0 0
      %2144 = vmatmul.mubr.bf16.gmra.mrb[0].mxu0 %v884
      %v2145 = vpop.f32.mrb[0].mxu0
      %v2146 = vadd.f32 0.0, %v2145
      %v2147 = vpop.f32.mrb[0].mxu0
      %v2148 = vpop.f32.mrb[0].mxu0
      %v2149 = vadd.f32 0.0, %v2148
      %v2150 = vpop.f32.mrb[0].mxu0
      %2151 = vmatprep.mubr.bf16.mxu0 0
      %2152 = vmatmul.mubr.bf16.gmra.mrb[0].mxu0 %v887
      %v2153 = vpop.f32.mrb[0].mxu0
      %v2154 = vadd.f32 0.0, %v2153
      %v2155 = vpop.f32.mrb[0].mxu0
      %v2156 = vpop.f32.mrb[0].mxu0
      %v2157 = vadd.f32 0.0, %v2156
      %v2158 = vpop.f32.mrb[0].mxu0
      %2159 = vmatprep.mubr.bf16.mxu0 0
      %2160 = vmatmul.mubr.bf16.gmra.mrb[0].mxu0 %v890
      %v2161 = vpop.f32.mrb[0].mxu0
      %v2162 = vadd.f32 0.0, %v2161
      %v2163 = vpop.f32.mrb[0].mxu0
      %v2164 = vpop.f32.mrb[0].mxu0
      %v2165 = vadd.f32 0.0, %v2164
      %v2166 = vpop.f32.mrb[0].mxu0
      %2167 = vmatprep.mubr.bf16.mxu0 0
      %2168 = vmatmul.mubr.bf16.gmra.mrb[0].mxu0 %v2010
      %v2169 = vpop.f32.mrb[0].mxu0
      %v2170 = vadd.f32 0.0, %v2169
      %v2171 = vpop.f32.mrb[0].mxu0
      %v2172 = vpop.f32.mrb[0].mxu0
      %v2173 = vadd.f32 0.0, %v2172
      %v2174 = vpop.f32.mrb[0].mxu0
      %2175 = vdwg.mxu0
      %v2176 = vadd.f32 %v1948, %v2050
      %v2177 = vadd.f32 %v1949, %v2053
      %v2178 = vadd.f32 %v1950, %v2058
      %v2179 = vadd.f32 %v1951, %v2061
      %v2180 = vadd.f32 %v1952, %v2066
      %v2181 = vadd.f32 %v1953, %v2069
      %v2182 = vadd.f32 %v1954, %v2074
      %v2183 = vadd.f32 %v1955, %v2077
      %v2184 = vadd.f32 %v1956, %v2082
      %v2185 = vadd.f32 %v1957, %v2085
      %v2186 = vadd.f32 %v1958, %v2090
      %v2187 = vadd.f32 %v1959, %v2093
      %v2188 = vadd.f32 %v1960, %v2098
      %v2189 = vadd.f32 %v1961, %v2101
      %v2190 = vadd.f32 %v1962, %v2106
      %v2191 = vadd.f32 %v1963, %v2109
      %v2192 = vadd.f32 %v1964, %v2114
      %v2193 = vadd.f32 %v1965, %v2117
      %v2194 = vadd.f32 %v1966, %v2122
      %v2195 = vadd.f32 %v1967, %v2125
      %v2196 = vadd.f32 %v1968, %v2130
      %v2197 = vadd.f32 %v1969, %v2133
      %v2198 = vadd.f32 %v1970, %v2138
      %v2199 = vadd.f32 %v1971, %v2141
      %v2200 = vadd.f32 %v1972, %v2146
      %v2201 = vadd.f32 %v1973, %v2149
      %v2202 = vadd.f32 %v1974, %v2154
      %v2203 = vadd.f32 %v1975, %v2157
      %v2204 = vadd.f32 %v1976, %v2162
      %v2205 = vadd.f32 %v1977, %v2165
      %v2206 = vadd.f32 %v1978, %v2170
      %v2207 = vadd.f32 %v1979, %v2173
      %v2209 = vrot.slane %v399, 5
      %v2210 = vrot.slane %v2209, 4
      %v2211 = vrot.slane %v400, 5
      %v2212 = vsel %vm1367, %v2210, %v2211
      %v2213 = vrot.slane %v2211, 4
      %v2214 = vrot.slane %v401, 5
      %v2215 = vsel %vm1367, %v2213, %v2214
      %s2216 = scalar_lea.vmem %s314, 20
      %v2217 = vld [vmem:[%s2216] sm:$0xf]
      %v2218 = vunpack.c.l.b16 %v2212
      %v2219 = vunpack.c.l.b16 %v2215
      %v2220 = vpack.c.b16 %v2219, %v2218
      %v2222 = vsel %vm843, %v2220, 0
      %v2225 = vsel %vm892, %v2217, 0
      %2227 = vmatprep.subr.bf16.mxu0 0
      %2228 = vmatpush1.bf16.msra.mxu0 %v2225
      %2229 = vmatprep.subr.bf16.mxu0 0
      %2230 = vmatpush1.bf16.msra.mxu0 0
      %2231 = vmatprep.subr.bf16.mxu0 0
      %2232 = vmatpush1.bf16.msra.mxu0 0
      %2233 = vmatprep.subr.bf16.mxu0 0
      %2234 = vmatpush1.bf16.msra.mxu0 0
      %2235 = vmatprep.subr.bf16.mxu0 0
      %2236 = vmatpush1.bf16.msra.mxu0 0
      %2237 = vmatprep.subr.bf16.mxu0 0
      %2238 = vmatpush1.bf16.msra.mxu0 0
      %2239 = vmatprep.subr.bf16.mxu0 0
      %2240 = vmatpush1.bf16.msra.mxu0 0
      %2241 = vmatprep.subr.bf16.mxu0 0
      %2242 = vmatpush1.bf16.msra.mxu0 0
      %2243 = vmatprep.subr.bf16.mxu0 0
      %2244 = vmatpush1.bf16.msra.mxu0 0
      %2245 = vmatprep.subr.bf16.mxu0 0
      %2246 = vmatpush1.bf16.msra.mxu0 0
      %2247 = vmatprep.subr.bf16.mxu0 0
      %2248 = vmatpush1.bf16.msra.mxu0 0
      %2249 = vmatprep.subr.bf16.mxu0 0
      %2250 = vmatpush1.bf16.msra.mxu0 0
      %2251 = vmatprep.subr.bf16.mxu0 0
      %2252 = vmatpush1.bf16.msra.mxu0 0
      %2253 = vmatprep.subr.bf16.mxu0 0
      %2254 = vmatpush1.bf16.msra.mxu0 0
      %2255 = vmatprep.subr.bf16.mxu0 0
      %2256 = vmatpush1.bf16.msra.mxu0 0
      %2257 = vmatprep.subr.bf16.mxu0 0
      %2258 = vmatpush1.bf16.msra.mxu0 0
      %2259 = vmatprep.mubr.bf16.mxu0 0
      %2260 = vmatmul.mubr.bf16.gmra.mrb[0].mxu0 %v1534
      %v2261 = vpop.f32.mrb[0].mxu0
      %v2262 = vadd.f32 0.0, %v2261
      %v2263 = vpop.f32.mrb[0].mxu0
      %v2264 = vpop.f32.mrb[0].mxu0
      %v2265 = vadd.f32 0.0, %v2264
      %v2266 = vpop.f32.mrb[0].mxu0
      %2267 = vmatprep.mubr.bf16.mxu0 0
      %2268 = vmatmul.mubr.bf16.gmra.mrb[0].mxu0 %v1537
      %v2269 = vpop.f32.mrb[0].mxu0
      %v2270 = vadd.f32 0.0, %v2269
      %v2271 = vpop.f32.mrb[0].mxu0
      %v2272 = vpop.f32.mrb[0].mxu0
      %v2273 = vadd.f32 0.0, %v2272
      %v2274 = vpop.f32.mrb[0].mxu0
      %2275 = vmatprep.mubr.bf16.mxu0 0
      %2276 = vmatmul.mubr.bf16.gmra.mrb[0].mxu0 %v1540
      %v2277 = vpop.f32.mrb[0].mxu0
      %v2278 = vadd.f32 0.0, %v2277
      %v2279 = vpop.f32.mrb[0].mxu0
      %v2280 = vpop.f32.mrb[0].mxu0
      %v2281 = vadd.f32 0.0, %v2280
      %v2282 = vpop.f32.mrb[0].mxu0
      %2283 = vmatprep.mubr.bf16.mxu0 0
      %2284 = vmatmul.mubr.bf16.gmra.mrb[0].mxu0 %v1543
      %v2285 = vpop.f32.mrb[0].mxu0
      %v2286 = vadd.f32 0.0, %v2285
      %v2287 = vpop.f32.mrb[0].mxu0
      %v2288 = vpop.f32.mrb[0].mxu0
      %v2289 = vadd.f32 0.0, %v2288
      %v2290 = vpop.f32.mrb[0].mxu0
      %2291 = vmatprep.mubr.bf16.mxu0 0
      %2292 = vmatmul.mubr.bf16.gmra.mrb[0].mxu0 %v1546
      %v2293 = vpop.f32.mrb[0].mxu0
      %v2294 = vadd.f32 0.0, %v2293
      %v2295 = vpop.f32.mrb[0].mxu0
      %v2296 = vpop.f32.mrb[0].mxu0
      %v2297 = vadd.f32 0.0, %v2296
      %v2298 = vpop.f32.mrb[0].mxu0
      %2299 = vmatprep.mubr.bf16.mxu0 0
      %2300 = vmatmul.mubr.bf16.gmra.mrb[0].mxu0 %v1549
      %v2301 = vpop.f32.mrb[0].mxu0
      %v2302 = vadd.f32 0.0, %v2301
      %v2303 = vpop.f32.mrb[0].mxu0
      %v2304 = vpop.f32.mrb[0].mxu0
      %v2305 = vadd.f32 0.0, %v2304
      %v2306 = vpop.f32.mrb[0].mxu0
      %2307 = vmatprep.mubr.bf16.mxu0 0
      %2308 = vmatmul.mubr.bf16.gmra.mrb[0].mxu0 %v1552
      %v2309 = vpop.f32.mrb[0].mxu0
      %v2310 = vadd.f32 0.0, %v2309
      %v2311 = vpop.f32.mrb[0].mxu0
      %v2312 = vpop.f32.mrb[0].mxu0
      %v2313 = vadd.f32 0.0, %v2312
      %v2314 = vpop.f32.mrb[0].mxu0
      %2315 = vmatprep.mubr.bf16.mxu0 0
      %2316 = vmatmul.mubr.bf16.gmra.mrb[0].mxu0 %v1555
      %v2317 = vpop.f32.mrb[0].mxu0
      %v2318 = vadd.f32 0.0, %v2317
      %v2319 = vpop.f32.mrb[0].mxu0
      %v2320 = vpop.f32.mrb[0].mxu0
      %v2321 = vadd.f32 0.0, %v2320
      %v2322 = vpop.f32.mrb[0].mxu0
      %2323 = vmatprep.mubr.bf16.mxu0 0
      %2324 = vmatmul.mubr.bf16.gmra.mrb[0].mxu0 %v1558
      %v2325 = vpop.f32.mrb[0].mxu0
      %v2326 = vadd.f32 0.0, %v2325
      %v2327 = vpop.f32.mrb[0].mxu0
      %v2328 = vpop.f32.mrb[0].mxu0
      %v2329 = vadd.f32 0.0, %v2328
      %v2330 = vpop.f32.mrb[0].mxu0
      %2331 = vmatprep.mubr.bf16.mxu0 0
      %2332 = vmatmul.mubr.bf16.gmra.mrb[0].mxu0 %v1561
      %v2333 = vpop.f32.mrb[0].mxu0
      %v2334 = vadd.f32 0.0, %v2333
      %v2335 = vpop.f32.mrb[0].mxu0
      %v2336 = vpop.f32.mrb[0].mxu0
      %v2337 = vadd.f32 0.0, %v2336
      %v2338 = vpop.f32.mrb[0].mxu0
      %2339 = vmatprep.mubr.bf16.mxu0 0
      %2340 = vmatmul.mubr.bf16.gmra.mrb[0].mxu0 %v1564
      %v2341 = vpop.f32.mrb[0].mxu0
      %v2342 = vadd.f32 0.0, %v2341
      %v2343 = vpop.f32.mrb[0].mxu0
      %v2344 = vpop.f32.mrb[0].mxu0
      %v2345 = vadd.f32 0.0, %v2344
      %v2346 = vpop.f32.mrb[0].mxu0
      %2347 = vmatprep.mubr.bf16.mxu0 0
      %2348 = vmatmul.mubr.bf16.gmra.mrb[0].mxu0 %v1567
      %v2349 = vpop.f32.mrb[0].mxu0
      %v2350 = vadd.f32 0.0, %v2349
      %v2351 = vpop.f32.mrb[0].mxu0
      %v2352 = vpop.f32.mrb[0].mxu0
      %v2353 = vadd.f32 0.0, %v2352
      %v2354 = vpop.f32.mrb[0].mxu0
      %2355 = vmatprep.mubr.bf16.mxu0 0
      %2356 = vmatmul.mubr.bf16.gmra.mrb[0].mxu0 %v1570
      %v2357 = vpop.f32.mrb[0].mxu0
      %v2358 = vadd.f32 0.0, %v2357
      %v2359 = vpop.f32.mrb[0].mxu0
      %v2360 = vpop.f32.mrb[0].mxu0
      %v2361 = vadd.f32 0.0, %v2360
      %v2362 = vpop.f32.mrb[0].mxu0
      %2363 = vmatprep.mubr.bf16.mxu0 0
      %2364 = vmatmul.mubr.bf16.gmra.mrb[0].mxu0 %v1573
      %v2365 = vpop.f32.mrb[0].mxu0
      %v2366 = vadd.f32 0.0, %v2365
      %v2367 = vpop.f32.mrb[0].mxu0
      %v2368 = vpop.f32.mrb[0].mxu0
      %v2369 = vadd.f32 0.0, %v2368
      %v2370 = vpop.f32.mrb[0].mxu0
      %2371 = vmatprep.mubr.bf16.mxu0 0
      %2372 = vmatmul.mubr.bf16.gmra.mrb[0].mxu0 %v1576
      %v2373 = vpop.f32.mrb[0].mxu0
      %v2374 = vadd.f32 0.0, %v2373
      %v2375 = vpop.f32.mrb[0].mxu0
      %v2376 = vpop.f32.mrb[0].mxu0
      %v2377 = vadd.f32 0.0, %v2376
      %v2378 = vpop.f32.mrb[0].mxu0
      %2379 = vmatprep.mubr.bf16.mxu0 0
      %2380 = vmatmul.mubr.bf16.gmra.mrb[0].mxu0 %v2222
      %v2381 = vpop.f32.mrb[0].mxu0
      %v2382 = vadd.f32 0.0, %v2381
      %v2383 = vpop.f32.mrb[0].mxu0
      %v2384 = vpop.f32.mrb[0].mxu0
      %v2385 = vadd.f32 0.0, %v2384
      %v2386 = vpop.f32.mrb[0].mxu0
      %2387 = vdwg.mxu0
      %v2388 = vadd.f32 %v2176, %v2262
      %v2389 = vadd.f32 %v2177, %v2265
      %v2390 = vadd.f32 %v2178, %v2270
      %v2391 = vadd.f32 %v2179, %v2273
      %v2392 = vadd.f32 %v2180, %v2278
      %v2393 = vadd.f32 %v2181, %v2281
      %v2394 = vadd.f32 %v2182, %v2286
      %v2395 = vadd.f32 %v2183, %v2289
      %v2396 = vadd.f32 %v2184, %v2294
      %v2397 = vadd.f32 %v2185, %v2297
      %v2398 = vadd.f32 %v2186, %v2302
      %v2399 = vadd.f32 %v2187, %v2305
      %v2400 = vadd.f32 %v2188, %v2310
      %v2401 = vadd.f32 %v2189, %v2313
      %v2402 = vadd.f32 %v2190, %v2318
      %v2403 = vadd.f32 %v2191, %v2321
      %v2404 = vadd.f32 %v2192, %v2326
      %v2405 = vadd.f32 %v2193, %v2329
      %v2406 = vadd.f32 %v2194, %v2334
      %v2407 = vadd.f32 %v2195, %v2337
      %v2408 = vadd.f32 %v2196, %v2342
      %v2409 = vadd.f32 %v2197, %v2345
      %v2410 = vadd.f32 %v2198, %v2350
      %v2411 = vadd.f32 %v2199, %v2353
      %v2412 = vadd.f32 %v2200, %v2358
      %v2413 = vadd.f32 %v2201, %v2361
      %v2414 = vadd.f32 %v2202, %v2366
      %v2415 = vadd.f32 %v2203, %v2369
      %v2416 = vadd.f32 %v2204, %v2374
      %v2417 = vadd.f32 %v2205, %v2377
      %v2418 = vadd.f32 %v2206, %v2382
      %v2419 = vadd.f32 %v2207, %v2385
      %s2420 = scalar_lea.vmem %s314, 24
      %v2421 = vld [vmem:[%s2420] sm:$0xf]
      %v2424 = vunpack.c.l.b16 %v402
      %v2425 = vunpack.c.l.b16 %v403
      %v2426 = vpack.c.b16 %v2425, %v2424
      %v2428 = vsel %vm843, %v2426, 0
      %v2431 = vsel %vm892, %v2421, 0
      %2433 = vmatprep.subr.bf16.mxu0 0
      %2434 = vmatpush1.bf16.msra.mxu0 %v2431
      %2435 = vmatprep.subr.bf16.mxu0 0
      %2436 = vmatpush1.bf16.msra.mxu0 0
      %2437 = vmatprep.subr.bf16.mxu0 0
      %2438 = vmatpush1.bf16.msra.mxu0 0
      %2439 = vmatprep.subr.bf16.mxu0 0
      %2440 = vmatpush1.bf16.msra.mxu0 0
      %2441 = vmatprep.subr.bf16.mxu0 0
      %2442 = vmatpush1.bf16.msra.mxu0 0
      %2443 = vmatprep.subr.bf16.mxu0 0
      %2444 = vmatpush1.bf16.msra.mxu0 0
      %2445 = vmatprep.subr.bf16.mxu0 0
      %2446 = vmatpush1.bf16.msra.mxu0 0
      %2447 = vmatprep.subr.bf16.mxu0 0
      %2448 = vmatpush1.bf16.msra.mxu0 0
      %2449 = vmatprep.subr.bf16.mxu0 0
      %2450 = vmatpush1.bf16.msra.mxu0 0
      %2451 = vmatprep.subr.bf16.mxu0 0
      %2452 = vmatpush1.bf16.msra.mxu0 0
      %2453 = vmatprep.subr.bf16.mxu0 0
      %2454 = vmatpush1.bf16.msra.mxu0 0
      %2455 = vmatprep.subr.bf16.mxu0 0
      %2456 = vmatpush1.bf16.msra.mxu0 0
      %2457 = vmatprep.subr.bf16.mxu0 0
      %2458 = vmatpush1.bf16.msra.mxu0 0
      %2459 = vmatprep.subr.bf16.mxu0 0
      %2460 = vmatpush1.bf16.msra.mxu0 0
      %2461 = vmatprep.subr.bf16.mxu0 0
      %2462 = vmatpush1.bf16.msra.mxu0 0
      %2463 = vmatprep.subr.bf16.mxu0 0
      %2464 = vmatpush1.bf16.msra.mxu0 0
      %2465 = vmatprep.mubr.bf16.mxu0 0
      %2466 = vmatmul.mubr.bf16.gmra.mrb[0].mxu0 %v1144
      %v2467 = vpop.f32.mrb[0].mxu0
      %v2468 = vadd.f32 0.0, %v2467
      %v2469 = vpop.f32.mrb[0].mxu0
      %v2470 = vpop.f32.mrb[0].mxu0
      %v2471 = vadd.f32 0.0, %v2470
      %v2472 = vpop.f32.mrb[0].mxu0
      %2473 = vmatprep.mubr.bf16.mxu0 0
      %2474 = vmatmul.mubr.bf16.gmra.mrb[0].mxu0 %v1147
      %v2475 = vpop.f32.mrb[0].mxu0
      %v2476 = vadd.f32 0.0, %v2475
      %v2477 = vpop.f32.mrb[0].mxu0
      %v2478 = vpop.f32.mrb[0].mxu0
      %v2479 = vadd.f32 0.0, %v2478
      %v2480 = vpop.f32.mrb[0].mxu0
      %2481 = vmatprep.mubr.bf16.mxu0 0
      %2482 = vmatmul.mubr.bf16.gmra.mrb[0].mxu0 %v1150
      %v2483 = vpop.f32.mrb[0].mxu0
      %v2484 = vadd.f32 0.0, %v2483
      %v2485 = vpop.f32.mrb[0].mxu0
      %v2486 = vpop.f32.mrb[0].mxu0
      %v2487 = vadd.f32 0.0, %v2486
      %v2488 = vpop.f32.mrb[0].mxu0
      %2489 = vmatprep.mubr.bf16.mxu0 0
      %2490 = vmatmul.mubr.bf16.gmra.mrb[0].mxu0 %v1153
      %v2491 = vpop.f32.mrb[0].mxu0
      %v2492 = vadd.f32 0.0, %v2491
      %v2493 = vpop.f32.mrb[0].mxu0
      %v2494 = vpop.f32.mrb[0].mxu0
      %v2495 = vadd.f32 0.0, %v2494
      %v2496 = vpop.f32.mrb[0].mxu0
      %2497 = vmatprep.mubr.bf16.mxu0 0
      %2498 = vmatmul.mubr.bf16.gmra.mrb[0].mxu0 %v1156
      %v2499 = vpop.f32.mrb[0].mxu0
      %v2500 = vadd.f32 0.0, %v2499
      %v2501 = vpop.f32.mrb[0].mxu0
      %v2502 = vpop.f32.mrb[0].mxu0
      %v2503 = vadd.f32 0.0, %v2502
      %v2504 = vpop.f32.mrb[0].mxu0
      %2505 = vmatprep.mubr.bf16.mxu0 0
      %2506 = vmatmul.mubr.bf16.gmra.mrb[0].mxu0 %v1159
      %v2507 = vpop.f32.mrb[0].mxu0
      %v2508 = vadd.f32 0.0, %v2507
      %v2509 = vpop.f32.mrb[0].mxu0
      %v2510 = vpop.f32.mrb[0].mxu0
      %v2511 = vadd.f32 0.0, %v2510
      %v2512 = vpop.f32.mrb[0].mxu0
      %2513 = vmatprep.mubr.bf16.mxu0 0
      %2514 = vmatmul.mubr.bf16.gmra.mrb[0].mxu0 %v1162
      %v2515 = vpop.f32.mrb[0].mxu0
      %v2516 = vadd.f32 0.0, %v2515
      %v2517 = vpop.f32.mrb[0].mxu0
      %v2518 = vpop.f32.mrb[0].mxu0
      %v2519 = vadd.f32 0.0, %v2518
      %v2520 = vpop.f32.mrb[0].mxu0
      %2521 = vmatprep.mubr.bf16.mxu0 0
      %2522 = vmatmul.mubr.bf16.gmra.mrb[0].mxu0 %v1165
      %v2523 = vpop.f32.mrb[0].mxu0
      %v2524 = vadd.f32 0.0, %v2523
      %v2525 = vpop.f32.mrb[0].mxu0
      %v2526 = vpop.f32.mrb[0].mxu0
      %v2527 = vadd.f32 0.0, %v2526
      %v2528 = vpop.f32.mrb[0].mxu0
      %2529 = vmatprep.mubr.bf16.mxu0 0
      %2530 = vmatmul.mubr.bf16.gmra.mrb[0].mxu0 %v1168
      %v2531 = vpop.f32.mrb[0].mxu0
      %v2532 = vadd.f32 0.0, %v2531
      %v2533 = vpop.f32.mrb[0].mxu0
      %v2534 = vpop.f32.mrb[0].mxu0
      %v2535 = vadd.f32 0.0, %v2534
      %v2536 = vpop.f32.mrb[0].mxu0
      %2537 = vmatprep.mubr.bf16.mxu0 0
      %2538 = vmatmul.mubr.bf16.gmra.mrb[0].mxu0 %v1171
      %v2539 = vpop.f32.mrb[0].mxu0
      %v2540 = vadd.f32 0.0, %v2539
      %v2541 = vpop.f32.mrb[0].mxu0
      %v2542 = vpop.f32.mrb[0].mxu0
      %v2543 = vadd.f32 0.0, %v2542
      %v2544 = vpop.f32.mrb[0].mxu0
      %2545 = vmatprep.mubr.bf16.mxu0 0
      %2546 = vmatmul.mubr.bf16.gmra.mrb[0].mxu0 %v1174
      %v2547 = vpop.f32.mrb[0].mxu0
      %v2548 = vadd.f32 0.0, %v2547
      %v2549 = vpop.f32.mrb[0].mxu0
      %v2550 = vpop.f32.mrb[0].mxu0
      %v2551 = vadd.f32 0.0, %v2550
      %v2552 = vpop.f32.mrb[0].mxu0
      %2553 = vmatprep.mubr.bf16.mxu0 0
      %2554 = vmatmul.mubr.bf16.gmra.mrb[0].mxu0 %v1177
      %v2555 = vpop.f32.mrb[0].mxu0
      %v2556 = vadd.f32 0.0, %v2555
      %v2557 = vpop.f32.mrb[0].mxu0
      %v2558 = vpop.f32.mrb[0].mxu0
      %v2559 = vadd.f32 0.0, %v2558
      %v2560 = vpop.f32.mrb[0].mxu0
      %2561 = vmatprep.mubr.bf16.mxu0 0
      %2562 = vmatmul.mubr.bf16.gmra.mrb[0].mxu0 %v1180
      %v2563 = vpop.f32.mrb[0].mxu0
      %v2564 = vadd.f32 0.0, %v2563
      %v2565 = vpop.f32.mrb[0].mxu0
      %v2566 = vpop.f32.mrb[0].mxu0
      %v2567 = vadd.f32 0.0, %v2566
      %v2568 = vpop.f32.mrb[0].mxu0
      %2569 = vmatprep.mubr.bf16.mxu0 0
      %2570 = vmatmul.mubr.bf16.gmra.mrb[0].mxu0 %v1183
      %v2571 = vpop.f32.mrb[0].mxu0
      %v2572 = vadd.f32 0.0, %v2571
      %v2573 = vpop.f32.mrb[0].mxu0
      %v2574 = vpop.f32.mrb[0].mxu0
      %v2575 = vadd.f32 0.0, %v2574
      %v2576 = vpop.f32.mrb[0].mxu0
      %2577 = vmatprep.mubr.bf16.mxu0 0
      %2578 = vmatmul.mubr.bf16.gmra.mrb[0].mxu0 %v1782
      %v2579 = vpop.f32.mrb[0].mxu0
      %v2580 = vadd.f32 0.0, %v2579
      %v2581 = vpop.f32.mrb[0].mxu0
      %v2582 = vpop.f32.mrb[0].mxu0
      %v2583 = vadd.f32 0.0, %v2582
      %v2584 = vpop.f32.mrb[0].mxu0
      %2585 = vmatprep.mubr.bf16.mxu0 0
      %2586 = vmatmul.mubr.bf16.gmra.mrb[0].mxu0 %v2428
      %v2587 = vpop.f32.mrb[0].mxu0
      %v2588 = vadd.f32 0.0, %v2587
      %v2589 = vpop.f32.mrb[0].mxu0
      %v2590 = vpop.f32.mrb[0].mxu0
      %v2591 = vadd.f32 0.0, %v2590
      %v2592 = vpop.f32.mrb[0].mxu0
      %2593 = vdwg.mxu0
      %v2594 = vadd.f32 %v2388, %v2468
      %v2595 = vadd.f32 %v2389, %v2471
      %v2596 = vadd.f32 %v2390, %v2476
      %v2597 = vadd.f32 %v2391, %v2479
      %v2598 = vadd.f32 %v2392, %v2484
      %v2599 = vadd.f32 %v2393, %v2487
      %v2600 = vadd.f32 %v2394, %v2492
      %v2601 = vadd.f32 %v2395, %v2495
      %v2602 = vadd.f32 %v2396, %v2500
      %v2603 = vadd.f32 %v2397, %v2503
      %v2604 = vadd.f32 %v2398, %v2508
      %v2605 = vadd.f32 %v2399, %v2511
      %v2606 = vadd.f32 %v2400, %v2516
      %v2607 = vadd.f32 %v2401, %v2519
      %v2608 = vadd.f32 %v2402, %v2524
      %v2609 = vadd.f32 %v2403, %v2527
      %v2610 = vadd.f32 %v2404, %v2532
      %v2611 = vadd.f32 %v2405, %v2535
      %v2612 = vadd.f32 %v2406, %v2540
      %v2613 = vadd.f32 %v2407, %v2543
      %v2614 = vadd.f32 %v2408, %v2548
      %v2615 = vadd.f32 %v2409, %v2551
      %v2616 = vadd.f32 %v2410, %v2556
      %v2617 = vadd.f32 %v2411, %v2559
      %v2618 = vadd.f32 %v2412, %v2564
      %v2619 = vadd.f32 %v2413, %v2567
      %v2620 = vadd.f32 %v2414, %v2572
      %v2621 = vadd.f32 %v2415, %v2575
      %v2622 = vadd.f32 %v2416, %v2580
      %v2623 = vadd.f32 %v2417, %v2583
      %v2624 = vadd.f32 %v2418, %v2588
      %v2625 = vadd.f32 %v2419, %v2591
      %v2627 = vshrl.u32 %v402, 16
      %v2629 = vrot.slane %v2627, 4
      %v2630 = vshll.u32 %v402, 16
      %v2632 = vrot.slane %v2630, 5
      %v2633 = vor.u32 %v2629, %v2632
      %v2634 = vrot.slane %v2633, 4
      %v2636 = vshll.u32 %v403, 16
      %v2638 = vrot.slane %v2636, 5
      %v2639 = vsel %vm408, %v2634, %v2638
      %v2640 = vshrl.u32 %v403, 16
      %v2642 = vrot.slane %v2640, 4
      %v2643 = vor.u32 %v2642, %v2638
      %v2644 = vrot.slane %v2643, 4
      %v2646 = vshll.u32 %v404, 16
      %v2648 = vrot.slane %v2646, 5
      %v2649 = vsel %vm408, %v2644, %v2648
      %s2650 = scalar_lea.vmem %s314, 28
      %v2651 = vld [vmem:[%s2650] sm:$0xf]
      %v2652 = vunpack.c.l.b16 %v2639
      %v2653 = vunpack.c.l.b16 %v2649
      %v2654 = vpack.c.b16 %v2653, %v2652
      %v2656 = vsel %vm843, %v2654, 0
      %v2659 = vsel %vm892, %v2651, 0
      %2661 = vmatprep.subr.bf16.mxu0 0
      %2662 = vmatpush1.bf16.msra.mxu0 %v2659
      %2663 = vmatprep.subr.bf16.mxu0 0
      %2664 = vmatpush1.bf16.msra.mxu0 0
      %2665 = vmatprep.subr.bf16.mxu0 0
      %2666 = vmatpush1.bf16.msra.mxu0 0
      %2667 = vmatprep.subr.bf16.mxu0 0
      %2668 = vmatpush1.bf16.msra.mxu0 0
      %2669 = vmatprep.subr.bf16.mxu0 0
      %2670 = vmatpush1.bf16.msra.mxu0 0
      %2671 = vmatprep.subr.bf16.mxu0 0
      %2672 = vmatpush1.bf16.msra.mxu0 0
      %2673 = vmatprep.subr.bf16.mxu0 0
      %2674 = vmatpush1.bf16.msra.mxu0 0
      %2675 = vmatprep.subr.bf16.mxu0 0
      %2676 = vmatpush1.bf16.msra.mxu0 0
      %2677 = vmatprep.subr.bf16.mxu0 0
      %2678 = vmatpush1.bf16.msra.mxu0 0
      %2679 = vmatprep.subr.bf16.mxu0 0
      %2680 = vmatpush1.bf16.msra.mxu0 0
      %2681 = vmatprep.subr.bf16.mxu0 0
      %2682 = vmatpush1.bf16.msra.mxu0 0
      %2683 = vmatprep.subr.bf16.mxu0 0
      %2684 = vmatpush1.bf16.msra.mxu0 0
      %2685 = vmatprep.subr.bf16.mxu0 0
      %2686 = vmatpush1.bf16.msra.mxu0 0
      %2687 = vmatprep.subr.bf16.mxu0 0
      %2688 = vmatpush1.bf16.msra.mxu0 0
      %2689 = vmatprep.subr.bf16.mxu0 0
      %2690 = vmatpush1.bf16.msra.mxu0 0
      %2691 = vmatprep.subr.bf16.mxu0 0
      %2692 = vmatpush1.bf16.msra.mxu0 0
      %2693 = vmatprep.mubr.bf16.mxu0 0
      %2694 = vmatmul.mubr.bf16.gmra.mrb[0].mxu0 %v851
      %v2695 = vpop.f32.mrb[0].mxu0
      %v2696 = vadd.f32 0.0, %v2695
      %v2697 = vpop.f32.mrb[0].mxu0
      %v2698 = vpop.f32.mrb[0].mxu0
      %v2699 = vadd.f32 0.0, %v2698
      %v2700 = vpop.f32.mrb[0].mxu0
      %2701 = vmatprep.mubr.bf16.mxu0 0
      %2702 = vmatmul.mubr.bf16.gmra.mrb[0].mxu0 %v854
      %v2703 = vpop.f32.mrb[0].mxu0
      %v2704 = vadd.f32 0.0, %v2703
      %v2705 = vpop.f32.mrb[0].mxu0
      %v2706 = vpop.f32.mrb[0].mxu0
      %v2707 = vadd.f32 0.0, %v2706
      %v2708 = vpop.f32.mrb[0].mxu0
      %2709 = vmatprep.mubr.bf16.mxu0 0
      %2710 = vmatmul.mubr.bf16.gmra.mrb[0].mxu0 %v857
      %v2711 = vpop.f32.mrb[0].mxu0
      %v2712 = vadd.f32 0.0, %v2711
      %v2713 = vpop.f32.mrb[0].mxu0
      %v2714 = vpop.f32.mrb[0].mxu0
      %v2715 = vadd.f32 0.0, %v2714
      %v2716 = vpop.f32.mrb[0].mxu0
      %2717 = vmatprep.mubr.bf16.mxu0 0
      %2718 = vmatmul.mubr.bf16.gmra.mrb[0].mxu0 %v860
      %v2719 = vpop.f32.mrb[0].mxu0
      %v2720 = vadd.f32 0.0, %v2719
      %v2721 = vpop.f32.mrb[0].mxu0
      %v2722 = vpop.f32.mrb[0].mxu0
      %v2723 = vadd.f32 0.0, %v2722
      %v2724 = vpop.f32.mrb[0].mxu0
      %2725 = vmatprep.mubr.bf16.mxu0 0
      %2726 = vmatmul.mubr.bf16.gmra.mrb[0].mxu0 %v863
      %v2727 = vpop.f32.mrb[0].mxu0
      %v2728 = vadd.f32 0.0, %v2727
      %v2729 = vpop.f32.mrb[0].mxu0
      %v2730 = vpop.f32.mrb[0].mxu0
      %v2731 = vadd.f32 0.0, %v2730
      %v2732 = vpop.f32.mrb[0].mxu0
      %2733 = vmatprep.mubr.bf16.mxu0 0
      %2734 = vmatmul.mubr.bf16.gmra.mrb[0].mxu0 %v866
      %v2735 = vpop.f32.mrb[0].mxu0
      %v2736 = vadd.f32 0.0, %v2735
      %v2737 = vpop.f32.mrb[0].mxu0
      %v2738 = vpop.f32.mrb[0].mxu0
      %v2739 = vadd.f32 0.0, %v2738
      %v2740 = vpop.f32.mrb[0].mxu0
      %2741 = vmatprep.mubr.bf16.mxu0 0
      %2742 = vmatmul.mubr.bf16.gmra.mrb[0].mxu0 %v869
      %v2743 = vpop.f32.mrb[0].mxu0
      %v2744 = vadd.f32 0.0, %v2743
      %v2745 = vpop.f32.mrb[0].mxu0
      %v2746 = vpop.f32.mrb[0].mxu0
      %v2747 = vadd.f32 0.0, %v2746
      %v2748 = vpop.f32.mrb[0].mxu0
      %2749 = vmatprep.mubr.bf16.mxu0 0
      %2750 = vmatmul.mubr.bf16.gmra.mrb[0].mxu0 %v872
      %v2751 = vpop.f32.mrb[0].mxu0
      %v2752 = vadd.f32 0.0, %v2751
      %v2753 = vpop.f32.mrb[0].mxu0
      %v2754 = vpop.f32.mrb[0].mxu0
      %v2755 = vadd.f32 0.0, %v2754
      %v2756 = vpop.f32.mrb[0].mxu0
      %2757 = vmatprep.mubr.bf16.mxu0 0
      %2758 = vmatmul.mubr.bf16.gmra.mrb[0].mxu0 %v875
      %v2759 = vpop.f32.mrb[0].mxu0
      %v2760 = vadd.f32 0.0, %v2759
      %v2761 = vpop.f32.mrb[0].mxu0
      %v2762 = vpop.f32.mrb[0].mxu0
      %v2763 = vadd.f32 0.0, %v2762
      %v2764 = vpop.f32.mrb[0].mxu0
      %2765 = vmatprep.mubr.bf16.mxu0 0
      %2766 = vmatmul.mubr.bf16.gmra.mrb[0].mxu0 %v878
      %v2767 = vpop.f32.mrb[0].mxu0
      %v2768 = vadd.f32 0.0, %v2767
      %v2769 = vpop.f32.mrb[0].mxu0
      %v2770 = vpop.f32.mrb[0].mxu0
      %v2771 = vadd.f32 0.0, %v2770
      %v2772 = vpop.f32.mrb[0].mxu0
      %2773 = vmatprep.mubr.bf16.mxu0 0
      %2774 = vmatmul.mubr.bf16.gmra.mrb[0].mxu0 %v881
      %v2775 = vpop.f32.mrb[0].mxu0
      %v2776 = vadd.f32 0.0, %v2775
      %v2777 = vpop.f32.mrb[0].mxu0
      %v2778 = vpop.f32.mrb[0].mxu0
      %v2779 = vadd.f32 0.0, %v2778
      %v2780 = vpop.f32.mrb[0].mxu0
      %2781 = vmatprep.mubr.bf16.mxu0 0
      %2782 = vmatmul.mubr.bf16.gmra.mrb[0].mxu0 %v884
      %v2783 = vpop.f32.mrb[0].mxu0
      %v2784 = vadd.f32 0.0, %v2783
      %v2785 = vpop.f32.mrb[0].mxu0
      %v2786 = vpop.f32.mrb[0].mxu0
      %v2787 = vadd.f32 0.0, %v2786
      %v2788 = vpop.f32.mrb[0].mxu0
      %2789 = vmatprep.mubr.bf16.mxu0 0
      %2790 = vmatmul.mubr.bf16.gmra.mrb[0].mxu0 %v887
      %v2791 = vpop.f32.mrb[0].mxu0
      %v2792 = vadd.f32 0.0, %v2791
      %v2793 = vpop.f32.mrb[0].mxu0
      %v2794 = vpop.f32.mrb[0].mxu0
      %v2795 = vadd.f32 0.0, %v2794
      %v2796 = vpop.f32.mrb[0].mxu0
      %2797 = vmatprep.mubr.bf16.mxu0 0
      %2798 = vmatmul.mubr.bf16.gmra.mrb[0].mxu0 %v890
      %v2799 = vpop.f32.mrb[0].mxu0
      %v2800 = vadd.f32 0.0, %v2799
      %v2801 = vpop.f32.mrb[0].mxu0
      %v2802 = vpop.f32.mrb[0].mxu0
      %v2803 = vadd.f32 0.0, %v2802
      %v2804 = vpop.f32.mrb[0].mxu0
      %2805 = vmatprep.mubr.bf16.mxu0 0
      %2806 = vmatmul.mubr.bf16.gmra.mrb[0].mxu0 %v2010
      %v2807 = vpop.f32.mrb[0].mxu0
      %v2808 = vadd.f32 0.0, %v2807
      %v2809 = vpop.f32.mrb[0].mxu0
      %v2810 = vpop.f32.mrb[0].mxu0
      %v2811 = vadd.f32 0.0, %v2810
      %v2812 = vpop.f32.mrb[0].mxu0
      %2813 = vmatprep.mubr.bf16.mxu0 0
      %2814 = vmatmul.mubr.bf16.gmra.mrb[0].mxu0 %v2656
      %v2815 = vpop.f32.mrb[0].mxu0
      %v2816 = vadd.f32 0.0, %v2815
      %v2817 = vpop.f32.mrb[0].mxu0
      %v2818 = vpop.f32.mrb[0].mxu0
      %v2819 = vadd.f32 0.0, %v2818
      %v2820 = vpop.f32.mrb[0].mxu0
      %2821 = vdwg.mxu0
      %v2822 = vadd.f32 %v2594, %v2696
      %v2823 = vadd.f32 %v2595, %v2699
      %v2824 = vadd.f32 %v2596, %v2704
      %v2825 = vadd.f32 %v2597, %v2707
      %v2826 = vadd.f32 %v2598, %v2712
      %v2827 = vadd.f32 %v2599, %v2715
      %v2828 = vadd.f32 %v2600, %v2720
      %v2829 = vadd.f32 %v2601, %v2723
      %v2830 = vadd.f32 %v2602, %v2728
      %v2831 = vadd.f32 %v2603, %v2731
      %v2832 = vadd.f32 %v2604, %v2736
      %v2833 = vadd.f32 %v2605, %v2739
      %v2834 = vadd.f32 %v2606, %v2744
      %v2835 = vadd.f32 %v2607, %v2747
      %v2836 = vadd.f32 %v2608, %v2752
      %v2837 = vadd.f32 %v2609, %v2755
      %v2838 = vadd.f32 %v2610, %v2760
      %v2839 = vadd.f32 %v2611, %v2763
      %v2840 = vadd.f32 %v2612, %v2768
      %v2841 = vadd.f32 %v2613, %v2771
      %v2842 = vadd.f32 %v2614, %v2776
      %v2843 = vadd.f32 %v2615, %v2779
      %v2844 = vadd.f32 %v2616, %v2784
      %v2845 = vadd.f32 %v2617, %v2787
      %v2846 = vadd.f32 %v2618, %v2792
      %v2847 = vadd.f32 %v2619, %v2795
      %v2848 = vadd.f32 %v2620, %v2800
      %v2849 = vadd.f32 %v2621, %v2803
      %v2850 = vadd.f32 %v2622, %v2808
      %v2851 = vadd.f32 %v2623, %v2811
      %v2852 = vadd.f32 %v2624, %v2816
      %v2853 = vadd.f32 %v2625, %v2819
      %v2855 = vrot.slane %v402, 5
      %v2856 = vrot.slane %v2855, 4
      %v2857 = vrot.slane %v403, 5
      %v2858 = vsel %vm1367, %v2856, %v2857
      %v2859 = vrot.slane %v2857, 4
      %v2860 = vrot.slane %v404, 5
      %v2861 = vsel %vm1367, %v2859, %v2860
      %s2862 = scalar_lea.vmem %s314, 32
      %v2863 = vld [vmem:[%s2862] sm:$0xf]
      %v2864 = vunpack.c.l.b16 %v2858
      %v2865 = vunpack.c.l.b16 %v2861
      %v2866 = vpack.c.b16 %v2865, %v2864
      %v2868 = vsel %vm843, %v2866, 0
      %v2871 = vsel %vm892, %v2863, 0
      %2873 = vmatprep.subr.bf16.mxu0 0
      %2874 = vmatpush1.bf16.msra.mxu0 %v2871
      %2875 = vmatprep.subr.bf16.mxu0 0
      %2876 = vmatpush1.bf16.msra.mxu0 0
      %2877 = vmatprep.subr.bf16.mxu0 0
      %2878 = vmatpush1.bf16.msra.mxu0 0
      %2879 = vmatprep.subr.bf16.mxu0 0
      %2880 = vmatpush1.bf16.msra.mxu0 0
      %2881 = vmatprep.subr.bf16.mxu0 0
      %2882 = vmatpush1.bf16.msra.mxu0 0
      %2883 = vmatprep.subr.bf16.mxu0 0
      %2884 = vmatpush1.bf16.msra.mxu0 0
      %2885 = vmatprep.subr.bf16.mxu0 0
      %2886 = vmatpush1.bf16.msra.mxu0 0
      %2887 = vmatprep.subr.bf16.mxu0 0
      %2888 = vmatpush1.bf16.msra.mxu0 0
      %2889 = vmatprep.subr.bf16.mxu0 0
      %2890 = vmatpush1.bf16.msra.mxu0 0
      %2891 = vmatprep.subr.bf16.mxu0 0
      %2892 = vmatpush1.bf16.msra.mxu0 0
      %2893 = vmatprep.subr.bf16.mxu0 0
      %2894 = vmatpush1.bf16.msra.mxu0 0
      %2895 = vmatprep.subr.bf16.mxu0 0
      %2896 = vmatpush1.bf16.msra.mxu0 0
      %2897 = vmatprep.subr.bf16.mxu0 0
      %2898 = vmatpush1.bf16.msra.mxu0 0
      %2899 = vmatprep.subr.bf16.mxu0 0
      %2900 = vmatpush1.bf16.msra.mxu0 0
      %2901 = vmatprep.subr.bf16.mxu0 0
      %2902 = vmatpush1.bf16.msra.mxu0 0
      %2903 = vmatprep.subr.bf16.mxu0 0
      %2904 = vmatpush1.bf16.msra.mxu0 0
      %2905 = vmatprep.mubr.bf16.mxu0 0
      %2906 = vmatmul.mubr.bf16.gmra.mrb[0].mxu0 %v1537
      %v2907 = vpop.f32.mrb[0].mxu0
      %v2908 = vadd.f32 0.0, %v2907
      %v2909 = vpop.f32.mrb[0].mxu0
      %v2910 = vpop.f32.mrb[0].mxu0
      %v2911 = vadd.f32 0.0, %v2910
      %v2912 = vpop.f32.mrb[0].mxu0
      %2913 = vmatprep.mubr.bf16.mxu0 0
      %2914 = vmatmul.mubr.bf16.gmra.mrb[0].mxu0 %v1540
      %v2915 = vpop.f32.mrb[0].mxu0
      %v2916 = vadd.f32 0.0, %v2915
      %v2917 = vpop.f32.mrb[0].mxu0
      %v2918 = vpop.f32.mrb[0].mxu0
      %v2919 = vadd.f32 0.0, %v2918
      %v2920 = vpop.f32.mrb[0].mxu0
      %2921 = vmatprep.mubr.bf16.mxu0 0
      %2922 = vmatmul.mubr.bf16.gmra.mrb[0].mxu0 %v1543
      %v2923 = vpop.f32.mrb[0].mxu0
      %v2924 = vadd.f32 0.0, %v2923
      %v2925 = vpop.f32.mrb[0].mxu0
      %v2926 = vpop.f32.mrb[0].mxu0
      %v2927 = vadd.f32 0.0, %v2926
      %v2928 = vpop.f32.mrb[0].mxu0
      %2929 = vmatprep.mubr.bf16.mxu0 0
      %2930 = vmatmul.mubr.bf16.gmra.mrb[0].mxu0 %v1546
      %v2931 = vpop.f32.mrb[0].mxu0
      %v2932 = vadd.f32 0.0, %v2931
      %v2933 = vpop.f32.mrb[0].mxu0
      %v2934 = vpop.f32.mrb[0].mxu0
      %v2935 = vadd.f32 0.0, %v2934
      %v2936 = vpop.f32.mrb[0].mxu0
      %2937 = vmatprep.mubr.bf16.mxu0 0
      %2938 = vmatmul.mubr.bf16.gmra.mrb[0].mxu0 %v1549
      %v2939 = vpop.f32.mrb[0].mxu0
      %v2940 = vadd.f32 0.0, %v2939
      %v2941 = vpop.f32.mrb[0].mxu0
      %v2942 = vpop.f32.mrb[0].mxu0
      %v2943 = vadd.f32 0.0, %v2942
      %v2944 = vpop.f32.mrb[0].mxu0
      %2945 = vmatprep.mubr.bf16.mxu0 0
      %2946 = vmatmul.mubr.bf16.gmra.mrb[0].mxu0 %v1552
      %v2947 = vpop.f32.mrb[0].mxu0
      %v2948 = vadd.f32 0.0, %v2947
      %v2949 = vpop.f32.mrb[0].mxu0
      %v2950 = vpop.f32.mrb[0].mxu0
      %v2951 = vadd.f32 0.0, %v2950
      %v2952 = vpop.f32.mrb[0].mxu0
      %2953 = vmatprep.mubr.bf16.mxu0 0
      %2954 = vmatmul.mubr.bf16.gmra.mrb[0].mxu0 %v1555
      %v2955 = vpop.f32.mrb[0].mxu0
      %v2956 = vadd.f32 0.0, %v2955
      %v2957 = vpop.f32.mrb[0].mxu0
      %v2958 = vpop.f32.mrb[0].mxu0
      %v2959 = vadd.f32 0.0, %v2958
      %v2960 = vpop.f32.mrb[0].mxu0
      %2961 = vmatprep.mubr.bf16.mxu0 0
      %2962 = vmatmul.mubr.bf16.gmra.mrb[0].mxu0 %v1558
      %v2963 = vpop.f32.mrb[0].mxu0
      %v2964 = vadd.f32 0.0, %v2963
      %v2965 = vpop.f32.mrb[0].mxu0
      %v2966 = vpop.f32.mrb[0].mxu0
      %v2967 = vadd.f32 0.0, %v2966
      %v2968 = vpop.f32.mrb[0].mxu0
      %2969 = vmatprep.mubr.bf16.mxu0 0
      %2970 = vmatmul.mubr.bf16.gmra.mrb[0].mxu0 %v1561
      %v2971 = vpop.f32.mrb[0].mxu0
      %v2972 = vadd.f32 0.0, %v2971
      %v2973 = vpop.f32.mrb[0].mxu0
      %v2974 = vpop.f32.mrb[0].mxu0
      %v2975 = vadd.f32 0.0, %v2974
      %v2976 = vpop.f32.mrb[0].mxu0
      %2977 = vmatprep.mubr.bf16.mxu0 0
      %2978 = vmatmul.mubr.bf16.gmra.mrb[0].mxu0 %v1564
      %v2979 = vpop.f32.mrb[0].mxu0
      %v2980 = vadd.f32 0.0, %v2979
      %v2981 = vpop.f32.mrb[0].mxu0
      %v2982 = vpop.f32.mrb[0].mxu0
      %v2983 = vadd.f32 0.0, %v2982
      %v2984 = vpop.f32.mrb[0].mxu0
      %2985 = vmatprep.mubr.bf16.mxu0 0
      %2986 = vmatmul.mubr.bf16.gmra.mrb[0].mxu0 %v1567
      %v2987 = vpop.f32.mrb[0].mxu0
      %v2988 = vadd.f32 0.0, %v2987
      %v2989 = vpop.f32.mrb[0].mxu0
      %v2990 = vpop.f32.mrb[0].mxu0
      %v2991 = vadd.f32 0.0, %v2990
      %v2992 = vpop.f32.mrb[0].mxu0
      %2993 = vmatprep.mubr.bf16.mxu0 0
      %2994 = vmatmul.mubr.bf16.gmra.mrb[0].mxu0 %v1570
      %v2995 = vpop.f32.mrb[0].mxu0
      %v2996 = vadd.f32 0.0, %v2995
      %v2997 = vpop.f32.mrb[0].mxu0
      %v2998 = vpop.f32.mrb[0].mxu0
      %v2999 = vadd.f32 0.0, %v2998
      %v3000 = vpop.f32.mrb[0].mxu0
      %3001 = vmatprep.mubr.bf16.mxu0 0
      %3002 = vmatmul.mubr.bf16.gmra.mrb[0].mxu0 %v1573
      %v3003 = vpop.f32.mrb[0].mxu0
      %v3004 = vadd.f32 0.0, %v3003
      %v3005 = vpop.f32.mrb[0].mxu0
      %v3006 = vpop.f32.mrb[0].mxu0
      %v3007 = vadd.f32 0.0, %v3006
      %v3008 = vpop.f32.mrb[0].mxu0
      %3009 = vmatprep.mubr.bf16.mxu0 0
      %3010 = vmatmul.mubr.bf16.gmra.mrb[0].mxu0 %v1576
      %v3011 = vpop.f32.mrb[0].mxu0
      %v3012 = vadd.f32 0.0, %v3011
      %v3013 = vpop.f32.mrb[0].mxu0
      %v3014 = vpop.f32.mrb[0].mxu0
      %v3015 = vadd.f32 0.0, %v3014
      %v3016 = vpop.f32.mrb[0].mxu0
      %3017 = vmatprep.mubr.bf16.mxu0 0
      %3018 = vmatmul.mubr.bf16.gmra.mrb[0].mxu0 %v2222
      %v3019 = vpop.f32.mrb[0].mxu0
      %v3020 = vadd.f32 0.0, %v3019
      %v3021 = vpop.f32.mrb[0].mxu0
      %v3022 = vpop.f32.mrb[0].mxu0
      %v3023 = vadd.f32 0.0, %v3022
      %v3024 = vpop.f32.mrb[0].mxu0
      %3025 = vmatprep.mubr.bf16.mxu0 0
      %3026 = vmatmul.mubr.bf16.gmra.mrb[0].mxu0 %v2868
      %v3027 = vpop.f32.mrb[0].mxu0
      %v3028 = vadd.f32 0.0, %v3027
      %v3029 = vpop.f32.mrb[0].mxu0
      %v3030 = vpop.f32.mrb[0].mxu0
      %v3031 = vadd.f32 0.0, %v3030
      %v3032 = vpop.f32.mrb[0].mxu0
      %3033 = vdwg.mxu0
      %v3034 = vadd.f32 %v2822, %v2908
      %v3035 = vadd.f32 %v2823, %v2911
      %v3036 = vadd.f32 %v2824, %v2916
      %v3037 = vadd.f32 %v2825, %v2919
      %v3038 = vadd.f32 %v2826, %v2924
      %v3039 = vadd.f32 %v2827, %v2927
      %v3040 = vadd.f32 %v2828, %v2932
      %v3041 = vadd.f32 %v2829, %v2935
      %v3042 = vadd.f32 %v2830, %v2940
      %v3043 = vadd.f32 %v2831, %v2943
      %v3044 = vadd.f32 %v2832, %v2948
      %v3045 = vadd.f32 %v2833, %v2951
      %v3046 = vadd.f32 %v2834, %v2956
      %v3047 = vadd.f32 %v2835, %v2959
      %v3048 = vadd.f32 %v2836, %v2964
      %v3049 = vadd.f32 %v2837, %v2967
      %v3050 = vadd.f32 %v2838, %v2972
      %v3051 = vadd.f32 %v2839, %v2975
      %v3052 = vadd.f32 %v2840, %v2980
      %v3053 = vadd.f32 %v2841, %v2983
      %v3054 = vadd.f32 %v2842, %v2988
      %v3055 = vadd.f32 %v2843, %v2991
      %v3056 = vadd.f32 %v2844, %v2996
      %v3057 = vadd.f32 %v2845, %v2999
      %v3058 = vadd.f32 %v2846, %v3004
      %v3059 = vadd.f32 %v2847, %v3007
      %v3060 = vadd.f32 %v2848, %v3012
      %v3061 = vadd.f32 %v2849, %v3015
      %v3062 = vadd.f32 %v2850, %v3020
      %v3063 = vadd.f32 %v2851, %v3023
      %v3064 = vadd.f32 %v2852, %v3028
      %v3065 = vadd.f32 %v2853, %v3031
      %v3066 = vld [vmem:[%s317] sm:$0x1]
      %v3068 = vlaneseq
      %v3069 = vshrl.u32 %v3068, 7
      %v3070 = vsub.s32 0, %v3069
      %v3071 = vrot.slane %v3066, %v3070
      %v3073 = vadd.f32 %v3034, %v3071
      %v3074 = vadd.f32 %v3035, %v3071
      %v3075 = vadd.f32 %v3036, %v3071
      %v3076 = vadd.f32 %v3037, %v3071
      %v3077 = vadd.f32 %v3038, %v3071
      %v3078 = vadd.f32 %v3039, %v3071
      %v3079 = vadd.f32 %v3040, %v3071
      %v3080 = vadd.f32 %v3041, %v3071
      %v3081 = vadd.f32 %v3042, %v3071
      %v3082 = vadd.f32 %v3043, %v3071
      %v3083 = vadd.f32 %v3044, %v3071
      %v3084 = vadd.f32 %v3045, %v3071
      %v3085 = vadd.f32 %v3046, %v3071
      %v3086 = vadd.f32 %v3047, %v3071
      %v3087 = vadd.f32 %v3048, %v3071
      %v3088 = vadd.f32 %v3049, %v3071
      %v3089 = vadd.f32 %v3050, %v3071
      %v3090 = vadd.f32 %v3051, %v3071
      %v3091 = vadd.f32 %v3052, %v3071
      %v3092 = vadd.f32 %v3053, %v3071
      %v3093 = vadd.f32 %v3054, %v3071
      %v3094 = vadd.f32 %v3055, %v3071
      %v3095 = vadd.f32 %v3056, %v3071
      %v3096 = vadd.f32 %v3057, %v3071
      %v3097 = vadd.f32 %v3058, %v3071
      %v3098 = vadd.f32 %v3059, %v3071
      %v3099 = vadd.f32 %v3060, %v3071
      %v3100 = vadd.f32 %v3061, %v3071
      %v3101 = vadd.f32 %v3062, %v3071
      %v3102 = vadd.f32 %v3063, %v3071
      %v3103 = vadd.f32 %v3064, %v3071
      %v3104 = vadd.f32 %v3065, %v3071
      %vm3105 = vcmp.ge.f32.partialorder %v3073, 0.0
      %vm3106 = vcmp.ge.f32.partialorder %v3074, 0.0
      %vm3107 = vcmp.ge.f32.partialorder %v3075, 0.0
      %vm3108 = vcmp.ge.f32.partialorder %v3076, 0.0
      %vm3109 = vcmp.ge.f32.partialorder %v3077, 0.0
      %vm3110 = vcmp.ge.f32.partialorder %v3078, 0.0
      %vm3111 = vcmp.ge.f32.partialorder %v3079, 0.0
      %vm3112 = vcmp.ge.f32.partialorder %v3080, 0.0
      %vm3113 = vcmp.ge.f32.partialorder %v3081, 0.0
      %vm3114 = vcmp.ge.f32.partialorder %v3082, 0.0
      %vm3115 = vcmp.ge.f32.partialorder %v3083, 0.0
      %vm3116 = vcmp.ge.f32.partialorder %v3084, 0.0
      %vm3117 = vcmp.ge.f32.partialorder %v3085, 0.0
      %vm3118 = vcmp.ge.f32.partialorder %v3086, 0.0
      %vm3119 = vcmp.ge.f32.partialorder %v3087, 0.0
      %vm3120 = vcmp.ge.f32.partialorder %v3088, 0.0
      %vm3121 = vcmp.ge.f32.partialorder %v3089, 0.0
      %vm3122 = vcmp.ge.f32.partialorder %v3090, 0.0
      %vm3123 = vcmp.ge.f32.partialorder %v3091, 0.0
      %vm3124 = vcmp.ge.f32.partialorder %v3092, 0.0
      %vm3125 = vcmp.ge.f32.partialorder %v3093, 0.0
      %vm3126 = vcmp.ge.f32.partialorder %v3094, 0.0
      %vm3127 = vcmp.ge.f32.partialorder %v3095, 0.0
      %vm3128 = vcmp.ge.f32.partialorder %v3096, 0.0
      %vm3129 = vcmp.ge.f32.partialorder %v3097, 0.0
      %vm3130 = vcmp.ge.f32.partialorder %v3098, 0.0
      %vm3131 = vcmp.ge.f32.partialorder %v3099, 0.0
      %vm3132 = vcmp.ge.f32.partialorder %v3100, 0.0
      %vm3133 = vcmp.ge.f32.partialorder %v3101, 0.0
      %vm3134 = vcmp.ge.f32.partialorder %v3102, 0.0
      %vm3135 = vcmp.ge.f32.partialorder %v3103, 0.0
      %vm3136 = vcmp.ge.f32.partialorder %v3104, 0.0
      %v3137 = vmul.f32 %v3073, 0.01
      %v3138 = vmul.f32 %v3074, 0.01
      %v3139 = vmul.f32 %v3075, 0.01
      %v3140 = vmul.f32 %v3076, 0.01
      %v3141 = vmul.f32 %v3077, 0.01
      %v3142 = vmul.f32 %v3078, 0.01
      %v3143 = vmul.f32 %v3079, 0.01
      %v3144 = vmul.f32 %v3080, 0.01
      %v3145 = vmul.f32 %v3081, 0.01
      %v3146 = vmul.f32 %v3082, 0.01
      %v3147 = vmul.f32 %v3083, 0.01
      %v3148 = vmul.f32 %v3084, 0.01
      %v3149 = vmul.f32 %v3085, 0.01
      %v3150 = vmul.f32 %v3086, 0.01
      %v3151 = vmul.f32 %v3087, 0.01
      %v3152 = vmul.f32 %v3088, 0.01
      %v3153 = vmul.f32 %v3089, 0.01
      %v3154 = vmul.f32 %v3090, 0.01
      %v3155 = vmul.f32 %v3091, 0.01
      %v3156 = vmul.f32 %v3092, 0.01
      %v3157 = vmul.f32 %v3093, 0.01
      %v3158 = vmul.f32 %v3094, 0.01
      %v3159 = vmul.f32 %v3095, 0.01
      %v3160 = vmul.f32 %v3096, 0.01
      %v3161 = vmul.f32 %v3097, 0.01
      %v3162 = vmul.f32 %v3098, 0.01
      %v3163 = vmul.f32 %v3099, 0.01
      %v3164 = vmul.f32 %v3100, 0.01
      %v3165 = vmul.f32 %v3101, 0.01
      %v3166 = vmul.f32 %v3102, 0.01
      %v3167 = vmul.f32 %v3103, 0.01
      %v3168 = vmul.f32 %v3104, 0.01
      %v3169 = vsel %vm3105, %v3073, %v3137
      %v3170 = vsel %vm3106, %v3074, %v3138
      %v3171 = vsel %vm3107, %v3075, %v3139
      %v3172 = vsel %vm3108, %v3076, %v3140
      %v3173 = vsel %vm3109, %v3077, %v3141
      %v3174 = vsel %vm3110, %v3078, %v3142
      %v3175 = vsel %vm3111, %v3079, %v3143
      %v3176 = vsel %vm3112, %v3080, %v3144
      %v3177 = vsel %vm3113, %v3081, %v3145
      %v3178 = vsel %vm3114, %v3082, %v3146
      %v3179 = vsel %vm3115, %v3083, %v3147
      %v3180 = vsel %vm3116, %v3084, %v3148
      %v3181 = vsel %vm3117, %v3085, %v3149
      %v3182 = vsel %vm3118, %v3086, %v3150
      %v3183 = vsel %vm3119, %v3087, %v3151
      %v3184 = vsel %vm3120, %v3088, %v3152
      %v3185 = vsel %vm3121, %v3089, %v3153
      %v3186 = vsel %vm3122, %v3090, %v3154
      %v3187 = vsel %vm3123, %v3091, %v3155
      %v3188 = vsel %vm3124, %v3092, %v3156
      %v3189 = vsel %vm3125, %v3093, %v3157
      %v3190 = vsel %vm3126, %v3094, %v3158
      %v3191 = vsel %vm3127, %v3095, %v3159
      %v3192 = vsel %vm3128, %v3096, %v3160
      %v3193 = vsel %vm3129, %v3097, %v3161
      %v3194 = vsel %vm3130, %v3098, %v3162
      %v3195 = vsel %vm3131, %v3099, %v3163
      %v3196 = vsel %vm3132, %v3100, %v3164
      %v3197 = vsel %vm3133, %v3101, %v3165
      %v3198 = vsel %vm3134, %v3102, %v3166
      %v3199 = vsel %vm3135, %v3103, %v3167
      %v3200 = vsel %vm3136, %v3104, %v3168
      %v3201 = vpack.c.bf16 %v3170, %v3169
      %v3202 = vpack.c.bf16 %v3172, %v3171
      %v3203 = vpack.c.bf16 %v3174, %v3173
      %v3204 = vpack.c.bf16 %v3176, %v3175
      %v3205 = vpack.c.bf16 %v3178, %v3177
      %v3206 = vpack.c.bf16 %v3180, %v3179
      %v3207 = vpack.c.bf16 %v3182, %v3181
      %v3208 = vpack.c.bf16 %v3184, %v3183
      %v3209 = vpack.c.bf16 %v3186, %v3185
      %v3210 = vpack.c.bf16 %v3188, %v3187
      %v3211 = vpack.c.bf16 %v3190, %v3189
      %v3212 = vpack.c.bf16 %v3192, %v3191
      %v3213 = vpack.c.bf16 %v3194, %v3193
      %v3214 = vpack.c.bf16 %v3196, %v3195
      %v3215 = vpack.c.bf16 %v3198, %v3197
      %v3216 = vpack.c.bf16 %v3200, %v3199
      %v3233 = vunpack.c.l.b16 %v3201
      %v3234 = vunpack.c.h.b16 %v3201
      %v3235 = vunpack.c.l.b16 %v3202
      %v3236 = vunpack.c.h.b16 %v3202
      %v3237 = vunpack.c.l.b16 %v3203
      %v3238 = vunpack.c.h.b16 %v3203
      %v3239 = vunpack.c.l.b16 %v3204
      %v3240 = vunpack.c.h.b16 %v3204
      %v3241 = vunpack.c.l.b16 %v3205
      %v3242 = vunpack.c.h.b16 %v3205
      %v3243 = vunpack.c.l.b16 %v3206
      %v3244 = vunpack.c.h.b16 %v3206
      %v3245 = vunpack.c.l.b16 %v3207
      %v3246 = vunpack.c.h.b16 %v3207
      %v3247 = vunpack.c.l.b16 %v3208
      %v3248 = vunpack.c.h.b16 %v3208
      %v3249 = vunpack.c.l.b16 %v3209
      %v3250 = vunpack.c.h.b16 %v3209
      %v3251 = vunpack.c.l.b16 %v3210
      %v3252 = vunpack.c.h.b16 %v3210
      %v3253 = vunpack.c.l.b16 %v3211
      %v3254 = vunpack.c.h.b16 %v3211
      %v3255 = vunpack.c.l.b16 %v3212
      %v3256 = vunpack.c.h.b16 %v3212
      %v3257 = vunpack.c.l.b16 %v3213
      %v3258 = vunpack.c.h.b16 %v3213
      %v3259 = vunpack.c.l.b16 %v3214
      %v3260 = vunpack.c.h.b16 %v3214
      %v3261 = vunpack.c.l.b16 %v3215
      %v3262 = vunpack.c.h.b16 %v3215
      %v3263 = vunpack.c.l.b16 %v3216
      %v3264 = vunpack.c.h.b16 %v3216
      %v3265 = vpack.c.b16 %v3233, %v3233
      %v3266 = vpack.c.b16 %v3234, %v3234
      %v3267 = vpack.c.b16 %v3235, %v3235
      %v3268 = vpack.c.b16 %v3236, %v3236
      %v3269 = vpack.c.b16 %v3237, %v3237
      %v3270 = vpack.c.b16 %v3238, %v3238
      %v3271 = vpack.c.b16 %v3239, %v3239
      %v3272 = vpack.c.b16 %v3240, %v3240
      %v3273 = vpack.c.b16 %v3241, %v3241
      %v3274 = vpack.c.b16 %v3242, %v3242
      %v3275 = vpack.c.b16 %v3243, %v3243
      %v3276 = vpack.c.b16 %v3244, %v3244
      %v3277 = vpack.c.b16 %v3245, %v3245
      %v3278 = vpack.c.b16 %v3246, %v3246
      %v3279 = vpack.c.b16 %v3247, %v3247
      %v3280 = vpack.c.b16 %v3248, %v3248
      %v3281 = vpack.c.b16 %v3249, %v3249
      %v3282 = vpack.c.b16 %v3250, %v3250
      %v3283 = vpack.c.b16 %v3251, %v3251
      %v3284 = vpack.c.b16 %v3252, %v3252
      %v3285 = vpack.c.b16 %v3253, %v3253
      %v3286 = vpack.c.b16 %v3254, %v3254
      %v3287 = vpack.c.b16 %v3255, %v3255
      %v3288 = vpack.c.b16 %v3256, %v3256
      %v3289 = vpack.c.b16 %v3257, %v3257
      %v3290 = vpack.c.b16 %v3258, %v3258
      %v3291 = vpack.c.b16 %v3259, %v3259
      %v3292 = vpack.c.b16 %v3260, %v3260
      %v3293 = vpack.c.b16 %v3261, %v3261
      %v3294 = vpack.c.b16 %v3262, %v3262
      %v3295 = vpack.c.b16 %v3263, %v3263
      %v3296 = vpack.c.b16 %v3264, %v3264
      %3329 = vst [vmem:[%s330] sm:$0xf] %v3265
      %3330 = vst [vmem:[%s330 + $0x4] sm:$0xf] %v3266
      %3331 = vst [vmem:[%s330 + $0x8] sm:$0xf] %v3267
      %3332 = vst [vmem:[%s330 + $0xc] sm:$0xf] %v3268
      %3333 = vst [vmem:[%s330 + $0x10] sm:$0xf] %v3269
      %3334 = vst [vmem:[%s330 + $0x14] sm:$0xf] %v3270
      %3335 = vst [vmem:[%s330 + $0x18] sm:$0xf] %v3271
      %3336 = vst [vmem:[%s330 + $0x1c] sm:$0xf] %v3272
      %3337 = vst [vmem:[%s330 + $0x20] sm:$0xf] %v3273
      %3338 = vst [vmem:[%s330 + $0x24] sm:$0xf] %v3274
      %3339 = vst [vmem:[%s330 + $0x28] sm:$0xf] %v3275
      %3340 = vst [vmem:[%s330 + $0x2c] sm:$0xf] %v3276
      %3341 = vst [vmem:[%s330 + $0x30] sm:$0xf] %v3277
      %3342 = vst [vmem:[%s330 + $0x34] sm:$0xf] %v3278
      %3343 = vst [vmem:[%s330 + $0x38] sm:$0xf] %v3279
      %3344 = vst [vmem:[%s330 + $0x3c] sm:$0xf] %v3280
      %3345 = vst [vmem:[%s330 + $0x40] sm:$0xf] %v3281
      %3346 = vst [vmem:[%s330 + $0x44] sm:$0xf] %v3282
      %3347 = vst [vmem:[%s330 + $0x48] sm:$0xf] %v3283
      %3348 = vst [vmem:[%s330 + $0x4c] sm:$0xf] %v3284
      %3349 = vst [vmem:[%s330 + $0x50] sm:$0xf] %v3285
      %3350 = vst [vmem:[%s330 + $0x54] sm:$0xf] %v3286
      %3351 = vst [vmem:[%s330 + $0x58] sm:$0xf] %v3287
      %3352 = vst [vmem:[%s330 + $0x5c] sm:$0xf] %v3288
      %3353 = vst [vmem:[%s330 + $0x60] sm:$0xf] %v3289
      %3354 = vst [vmem:[%s330 + $0x64] sm:$0xf] %v3290
      %3355 = vst [vmem:[%s330 + $0x68] sm:$0xf] %v3291
      %3356 = vst [vmem:[%s330 + $0x6c] sm:$0xf] %v3292
      %3357 = vst [vmem:[%s330 + $0x70] sm:$0xf] %v3293
      %3358 = vst [vmem:[%s330 + $0x74] sm:$0xf] %v3294
      %3359 = vst [vmem:[%s330 + $0x78] sm:$0xf] %v3295
      %3360 = vst [vmem:[%s330 + $0x7c] sm:$0xf] %v3296
      %v3361 = vadd.f32 %v3169, %v3170
      %v3362 = vadd.f32 %v3361, %v3171
      %v3363 = vadd.f32 %v3362, %v3172
      %v3364 = vadd.f32 %v3363, %v3173
      %v3365 = vadd.f32 %v3364, %v3174
      %v3366 = vadd.f32 %v3365, %v3175
      %v3367 = vadd.f32 %v3366, %v3176
      %v3368 = vadd.f32 %v3367, %v3177
      %v3369 = vadd.f32 %v3368, %v3178
      %v3370 = vadd.f32 %v3369, %v3179
      %v3371 = vadd.f32 %v3370, %v3180
      %v3372 = vadd.f32 %v3371, %v3181
      %v3373 = vadd.f32 %v3372, %v3182
      %v3374 = vadd.f32 %v3373, %v3183
      %v3375 = vadd.f32 %v3374, %v3184
      %v3376 = vadd.f32 %v3375, %v3185
      %v3377 = vadd.f32 %v3376, %v3186
      %v3378 = vadd.f32 %v3377, %v3187
      %v3379 = vadd.f32 %v3378, %v3188
      %v3380 = vadd.f32 %v3379, %v3189
      %v3381 = vadd.f32 %v3380, %v3190
      %v3382 = vadd.f32 %v3381, %v3191
      %v3383 = vadd.f32 %v3382, %v3192
      %v3384 = vadd.f32 %v3383, %v3193
      %v3385 = vadd.f32 %v3384, %v3194
      %v3386 = vadd.f32 %v3385, %v3195
      %v3387 = vadd.f32 %v3386, %v3196
      %v3388 = vadd.f32 %v3387, %v3197
      %v3389 = vadd.f32 %v3388, %v3198
      %v3390 = vadd.f32 %v3389, %v3199
      %v3391 = vadd.f32 %v3390, %v3200
      %3392 = vst [vmem:[%s339] sm:$0xff] %v3391
      %v3393 = vmul.f32 %v3169, %v3169
      %v3394 = vmul.f32 %v3170, %v3170
      %v3395 = vmul.f32 %v3171, %v3171
      %v3396 = vmul.f32 %v3172, %v3172
      %v3397 = vmul.f32 %v3173, %v3173
      %v3398 = vmul.f32 %v3174, %v3174
      %v3399 = vmul.f32 %v3175, %v3175
      %v3400 = vmul.f32 %v3176, %v3176
      %v3401 = vmul.f32 %v3177, %v3177
      %v3402 = vmul.f32 %v3178, %v3178
      %v3403 = vmul.f32 %v3179, %v3179
      %v3404 = vmul.f32 %v3180, %v3180
      %v3405 = vmul.f32 %v3181, %v3181
      %v3406 = vmul.f32 %v3182, %v3182
      %v3407 = vmul.f32 %v3183, %v3183
      %v3408 = vmul.f32 %v3184, %v3184
      %v3409 = vmul.f32 %v3185, %v3185
      %v3410 = vmul.f32 %v3186, %v3186
      %v3411 = vmul.f32 %v3187, %v3187
      %v3412 = vmul.f32 %v3188, %v3188
      %v3413 = vmul.f32 %v3189, %v3189
      %v3414 = vmul.f32 %v3190, %v3190
      %v3415 = vmul.f32 %v3191, %v3191
      %v3416 = vmul.f32 %v3192, %v3192
      %v3417 = vmul.f32 %v3193, %v3193
      %v3418 = vmul.f32 %v3194, %v3194
      %v3419 = vmul.f32 %v3195, %v3195
      %v3420 = vmul.f32 %v3196, %v3196
      %v3421 = vmul.f32 %v3197, %v3197
      %v3422 = vmul.f32 %v3198, %v3198
      %v3423 = vmul.f32 %v3199, %v3199
      %v3424 = vmul.f32 %v3200, %v3200
      %v3425 = vadd.f32 %v3393, %v3394
      %v3426 = vadd.f32 %v3425, %v3395
      %v3427 = vadd.f32 %v3426, %v3396
      %v3428 = vadd.f32 %v3427, %v3397
      %v3429 = vadd.f32 %v3428, %v3398
      %v3430 = vadd.f32 %v3429, %v3399
      %v3431 = vadd.f32 %v3430, %v3400
      %v3432 = vadd.f32 %v3431, %v3401
      %v3433 = vadd.f32 %v3432, %v3402
      %v3434 = vadd.f32 %v3433, %v3403
      %v3435 = vadd.f32 %v3434, %v3404
      %v3436 = vadd.f32 %v3435, %v3405
      %v3437 = vadd.f32 %v3436, %v3406
      %v3438 = vadd.f32 %v3437, %v3407
      %v3439 = vadd.f32 %v3438, %v3408
      %v3440 = vadd.f32 %v3439, %v3409
      %v3441 = vadd.f32 %v3440, %v3410
      %v3442 = vadd.f32 %v3441, %v3411
      %v3443 = vadd.f32 %v3442, %v3412
      %v3444 = vadd.f32 %v3443, %v3413
      %v3445 = vadd.f32 %v3444, %v3414
      %v3446 = vadd.f32 %v3445, %v3415
      %v3447 = vadd.f32 %v3446, %v3416
      %v3448 = vadd.f32 %v3447, %v3417
      %v3449 = vadd.f32 %v3448, %v3418
      %v3450 = vadd.f32 %v3449, %v3419
      %v3451 = vadd.f32 %v3450, %v3420
      %v3452 = vadd.f32 %v3451, %v3421
      %v3453 = vadd.f32 %v3452, %v3422
      %v3454 = vadd.f32 %v3453, %v3423
      %v3455 = vadd.f32 %v3454, %v3424
      %3456 = vst [vmem:[%s348] sm:$0xff] %v3455
      %s3457 = smul.u32 16, %s24
      %p3458 = scmp.lt.s32.totalorder %s22, 1
      %s3459 = scalar_select %p3458, %s22, 1
      %p3460 = scmp.lt.s32.totalorder %s3457, 15
      %s3461 = scalar_select %p3460, %s3457, 15
      %p3462 = scmp.lt.s32.totalorder %s23, 0
      %s3463 = scalar_select %p3462, %s23, 0
      %s3464 = smul.addr %s3461, 2
      %s3465 = sadd.s32 %s3463, %s3464
      %s3466 = smul.addr %s3459, 32
      %s3467 = sadd.s32 %s3465, %s3466
      %s3468 = smul.addr %s3467, 4
      %s3469 = scalar_lea.vmem %s3, %s3468
      %s3470 = sadd.s32 %s22, %s24
      %p3471 = scmp.lt.s32.totalorder %s3470, 1
      %s3472 = scalar_select %p3471, %s3470, 1
      %p3473 = scmp.lt.s32.totalorder %s23, 0
      %s3474 = scalar_select %p3473, %s23, 0
      %s3475 = sadd.s32 %s3474, %s3472
      %s3476 = smul.addr %s3475, 8
      %s3477 = scalar_lea.vmem %s4, %s3476
      %s3478 = sadd.s32 %s22, %s24
      %p3479 = scmp.lt.s32.totalorder %s3478, 1
      %s3480 = scalar_select %p3479, %s3478, 1
      %p3481 = scmp.lt.s32.totalorder %s23, 0
      %s3482 = scalar_select %p3481, %s23, 0
      %s3483 = sadd.s32 %s3482, %s3480
      %s3484 = smul.addr %s3483, 8
      %s3485 = scalar_lea.vmem %s5, %s3484
      // Predicated region
      $region33: #{ustrided_conv_relu_bn.1} parent=31 // pred_check
        %p3486 = pneg %p138
      $region34: #{ustrided_conv_relu_bn.1} parent=31 // pred_check_branch
        %3488 = sbr.rel (%p3486) target = $region36
      $region35: #{ustrided_conv_relu_bn.1} parent=31 // pred_region
        %s3489 = smul.u32 16, %s24
      $region36: #{ustrided_conv_relu_bn.1} parent=31 // pred_fallthru
        _
      // Predicated region
      $region37: #{ustrided_conv_relu_bn.1} parent=31 // pred_check
        %p3490 = pneg %p168
      $region38: #{ustrided_conv_relu_bn.1} parent=31 // pred_check_branch
        %3492 = sbr.rel (%p3490) target = $region40
      $region39: #{ustrided_conv_relu_bn.1} parent=31 // pred_region
        %s3493 = sadd.s32 %s22, %s24
      $region40: #{ustrided_conv_relu_bn.1} parent=31 // pred_fallthru
        _
      // Predicated region
      $region41: #{ustrided_conv_relu_bn.1} parent=31 // pred_check
        %p3494 = pneg %p198
      $region42: #{ustrided_conv_relu_bn.1} parent=31 // pred_check_branch
        %3496 = sbr.rel (%p3494) target = $region44
      $region43: #{ustrided_conv_relu_bn.1} parent=31 // pred_region
        %s3497 = sadd.s32 %s22, %s24
      $region44: #{ustrided_conv_relu_bn.1} parent=31 // pred_fallthru
        _
    $region32: #{ustrided_conv_relu_bn.1} parent=5 // pred_fallthru
      _
    %p3498 = scmp.le.s32.totalorder 2, %s12
    // Predicated region
    $region45: #{ustrided_conv_relu_bn.1} parent=5 // pred_check
      %p3499 = pneg %p3498
    $region46: #{ustrided_conv_relu_bn.1} parent=5 // pred_check_branch
      %3501 = sbr.rel (%p3499) target = $region48
    $region47: #{ustrided_conv_relu_bn.1} parent=5 // pred_region
      %s3502 = ssub.s32 %s12, 2
      // Predicated region
      $region49: #{ustrided_conv_relu_bn.1} parent=47 // pred_check
        %p3503 = pneg %p144
      $region50: #{ustrided_conv_relu_bn.1} parent=47 // pred_check_branch
        %3505 = sbr.rel (%p3503) target = $region52
      $region51: #{ustrided_conv_relu_bn.1} parent=47 // pred_region
        %s3506 = smul.u32 16, %s27
        %p3507 = scmp.lt.s32.totalorder %s25, 1
        %s3508 = scalar_select %p3507, %s25, 1
        %p3509 = scmp.lt.s32.totalorder %s3506, 15
        %s3510 = scalar_select %p3509, %s3506, 15
        %p3511 = scmp.lt.s32.totalorder %s26, 0
        %s3512 = scalar_select %p3511, %s26, 0
        %s3513 = smul.addr %s3510, 2
        %s3514 = sadd.s32 %s3512, %s3513
        %s3515 = smul.addr %s3508, 32
        %s3516 = sadd.s32 %s3514, %s3515
        %s3517 = smul.addr %s3516, 4
        %s3518 = scalar_lea.vmem %s3, %s3517
      $region52: #{ustrided_conv_relu_bn.1} parent=47 // pred_fallthru
        _
      // Predicated region
      $region53: #{ustrided_conv_relu_bn.1} parent=47 // pred_check
        %p3519 = pneg %p174
      $region54: #{ustrided_conv_relu_bn.1} parent=47 // pred_check_branch
        %3521 = sbr.rel (%p3519) target = $region56
      $region55: #{ustrided_conv_relu_bn.1} parent=47 // pred_region
        %s3522 = sadd.s32 %s25, %s27
        %p3523 = scmp.lt.s32.totalorder %s3522, 1
        %s3524 = scalar_select %p3523, %s3522, 1
        %p3525 = scmp.lt.s32.totalorder %s26, 0
        %s3526 = scalar_select %p3525, %s26, 0
        %s3527 = sadd.s32 %s3526, %s3524
        %s3528 = smul.addr %s3527, 8
        %s3529 = scalar_lea.vmem %s4, %s3528
      $region56: #{ustrided_conv_relu_bn.1} parent=47 // pred_fallthru
        _
      // Predicated region
      $region57: #{ustrided_conv_relu_bn.1} parent=47 // pred_check
        %p3530 = pneg %p204
      $region58: #{ustrided_conv_relu_bn.1} parent=47 // pred_check_branch
        %3532 = sbr.rel (%p3530) target = $region60
      $region59: #{ustrided_conv_relu_bn.1} parent=47 // pred_region
        %s3533 = sadd.s32 %s25, %s27
        %p3534 = scmp.lt.s32.totalorder %s3533, 1
        %s3535 = scalar_select %p3534, %s3533, 1
        %p3536 = scmp.lt.s32.totalorder %s26, 0
        %s3537 = scalar_select %p3536, %s26, 0
        %s3538 = sadd.s32 %s3537, %s3535
        %s3539 = smul.addr %s3538, 8
        %s3540 = scalar_lea.vmem %s5, %s3539
      $region60: #{ustrided_conv_relu_bn.1} parent=47 // pred_fallthru
        _
    $region48: #{ustrided_conv_relu_bn.1} parent=5 // pred_fallthru
      _
  $region6: #{ustrided_conv_relu_bn.1} parent=0 // loop_footer
    %s16 = sadd.s32 1, %s12
  $region7: #{ustrided_conv_relu_bn.1} parent=0 // loop_footer_branch
    %11 = sbr.rel target = $region3
  $region8: #{ustrided_conv_relu_bn.1} parent=0 // loop_exit
    _

</llo_original>
